<compile_context>
chip_gen: v7x
topology: tpu7x:2x2x1
jax: 0.10.0
libtpu: 0.0.40
codegen_flags: <defaults>
</compile_context>

<pallas_src>
import functools

import jax
import jax.numpy as jnp
from jax.experimental import pallas as pl
from jax.experimental.pallas import tpu as pltpu

EPS = 1e-5
_VMEM = pl.BlockSpec(memory_space=pltpu.MemorySpace.VMEM)


# ----------------------------------------------------------------------------
# Fused kernel
# ----------------------------------------------------------------------------
def _bn_relu(y, gamma, beta):
    # Train-mode BatchNorm2d over the (N*H*W) row axis, biased variance,
    # folded into a single scale/shift, then ReLU.  All f32.
    mean = jnp.mean(y, axis=0, keepdims=True)
    var = jnp.maximum(jnp.mean(y * y, axis=0, keepdims=True) - mean * mean, 0.0)
    scale = gamma * jax.lax.rsqrt(var + EPS)
    shift = beta - mean * scale
    return jnp.maximum(y * scale + shift, 0.0)


def _fused_forward_kernel(nb, patches_ref, w1_ref, g1_ref, b1_ref,
                          w2_ref, g2_ref, b2_ref, wfc_ref, fcb_ref,
                          out_ref, y2_scratch):
    c1 = w1_ref.shape[1]          # 8  conv1 out channels
    c2 = w2_ref.shape[2]          # 16 conv2 out channels
    opad = out_ref.shape[1]       # 128 (padded fc output)
    m = nb * 64                   # rows per pool1-parity block / pooled rows

    # ---- block 1: conv1 (im2col matmul, bf16 -> f32 acc) + BN + ReLU -------
    y1 = jnp.dot(patches_ref[...], w1_ref[...],
                 preferred_element_type=jnp.float32)          # (4*m, c1)
    y1 = _bn_relu(y1, g1_ref[...], b1_ref[...])

    # ---- pool1: rows are parity-grouped (a, b, n, ph, pw) -> 4-way max -----
    p1 = jnp.maximum(jnp.maximum(y1[0:m], y1[m:2 * m]),
                     jnp.maximum(y1[2 * m:3 * m], y1[3 * m:4 * m]))   # (m, c1)
    # p1 rows are (n, oh, ow) raster over the pooled 8x8 grid.

    # ---- block 2: conv2 as 9 shifted (roll + mask) matmuls -----------------
    riota = jax.lax.broadcasted_iota(jnp.int32, (m, c1), 0)
    ow = riota & 7
    oh = (riota >> 3) & 7
    acc2 = jnp.zeros((m, c2), jnp.float32)
    for di in (-1, 0, 1):
        for dj in (-1, 0, 1):
            k = (di + 1) * 3 + (dj + 1)
            off = di * 8 + dj          # row offset of the needed input tap
            if off == 0:
                slab = p1
            else:
                # shifted[r] = p1[r + off]; wrap / cross-image rows are masked.
                shifted = pltpu.roll(p1, shift=(-off) % m, axis=0)
                valid = ((oh + di >= 0) & (oh + di <= 7) &
                         (ow + dj >= 0) & (ow + dj <= 7))
                slab = jnp.where(valid, shifted, 0.0)
            acc2 = acc2 + jnp.dot(slab.astype(jnp.bfloat16), w2_ref[k],
                                  preferred_element_type=jnp.float32)
    y2 = _bn_relu(acc2, g2_ref[...], b2_ref[...])               # (m, c2)
    y2_scratch[...] = y2.reshape(nb, 8, 8, c2)

    # ---- pool2 fused with FC (NCHW flatten baked into wfc) + log_softmax ---
    acc3 = jnp.zeros((nb, opad), jnp.float32)
    for ph in range(4):
        for pw in range(4):
            t = jnp.maximum(
                jnp.maximum(y2_scratch[:, 2 * ph, 2 * pw, :],
                            y2_scratch[:, 2 * ph, 2 * pw + 1, :]),
                jnp.maximum(y2_scratch[:, 2 * ph + 1, 2 * pw, :],
                            y2_scratch[:, 2 * ph + 1, 2 * pw + 1, :]))  # (nb,c2)
            acc3 = acc3 + jnp.dot(t.astype(jnp.bfloat16), wfc_ref[ph * 4 + pw],
                                  preferred_element_type=jnp.float32)
    z = acc3 + fcb_ref[...]           # padded bias = -1e30 -> masked softmax
    zmax = jnp.max(z, axis=-1, keepdims=True)
    z = z - zmax
    lse = jnp.log(jnp.sum(jnp.exp(z), axis=-1, keepdims=True))
    out_ref[...] = z - lse            # (nb, 128) lane-dense store


# ----------------------------------------------------------------------------
# Wrapper: one-time parameter re-layout + tiny input glue + pallas_call
# ----------------------------------------------------------------------------
def _im2col_parity(x_nchw):
    """3x3/stride1/pad1 patches of the NHWC input.

    Rows are grouped by output parity (a, b, n, ph, pw) so the in-kernel 2x2
    max-pool is a plain 4-way max of contiguous row blocks.  Columns are
    (cin, kh, kw), matching the PyTorch Conv2d weight layout.
    """
    nb, cin, h, w = x_nchw.shape
    xh = jnp.transpose(x_nchw, (0, 2, 3, 1))                    # NHWC (tiny)
    xp = jnp.pad(xh, ((0, 0), (1, 1), (1, 1), (0, 0)))
    taps = [xp[:, i:i + h, j:j + w, :] for i in range(3) for j in range(3)]
    pat = jnp.stack(taps, axis=3)                               # (n,h,w,9,cin)
    pat = jnp.transpose(pat, (0, 1, 2, 4, 3)).reshape(nb, h, w, cin * 9)
    pat = pat.reshape(nb, h // 2, 2, w // 2, 2, cin * 9)        # oh=2ph+a ...
    pat = jnp.transpose(pat, (2, 4, 0, 1, 3, 5))                # (a,b,n,ph,pw,.)
    return pat.reshape(4 * nb * (h // 2) * (w // 2), cin * 9)


def prepare_params(params, opad=128):
    """One-time conversion of PyTorch-layout params to kernel layout."""
    c1 = params["conv1_w"].shape[0]
    c2 = params["conv2_w"].shape[0]
    out_dim = params["fc3_w"].shape[0]
    # conv1_b / conv2_b are intentionally dropped: a per-channel bias before a
    # train-mode BatchNorm is exactly cancelled by the batch-mean subtraction.
    w1 = params["conv1_w"].reshape(c1, -1).T.astype(jnp.bfloat16)       # (36,8)
    w2 = (jnp.transpose(params["conv2_w"], (2, 3, 1, 0))
          .reshape(9, c1, c2).astype(jnp.bfloat16))                     # (9,8,16)
    # fc3 consumes the NCHW flatten of the (N, c2, 4, 4) pooled activation:
    # f = c*16 + ph*4 + pw.  Permute once so the kernel can stay NHWC.
    wfc = params["fc3_w"].reshape(out_dim, c2, 4, 4)
    wfc = jnp.transpose(wfc, (2, 3, 1, 0)).reshape(16, c2, out_dim)
    wfc = jnp.pad(wfc, ((0, 0), (0, 0), (0, opad - out_dim))).astype(jnp.bfloat16)
    fcb = jnp.pad(params["fc3_b"], (0, opad - out_dim),
                  constant_values=-1e30).reshape(1, opad).astype(jnp.float32)
    return {
        "w1": w1,
        "g1": params["bn1_g"].reshape(1, c1).astype(jnp.float32),
        "b1": params["bn1_b"].reshape(1, c1).astype(jnp.float32),
        "w2": w2,
        "g2": params["bn2_g"].reshape(1, c2).astype(jnp.float32),
        "b2": params["bn2_b"].reshape(1, c2).astype(jnp.float32),
        "wfc": wfc,
        "fcb": fcb,
    }


@functools.partial(jax.jit, static_argnames=("out_dim",))
def conv_layer_multi_forward(x, kp, out_dim=10):
    """Pallas re-implementation of ConvLayerMulti.forward. x is NCHW f32."""
    nb = x.shape[0]
    c2 = kp["w2"].shape[2]
    opad = kp["fcb"].shape[1]
    patches = _im2col_parity(x).astype(jnp.bfloat16)

    kernel = functools.partial(_fused_forward_kernel, nb)
    out_full = pl.pallas_call(
        kernel,
        out_shape=jax.ShapeDtypeStruct((nb, opad), jnp.float32),
        in_specs=[_VMEM] * 9,
        out_specs=_VMEM,
        scratch_shapes=[pltpu.VMEM((nb, 8, 8, c2), jnp.float32)],
    )(patches, kp["w1"], kp["g1"], kp["b1"],
      kp["w2"], kp["g2"], kp["b2"], kp["wfc"], kp["fcb"])
    return out_full[:, :out_dim]


# ----------------------------------------------------------------------------
# Parameter init (PyTorch layouts; conv biases kept for interface fidelity)
# ----------------------------------------------------------------------------
def init_params(key, cin=4, c1=8, c2=16, fc_in=256, out_dim=10):
    ks = jax.random.split(key, 6)
    scale = 0.1
    return {
        "conv1_w": scale * jax.random.normal(ks[0], (c1, cin, 3, 3), jnp.float32),
        "conv1_b": scale * jax.random.normal(ks[1], (c1,), jnp.float32),
        "bn1_g": jnp.ones((c1,), jnp.float32),
        "bn1_b": jnp.zeros((c1,), jnp.float32),
        "conv2_w": scale * jax.random.normal(ks[2], (c2, c1, 3, 3), jnp.float32),
        "conv2_b": scale * jax.random.normal(ks[3], (c2,), jnp.float32),
        "bn2_g": jnp.ones((c2,), jnp.float32),
        "bn2_b": jnp.zeros((c2,), jnp.float32),
        "fc3_w": scale * jax.random.normal(ks[4], (out_dim, fc_in), jnp.float32),
        "fc3_b": scale * jax.random.normal(ks[5], (out_dim,), jnp.float32),
    }


if __name__ == "__main__":
    # layers_dim equivalent:
    #   input = (4, 16, 16); conv1 = [3,1,1,8]; pool1 = [2,2];
    #   conv2 = [3,1,1,16]; pool2 = [2,2]; fc3 = 16*4*4 = 256; output = 10
    key = jax.random.PRNGKey(0)
    k_x, k_p = jax.random.split(key)
    x = jax.random.normal(k_x, (2, 4, 16, 16), jnp.float32)
    params = init_params(k_p)
    kp = prepare_params(params)

    out = conv_layer_multi_forward(x, kp)
    out = jax.block_until_ready(out)

    assert out.shape == (2, 10), out.shape
    # log_softmax rows must exponentiate-and-sum to ~1
    row_sums = jnp.exp(out).sum(axis=-1)
    assert bool(jnp.all(jnp.abs(row_sums - 1.0) < 1e-3)), row_sums
    print("KERNEL_OK")
</pallas_src>

<mosaic_0001>
module attributes {stable_mosaic.version = 11 : i64} {
  func.func @_fused_forward_kernel(%arg0: memref<512x36xbf16, #tpu.memory_space<vmem>>, %arg1: memref<36x8xbf16, #tpu.memory_space<vmem>>, %arg2: memref<1x8xf32, #tpu.memory_space<vmem>>, %arg3: memref<1x8xf32, #tpu.memory_space<vmem>>, %arg4: memref<9x8x16xbf16, #tpu.memory_space<vmem>>, %arg5: memref<1x16xf32, #tpu.memory_space<vmem>>, %arg6: memref<1x16xf32, #tpu.memory_space<vmem>>, %arg7: memref<16x16x128xbf16, #tpu.memory_space<vmem>>, %arg8: memref<1x128xf32, #tpu.memory_space<vmem>>, %arg9: memref<2x128xf32, #tpu.memory_space<vmem>>, %arg10: memref<2x8x8x16xf32, #tpu.memory_space<vmem>>) attributes {dimension_semantics = [], scalar_prefetch = 0 : i64, scratch_operands = 1 : i64, tpu.core_type = #tpu.core_type<tc>} {
    %c0 = arith.constant 0 : index
    %c0_0 = arith.constant 0 : index
    %0 = vector.load %arg0[%c0, %c0_0] : memref<512x36xbf16, #tpu.memory_space<vmem>>, vector<512x36xbf16>
    %c0_1 = arith.constant 0 : index
    %c0_2 = arith.constant 0 : index
    %1 = vector.load %arg1[%c0_1, %c0_2] : memref<36x8xbf16, #tpu.memory_space<vmem>>, vector<36x8xbf16>
    %cst = arith.constant dense<0.000000e+00> : vector<512x8xf32>
    %2 = tpu.matmul %0, %1, %cst {dimension_numbers = #tpu.dot_dimension_numbers<[1], [0], [0], [1], [0, 0, 1, 1], [], []>} : vector<512x36xbf16>, vector<36x8xbf16>, vector<512x8xf32> -> vector<512x8xf32>
    %c0_3 = arith.constant 0 : index
    %c0_4 = arith.constant 0 : index
    %3 = vector.load %arg2[%c0_3, %c0_4] : memref<1x8xf32, #tpu.memory_space<vmem>>, vector<1x8xf32>
    %c0_5 = arith.constant 0 : index
    %c0_6 = arith.constant 0 : index
    %4 = vector.load %arg3[%c0_5, %c0_6] : memref<1x8xf32, #tpu.memory_space<vmem>>, vector<1x8xf32>
    %cst_7 = arith.constant dense<0.000000e+00> : vector<8xf32>
    %5 = vector.multi_reduction <add>, %2, %cst_7 [0] : vector<512x8xf32> to vector<8xf32>
    %6 = vector.shape_cast %5 : vector<8xf32> to vector<1x8xf32>
    %cst_8 = arith.constant 5.120000e+02 : f32
    %7 = vector.broadcast %cst_8 : f32 to vector<1x8xf32>
    %8 = arith.divf %6, %7 : vector<1x8xf32>
    %9 = arith.mulf %2, %2 : vector<512x8xf32>
    %cst_9 = arith.constant dense<0.000000e+00> : vector<8xf32>
    %10 = vector.multi_reduction <add>, %9, %cst_9 [0] : vector<512x8xf32> to vector<8xf32>
    %11 = vector.shape_cast %10 : vector<8xf32> to vector<1x8xf32>
    %cst_10 = arith.constant 5.120000e+02 : f32
    %12 = vector.broadcast %cst_10 : f32 to vector<1x8xf32>
    %13 = arith.divf %11, %12 : vector<1x8xf32>
    %14 = arith.mulf %8, %8 : vector<1x8xf32>
    %15 = arith.subf %13, %14 : vector<1x8xf32>
    %cst_11 = arith.constant 0.000000e+00 : f32
    %16 = vector.broadcast %cst_11 : f32 to vector<1x8xf32>
    %17 = arith.maximumf %15, %16 : vector<1x8xf32>
    %cst_12 = arith.constant 9.99999974E-6 : f32
    %18 = vector.broadcast %cst_12 : f32 to vector<1x8xf32>
    %19 = arith.addf %17, %18 : vector<1x8xf32>
    %20 = math.rsqrt %19 : vector<1x8xf32>
    %21 = arith.mulf %3, %20 : vector<1x8xf32>
    %22 = arith.mulf %8, %21 : vector<1x8xf32>
    %23 = arith.subf %4, %22 : vector<1x8xf32>
    %24 = vector.broadcast %21 : vector<1x8xf32> to vector<512x8xf32>
    %25 = arith.mulf %2, %24 : vector<512x8xf32>
    %26 = vector.broadcast %23 : vector<1x8xf32> to vector<512x8xf32>
    %27 = arith.addf %25, %26 : vector<512x8xf32>
    %cst_13 = arith.constant 0.000000e+00 : f32
    %28 = vector.broadcast %cst_13 : f32 to vector<512x8xf32>
    %29 = arith.maximumf %27, %28 : vector<512x8xf32>
    %30 = vector.extract_strided_slice %29 {offsets = [0, 0], sizes = [128, 8], strides = [1, 1]} : vector<512x8xf32> to vector<128x8xf32>
    %31 = vector.extract_strided_slice %29 {offsets = [128, 0], sizes = [128, 8], strides = [1, 1]} : vector<512x8xf32> to vector<128x8xf32>
    %32 = arith.maximumf %30, %31 : vector<128x8xf32>
    %33 = vector.extract_strided_slice %29 {offsets = [256, 0], sizes = [128, 8], strides = [1, 1]} : vector<512x8xf32> to vector<128x8xf32>
    %34 = vector.extract_strided_slice %29 {offsets = [384, 0], sizes = [128, 8], strides = [1, 1]} : vector<512x8xf32> to vector<128x8xf32>
    %35 = arith.maximumf %33, %34 : vector<128x8xf32>
    %36 = arith.maximumf %32, %35 : vector<128x8xf32>
    %37 = tpu.iota {dimensions = array<i32: 0>} : vector<128x8xi32>
    %c7_i32 = arith.constant 7 : i32
    %38 = vector.broadcast %c7_i32 : i32 to vector<128x8xi32>
    %39 = arith.andi %37, %38 : vector<128x8xi32>
    %c3_i32 = arith.constant 3 : i32
    %40 = vector.broadcast %c3_i32 : i32 to vector<128x8xi32>
    %41 = arith.shrsi %37, %40 : vector<128x8xi32>
    %c7_i32_14 = arith.constant 7 : i32
    %42 = vector.broadcast %c7_i32_14 : i32 to vector<128x8xi32>
    %43 = arith.andi %41, %42 : vector<128x8xi32>
    %cst_15 = arith.constant 0.000000e+00 : f32
    %44 = vector.broadcast %cst_15 : f32 to vector<128x16xf32>
    %c9_i32 = arith.constant 9 : i32
    %45 = tpu.dynamic_rotate %36 by %c9_i32 dim 0 : vector<128x8xf32>, i32 -> vector<128x8xf32>
    %c-1_i32 = arith.constant -1 : i32
    %46 = vector.broadcast %c-1_i32 : i32 to vector<128x8xi32>
    %47 = arith.addi %43, %46 : vector<128x8xi32>
    %c0_i32 = arith.constant 0 : i32
    %48 = vector.broadcast %c0_i32 : i32 to vector<128x8xi32>
    %49 = arith.cmpi sge, %47, %48 : vector<128x8xi32>
    %c-1_i32_16 = arith.constant -1 : i32
    %50 = vector.broadcast %c-1_i32_16 : i32 to vector<128x8xi32>
    %51 = arith.addi %43, %50 : vector<128x8xi32>
    %c7_i32_17 = arith.constant 7 : i32
    %52 = vector.broadcast %c7_i32_17 : i32 to vector<128x8xi32>
    %53 = arith.cmpi sle, %51, %52 : vector<128x8xi32>
    %54 = arith.andi %49, %53 : vector<128x8xi1>
    %c-1_i32_18 = arith.constant -1 : i32
    %55 = vector.broadcast %c-1_i32_18 : i32 to vector<128x8xi32>
    %56 = arith.addi %39, %55 : vector<128x8xi32>
    %c0_i32_19 = arith.constant 0 : i32
    %57 = vector.broadcast %c0_i32_19 : i32 to vector<128x8xi32>
    %58 = arith.cmpi sge, %56, %57 : vector<128x8xi32>
    %59 = arith.andi %54, %58 : vector<128x8xi1>
    %c-1_i32_20 = arith.constant -1 : i32
    %60 = vector.broadcast %c-1_i32_20 : i32 to vector<128x8xi32>
    %61 = arith.addi %39, %60 : vector<128x8xi32>
    %c7_i32_21 = arith.constant 7 : i32
    %62 = vector.broadcast %c7_i32_21 : i32 to vector<128x8xi32>
    %63 = arith.cmpi sle, %61, %62 : vector<128x8xi32>
    %64 = arith.andi %59, %63 : vector<128x8xi1>
    %cst_22 = arith.constant 0.000000e+00 : f32
    %65 = vector.broadcast %cst_22 : f32 to vector<128x8xf32>
    %66 = arith.select %64, %45, %65 : vector<128x8xi1>, vector<128x8xf32>
    %67 = arith.truncf %66 : vector<128x8xf32> to vector<128x8xbf16>
    %c0_23 = arith.constant 0 : index
    %c0_24 = arith.constant 0 : index
    %c0_25 = arith.constant 0 : index
    %68 = vector.load %arg4[%c0_23, %c0_24, %c0_25] : memref<9x8x16xbf16, #tpu.memory_space<vmem>>, vector<1x8x16xbf16>
    %69 = vector.shape_cast %68 : vector<1x8x16xbf16> to vector<8x16xbf16>
    %cst_26 = arith.constant dense<0.000000e+00> : vector<128x16xf32>
    %70 = tpu.matmul %67, %69, %cst_26 {dimension_numbers = #tpu.dot_dimension_numbers<[1], [0], [0], [1], [0, 0, 1, 1], [], []>} : vector<128x8xbf16>, vector<8x16xbf16>, vector<128x16xf32> -> vector<128x16xf32>
    %71 = arith.addf %44, %70 : vector<128x16xf32>
    %c8_i32 = arith.constant 8 : i32
    %72 = tpu.dynamic_rotate %36 by %c8_i32 dim 0 : vector<128x8xf32>, i32 -> vector<128x8xf32>
    %c-1_i32_27 = arith.constant -1 : i32
    %73 = vector.broadcast %c-1_i32_27 : i32 to vector<128x8xi32>
    %74 = arith.addi %43, %73 : vector<128x8xi32>
    %c0_i32_28 = arith.constant 0 : i32
    %75 = vector.broadcast %c0_i32_28 : i32 to vector<128x8xi32>
    %76 = arith.cmpi sge, %74, %75 : vector<128x8xi32>
    %c-1_i32_29 = arith.constant -1 : i32
    %77 = vector.broadcast %c-1_i32_29 : i32 to vector<128x8xi32>
    %78 = arith.addi %43, %77 : vector<128x8xi32>
    %c7_i32_30 = arith.constant 7 : i32
    %79 = vector.broadcast %c7_i32_30 : i32 to vector<128x8xi32>
    %80 = arith.cmpi sle, %78, %79 : vector<128x8xi32>
    %81 = arith.andi %76, %80 : vector<128x8xi1>
    %c0_i32_31 = arith.constant 0 : i32
    %82 = vector.broadcast %c0_i32_31 : i32 to vector<128x8xi32>
    %83 = arith.addi %39, %82 : vector<128x8xi32>
    %c0_i32_32 = arith.constant 0 : i32
    %84 = vector.broadcast %c0_i32_32 : i32 to vector<128x8xi32>
    %85 = arith.cmpi sge, %83, %84 : vector<128x8xi32>
    %86 = arith.andi %81, %85 : vector<128x8xi1>
    %c0_i32_33 = arith.constant 0 : i32
    %87 = vector.broadcast %c0_i32_33 : i32 to vector<128x8xi32>
    %88 = arith.addi %39, %87 : vector<128x8xi32>
    %c7_i32_34 = arith.constant 7 : i32
    %89 = vector.broadcast %c7_i32_34 : i32 to vector<128x8xi32>
    %90 = arith.cmpi sle, %88, %89 : vector<128x8xi32>
    %91 = arith.andi %86, %90 : vector<128x8xi1>
    %cst_35 = arith.constant 0.000000e+00 : f32
    %92 = vector.broadcast %cst_35 : f32 to vector<128x8xf32>
    %93 = arith.select %91, %72, %92 : vector<128x8xi1>, vector<128x8xf32>
    %94 = arith.truncf %93 : vector<128x8xf32> to vector<128x8xbf16>
    %c1 = arith.constant 1 : index
    %c0_36 = arith.constant 0 : index
    %c0_37 = arith.constant 0 : index
    %95 = vector.load %arg4[%c1, %c0_36, %c0_37] : memref<9x8x16xbf16, #tpu.memory_space<vmem>>, vector<1x8x16xbf16>
    %96 = vector.shape_cast %95 : vector<1x8x16xbf16> to vector<8x16xbf16>
    %cst_38 = arith.constant dense<0.000000e+00> : vector<128x16xf32>
    %97 = tpu.matmul %94, %96, %cst_38 {dimension_numbers = #tpu.dot_dimension_numbers<[1], [0], [0], [1], [0, 0, 1, 1], [], []>} : vector<128x8xbf16>, vector<8x16xbf16>, vector<128x16xf32> -> vector<128x16xf32>
    %98 = arith.addf %71, %97 : vector<128x16xf32>
    %c7_i32_39 = arith.constant 7 : i32
    %99 = tpu.dynamic_rotate %36 by %c7_i32_39 dim 0 : vector<128x8xf32>, i32 -> vector<128x8xf32>
    %c-1_i32_40 = arith.constant -1 : i32
    %100 = vector.broadcast %c-1_i32_40 : i32 to vector<128x8xi32>
    %101 = arith.addi %43, %100 : vector<128x8xi32>
    %c0_i32_41 = arith.constant 0 : i32
    %102 = vector.broadcast %c0_i32_41 : i32 to vector<128x8xi32>
    %103 = arith.cmpi sge, %101, %102 : vector<128x8xi32>
    %c-1_i32_42 = arith.constant -1 : i32
    %104 = vector.broadcast %c-1_i32_42 : i32 to vector<128x8xi32>
    %105 = arith.addi %43, %104 : vector<128x8xi32>
    %c7_i32_43 = arith.constant 7 : i32
    %106 = vector.broadcast %c7_i32_43 : i32 to vector<128x8xi32>
    %107 = arith.cmpi sle, %105, %106 : vector<128x8xi32>
    %108 = arith.andi %103, %107 : vector<128x8xi1>
    %c1_i32 = arith.constant 1 : i32
    %109 = vector.broadcast %c1_i32 : i32 to vector<128x8xi32>
    %110 = arith.addi %39, %109 : vector<128x8xi32>
    %c0_i32_44 = arith.constant 0 : i32
    %111 = vector.broadcast %c0_i32_44 : i32 to vector<128x8xi32>
    %112 = arith.cmpi sge, %110, %111 : vector<128x8xi32>
    %113 = arith.andi %108, %112 : vector<128x8xi1>
    %c1_i32_45 = arith.constant 1 : i32
    %114 = vector.broadcast %c1_i32_45 : i32 to vector<128x8xi32>
    %115 = arith.addi %39, %114 : vector<128x8xi32>
    %c7_i32_46 = arith.constant 7 : i32
    %116 = vector.broadcast %c7_i32_46 : i32 to vector<128x8xi32>
    %117 = arith.cmpi sle, %115, %116 : vector<128x8xi32>
    %118 = arith.andi %113, %117 : vector<128x8xi1>
    %cst_47 = arith.constant 0.000000e+00 : f32
    %119 = vector.broadcast %cst_47 : f32 to vector<128x8xf32>
    %120 = arith.select %118, %99, %119 : vector<128x8xi1>, vector<128x8xf32>
    %121 = arith.truncf %120 : vector<128x8xf32> to vector<128x8xbf16>
    %c2 = arith.constant 2 : index
    %c0_48 = arith.constant 0 : index
    %c0_49 = arith.constant 0 : index
    %122 = vector.load %arg4[%c2, %c0_48, %c0_49] : memref<9x8x16xbf16, #tpu.memory_space<vmem>>, vector<1x8x16xbf16>
    %123 = vector.shape_cast %122 : vector<1x8x16xbf16> to vector<8x16xbf16>
    %cst_50 = arith.constant dense<0.000000e+00> : vector<128x16xf32>
    %124 = tpu.matmul %121, %123, %cst_50 {dimension_numbers = #tpu.dot_dimension_numbers<[1], [0], [0], [1], [0, 0, 1, 1], [], []>} : vector<128x8xbf16>, vector<8x16xbf16>, vector<128x16xf32> -> vector<128x16xf32>
    %125 = arith.addf %98, %124 : vector<128x16xf32>
    %c1_i32_51 = arith.constant 1 : i32
    %126 = tpu.dynamic_rotate %36 by %c1_i32_51 dim 0 : vector<128x8xf32>, i32 -> vector<128x8xf32>
    %c0_i32_52 = arith.constant 0 : i32
    %127 = vector.broadcast %c0_i32_52 : i32 to vector<128x8xi32>
    %128 = arith.addi %43, %127 : vector<128x8xi32>
    %c0_i32_53 = arith.constant 0 : i32
    %129 = vector.broadcast %c0_i32_53 : i32 to vector<128x8xi32>
    %130 = arith.cmpi sge, %128, %129 : vector<128x8xi32>
    %c0_i32_54 = arith.constant 0 : i32
    %131 = vector.broadcast %c0_i32_54 : i32 to vector<128x8xi32>
    %132 = arith.addi %43, %131 : vector<128x8xi32>
    %c7_i32_55 = arith.constant 7 : i32
    %133 = vector.broadcast %c7_i32_55 : i32 to vector<128x8xi32>
    %134 = arith.cmpi sle, %132, %133 : vector<128x8xi32>
    %135 = arith.andi %130, %134 : vector<128x8xi1>
    %c-1_i32_56 = arith.constant -1 : i32
    %136 = vector.broadcast %c-1_i32_56 : i32 to vector<128x8xi32>
    %137 = arith.addi %39, %136 : vector<128x8xi32>
    %c0_i32_57 = arith.constant 0 : i32
    %138 = vector.broadcast %c0_i32_57 : i32 to vector<128x8xi32>
    %139 = arith.cmpi sge, %137, %138 : vector<128x8xi32>
    %140 = arith.andi %135, %139 : vector<128x8xi1>
    %c-1_i32_58 = arith.constant -1 : i32
    %141 = vector.broadcast %c-1_i32_58 : i32 to vector<128x8xi32>
    %142 = arith.addi %39, %141 : vector<128x8xi32>
    %c7_i32_59 = arith.constant 7 : i32
    %143 = vector.broadcast %c7_i32_59 : i32 to vector<128x8xi32>
    %144 = arith.cmpi sle, %142, %143 : vector<128x8xi32>
    %145 = arith.andi %140, %144 : vector<128x8xi1>
    %cst_60 = arith.constant 0.000000e+00 : f32
    %146 = vector.broadcast %cst_60 : f32 to vector<128x8xf32>
    %147 = arith.select %145, %126, %146 : vector<128x8xi1>, vector<128x8xf32>
    %148 = arith.truncf %147 : vector<128x8xf32> to vector<128x8xbf16>
    %c3 = arith.constant 3 : index
    %c0_61 = arith.constant 0 : index
    %c0_62 = arith.constant 0 : index
    %149 = vector.load %arg4[%c3, %c0_61, %c0_62] : memref<9x8x16xbf16, #tpu.memory_space<vmem>>, vector<1x8x16xbf16>
    %150 = vector.shape_cast %149 : vector<1x8x16xbf16> to vector<8x16xbf16>
    %cst_63 = arith.constant dense<0.000000e+00> : vector<128x16xf32>
    %151 = tpu.matmul %148, %150, %cst_63 {dimension_numbers = #tpu.dot_dimension_numbers<[1], [0], [0], [1], [0, 0, 1, 1], [], []>} : vector<128x8xbf16>, vector<8x16xbf16>, vector<128x16xf32> -> vector<128x16xf32>
    %152 = arith.addf %125, %151 : vector<128x16xf32>
    %153 = arith.truncf %36 : vector<128x8xf32> to vector<128x8xbf16>
    %c4 = arith.constant 4 : index
    %c0_64 = arith.constant 0 : index
    %c0_65 = arith.constant 0 : index
    %154 = vector.load %arg4[%c4, %c0_64, %c0_65] : memref<9x8x16xbf16, #tpu.memory_space<vmem>>, vector<1x8x16xbf16>
    %155 = vector.shape_cast %154 : vector<1x8x16xbf16> to vector<8x16xbf16>
    %cst_66 = arith.constant dense<0.000000e+00> : vector<128x16xf32>
    %156 = tpu.matmul %153, %155, %cst_66 {dimension_numbers = #tpu.dot_dimension_numbers<[1], [0], [0], [1], [0, 0, 1, 1], [], []>} : vector<128x8xbf16>, vector<8x16xbf16>, vector<128x16xf32> -> vector<128x16xf32>
    %157 = arith.addf %152, %156 : vector<128x16xf32>
    %c127_i32 = arith.constant 127 : i32
    %158 = tpu.dynamic_rotate %36 by %c127_i32 dim 0 : vector<128x8xf32>, i32 -> vector<128x8xf32>
    %c0_i32_67 = arith.constant 0 : i32
    %159 = vector.broadcast %c0_i32_67 : i32 to vector<128x8xi32>
    %160 = arith.addi %43, %159 : vector<128x8xi32>
    %c0_i32_68 = arith.constant 0 : i32
    %161 = vector.broadcast %c0_i32_68 : i32 to vector<128x8xi32>
    %162 = arith.cmpi sge, %160, %161 : vector<128x8xi32>
    %c0_i32_69 = arith.constant 0 : i32
    %163 = vector.broadcast %c0_i32_69 : i32 to vector<128x8xi32>
    %164 = arith.addi %43, %163 : vector<128x8xi32>
    %c7_i32_70 = arith.constant 7 : i32
    %165 = vector.broadcast %c7_i32_70 : i32 to vector<128x8xi32>
    %166 = arith.cmpi sle, %164, %165 : vector<128x8xi32>
    %167 = arith.andi %162, %166 : vector<128x8xi1>
    %c1_i32_71 = arith.constant 1 : i32
    %168 = vector.broadcast %c1_i32_71 : i32 to vector<128x8xi32>
    %169 = arith.addi %39, %168 : vector<128x8xi32>
    %c0_i32_72 = arith.constant 0 : i32
    %170 = vector.broadcast %c0_i32_72 : i32 to vector<128x8xi32>
    %171 = arith.cmpi sge, %169, %170 : vector<128x8xi32>
    %172 = arith.andi %167, %171 : vector<128x8xi1>
    %c1_i32_73 = arith.constant 1 : i32
    %173 = vector.broadcast %c1_i32_73 : i32 to vector<128x8xi32>
    %174 = arith.addi %39, %173 : vector<128x8xi32>
    %c7_i32_74 = arith.constant 7 : i32
    %175 = vector.broadcast %c7_i32_74 : i32 to vector<128x8xi32>
    %176 = arith.cmpi sle, %174, %175 : vector<128x8xi32>
    %177 = arith.andi %172, %176 : vector<128x8xi1>
    %cst_75 = arith.constant 0.000000e+00 : f32
    %178 = vector.broadcast %cst_75 : f32 to vector<128x8xf32>
    %179 = arith.select %177, %158, %178 : vector<128x8xi1>, vector<128x8xf32>
    %180 = arith.truncf %179 : vector<128x8xf32> to vector<128x8xbf16>
    %c5 = arith.constant 5 : index
    %c0_76 = arith.constant 0 : index
    %c0_77 = arith.constant 0 : index
    %181 = vector.load %arg4[%c5, %c0_76, %c0_77] : memref<9x8x16xbf16, #tpu.memory_space<vmem>>, vector<1x8x16xbf16>
    %182 = vector.shape_cast %181 : vector<1x8x16xbf16> to vector<8x16xbf16>
    %cst_78 = arith.constant dense<0.000000e+00> : vector<128x16xf32>
    %183 = tpu.matmul %180, %182, %cst_78 {dimension_numbers = #tpu.dot_dimension_numbers<[1], [0], [0], [1], [0, 0, 1, 1], [], []>} : vector<128x8xbf16>, vector<8x16xbf16>, vector<128x16xf32> -> vector<128x16xf32>
    %184 = arith.addf %157, %183 : vector<128x16xf32>
    %c121_i32 = arith.constant 121 : i32
    %185 = tpu.dynamic_rotate %36 by %c121_i32 dim 0 : vector<128x8xf32>, i32 -> vector<128x8xf32>
    %c1_i32_79 = arith.constant 1 : i32
    %186 = vector.broadcast %c1_i32_79 : i32 to vector<128x8xi32>
    %187 = arith.addi %43, %186 : vector<128x8xi32>
    %c0_i32_80 = arith.constant 0 : i32
    %188 = vector.broadcast %c0_i32_80 : i32 to vector<128x8xi32>
    %189 = arith.cmpi sge, %187, %188 : vector<128x8xi32>
    %c1_i32_81 = arith.constant 1 : i32
    %190 = vector.broadcast %c1_i32_81 : i32 to vector<128x8xi32>
    %191 = arith.addi %43, %190 : vector<128x8xi32>
    %c7_i32_82 = arith.constant 7 : i32
    %192 = vector.broadcast %c7_i32_82 : i32 to vector<128x8xi32>
    %193 = arith.cmpi sle, %191, %192 : vector<128x8xi32>
    %194 = arith.andi %189, %193 : vector<128x8xi1>
    %c-1_i32_83 = arith.constant -1 : i32
    %195 = vector.broadcast %c-1_i32_83 : i32 to vector<128x8xi32>
    %196 = arith.addi %39, %195 : vector<128x8xi32>
    %c0_i32_84 = arith.constant 0 : i32
    %197 = vector.broadcast %c0_i32_84 : i32 to vector<128x8xi32>
    %198 = arith.cmpi sge, %196, %197 : vector<128x8xi32>
    %199 = arith.andi %194, %198 : vector<128x8xi1>
    %c-1_i32_85 = arith.constant -1 : i32
    %200 = vector.broadcast %c-1_i32_85 : i32 to vector<128x8xi32>
    %201 = arith.addi %39, %200 : vector<128x8xi32>
    %c7_i32_86 = arith.constant 7 : i32
    %202 = vector.broadcast %c7_i32_86 : i32 to vector<128x8xi32>
    %203 = arith.cmpi sle, %201, %202 : vector<128x8xi32>
    %204 = arith.andi %199, %203 : vector<128x8xi1>
    %cst_87 = arith.constant 0.000000e+00 : f32
    %205 = vector.broadcast %cst_87 : f32 to vector<128x8xf32>
    %206 = arith.select %204, %185, %205 : vector<128x8xi1>, vector<128x8xf32>
    %207 = arith.truncf %206 : vector<128x8xf32> to vector<128x8xbf16>
    %c6 = arith.constant 6 : index
    %c0_88 = arith.constant 0 : index
    %c0_89 = arith.constant 0 : index
    %208 = vector.load %arg4[%c6, %c0_88, %c0_89] : memref<9x8x16xbf16, #tpu.memory_space<vmem>>, vector<1x8x16xbf16>
    %209 = vector.shape_cast %208 : vector<1x8x16xbf16> to vector<8x16xbf16>
    %cst_90 = arith.constant dense<0.000000e+00> : vector<128x16xf32>
    %210 = tpu.matmul %207, %209, %cst_90 {dimension_numbers = #tpu.dot_dimension_numbers<[1], [0], [0], [1], [0, 0, 1, 1], [], []>} : vector<128x8xbf16>, vector<8x16xbf16>, vector<128x16xf32> -> vector<128x16xf32>
    %211 = arith.addf %184, %210 : vector<128x16xf32>
    %c120_i32 = arith.constant 120 : i32
    %212 = tpu.dynamic_rotate %36 by %c120_i32 dim 0 : vector<128x8xf32>, i32 -> vector<128x8xf32>
    %c1_i32_91 = arith.constant 1 : i32
    %213 = vector.broadcast %c1_i32_91 : i32 to vector<128x8xi32>
    %214 = arith.addi %43, %213 : vector<128x8xi32>
    %c0_i32_92 = arith.constant 0 : i32
    %215 = vector.broadcast %c0_i32_92 : i32 to vector<128x8xi32>
    %216 = arith.cmpi sge, %214, %215 : vector<128x8xi32>
    %c1_i32_93 = arith.constant 1 : i32
    %217 = vector.broadcast %c1_i32_93 : i32 to vector<128x8xi32>
    %218 = arith.addi %43, %217 : vector<128x8xi32>
    %c7_i32_94 = arith.constant 7 : i32
    %219 = vector.broadcast %c7_i32_94 : i32 to vector<128x8xi32>
    %220 = arith.cmpi sle, %218, %219 : vector<128x8xi32>
    %221 = arith.andi %216, %220 : vector<128x8xi1>
    %c0_i32_95 = arith.constant 0 : i32
    %222 = vector.broadcast %c0_i32_95 : i32 to vector<128x8xi32>
    %223 = arith.addi %39, %222 : vector<128x8xi32>
    %c0_i32_96 = arith.constant 0 : i32
    %224 = vector.broadcast %c0_i32_96 : i32 to vector<128x8xi32>
    %225 = arith.cmpi sge, %223, %224 : vector<128x8xi32>
    %226 = arith.andi %221, %225 : vector<128x8xi1>
    %c0_i32_97 = arith.constant 0 : i32
    %227 = vector.broadcast %c0_i32_97 : i32 to vector<128x8xi32>
    %228 = arith.addi %39, %227 : vector<128x8xi32>
    %c7_i32_98 = arith.constant 7 : i32
    %229 = vector.broadcast %c7_i32_98 : i32 to vector<128x8xi32>
    %230 = arith.cmpi sle, %228, %229 : vector<128x8xi32>
    %231 = arith.andi %226, %230 : vector<128x8xi1>
    %cst_99 = arith.constant 0.000000e+00 : f32
    %232 = vector.broadcast %cst_99 : f32 to vector<128x8xf32>
    %233 = arith.select %231, %212, %232 : vector<128x8xi1>, vector<128x8xf32>
    %234 = arith.truncf %233 : vector<128x8xf32> to vector<128x8xbf16>
    %c7 = arith.constant 7 : index
    %c0_100 = arith.constant 0 : index
    %c0_101 = arith.constant 0 : index
    %235 = vector.load %arg4[%c7, %c0_100, %c0_101] : memref<9x8x16xbf16, #tpu.memory_space<vmem>>, vector<1x8x16xbf16>
    %236 = vector.shape_cast %235 : vector<1x8x16xbf16> to vector<8x16xbf16>
    %cst_102 = arith.constant dense<0.000000e+00> : vector<128x16xf32>
    %237 = tpu.matmul %234, %236, %cst_102 {dimension_numbers = #tpu.dot_dimension_numbers<[1], [0], [0], [1], [0, 0, 1, 1], [], []>} : vector<128x8xbf16>, vector<8x16xbf16>, vector<128x16xf32> -> vector<128x16xf32>
    %238 = arith.addf %211, %237 : vector<128x16xf32>
    %c119_i32 = arith.constant 119 : i32
    %239 = tpu.dynamic_rotate %36 by %c119_i32 dim 0 : vector<128x8xf32>, i32 -> vector<128x8xf32>
    %c1_i32_103 = arith.constant 1 : i32
    %240 = vector.broadcast %c1_i32_103 : i32 to vector<128x8xi32>
    %241 = arith.addi %43, %240 : vector<128x8xi32>
    %c0_i32_104 = arith.constant 0 : i32
    %242 = vector.broadcast %c0_i32_104 : i32 to vector<128x8xi32>
    %243 = arith.cmpi sge, %241, %242 : vector<128x8xi32>
    %c1_i32_105 = arith.constant 1 : i32
    %244 = vector.broadcast %c1_i32_105 : i32 to vector<128x8xi32>
    %245 = arith.addi %43, %244 : vector<128x8xi32>
    %c7_i32_106 = arith.constant 7 : i32
    %246 = vector.broadcast %c7_i32_106 : i32 to vector<128x8xi32>
    %247 = arith.cmpi sle, %245, %246 : vector<128x8xi32>
    %248 = arith.andi %243, %247 : vector<128x8xi1>
    %c1_i32_107 = arith.constant 1 : i32
    %249 = vector.broadcast %c1_i32_107 : i32 to vector<128x8xi32>
    %250 = arith.addi %39, %249 : vector<128x8xi32>
    %c0_i32_108 = arith.constant 0 : i32
    %251 = vector.broadcast %c0_i32_108 : i32 to vector<128x8xi32>
    %252 = arith.cmpi sge, %250, %251 : vector<128x8xi32>
    %253 = arith.andi %248, %252 : vector<128x8xi1>
    %c1_i32_109 = arith.constant 1 : i32
    %254 = vector.broadcast %c1_i32_109 : i32 to vector<128x8xi32>
    %255 = arith.addi %39, %254 : vector<128x8xi32>
    %c7_i32_110 = arith.constant 7 : i32
    %256 = vector.broadcast %c7_i32_110 : i32 to vector<128x8xi32>
    %257 = arith.cmpi sle, %255, %256 : vector<128x8xi32>
    %258 = arith.andi %253, %257 : vector<128x8xi1>
    %cst_111 = arith.constant 0.000000e+00 : f32
    %259 = vector.broadcast %cst_111 : f32 to vector<128x8xf32>
    %260 = arith.select %258, %239, %259 : vector<128x8xi1>, vector<128x8xf32>
    %261 = arith.truncf %260 : vector<128x8xf32> to vector<128x8xbf16>
    %c8 = arith.constant 8 : index
    %c0_112 = arith.constant 0 : index
    %c0_113 = arith.constant 0 : index
    %262 = vector.load %arg4[%c8, %c0_112, %c0_113] : memref<9x8x16xbf16, #tpu.memory_space<vmem>>, vector<1x8x16xbf16>
    %263 = vector.shape_cast %262 : vector<1x8x16xbf16> to vector<8x16xbf16>
    %cst_114 = arith.constant dense<0.000000e+00> : vector<128x16xf32>
    %264 = tpu.matmul %261, %263, %cst_114 {dimension_numbers = #tpu.dot_dimension_numbers<[1], [0], [0], [1], [0, 0, 1, 1], [], []>} : vector<128x8xbf16>, vector<8x16xbf16>, vector<128x16xf32> -> vector<128x16xf32>
    %265 = arith.addf %238, %264 : vector<128x16xf32>
    %c0_115 = arith.constant 0 : index
    %c0_116 = arith.constant 0 : index
    %266 = vector.load %arg5[%c0_115, %c0_116] : memref<1x16xf32, #tpu.memory_space<vmem>>, vector<1x16xf32>
    %c0_117 = arith.constant 0 : index
    %c0_118 = arith.constant 0 : index
    %267 = vector.load %arg6[%c0_117, %c0_118] : memref<1x16xf32, #tpu.memory_space<vmem>>, vector<1x16xf32>
    %cst_119 = arith.constant dense<0.000000e+00> : vector<16xf32>
    %268 = vector.multi_reduction <add>, %265, %cst_119 [0] : vector<128x16xf32> to vector<16xf32>
    %269 = vector.shape_cast %268 : vector<16xf32> to vector<1x16xf32>
    %cst_120 = arith.constant 1.280000e+02 : f32
    %270 = vector.broadcast %cst_120 : f32 to vector<1x16xf32>
    %271 = arith.divf %269, %270 : vector<1x16xf32>
    %272 = arith.mulf %265, %265 : vector<128x16xf32>
    %cst_121 = arith.constant dense<0.000000e+00> : vector<16xf32>
    %273 = vector.multi_reduction <add>, %272, %cst_121 [0] : vector<128x16xf32> to vector<16xf32>
    %274 = vector.shape_cast %273 : vector<16xf32> to vector<1x16xf32>
    %cst_122 = arith.constant 1.280000e+02 : f32
    %275 = vector.broadcast %cst_122 : f32 to vector<1x16xf32>
    %276 = arith.divf %274, %275 : vector<1x16xf32>
    %277 = arith.mulf %271, %271 : vector<1x16xf32>
    %278 = arith.subf %276, %277 : vector<1x16xf32>
    %cst_123 = arith.constant 0.000000e+00 : f32
    %279 = vector.broadcast %cst_123 : f32 to vector<1x16xf32>
    %280 = arith.maximumf %278, %279 : vector<1x16xf32>
    %cst_124 = arith.constant 9.99999974E-6 : f32
    %281 = vector.broadcast %cst_124 : f32 to vector<1x16xf32>
    %282 = arith.addf %280, %281 : vector<1x16xf32>
    %283 = math.rsqrt %282 : vector<1x16xf32>
    %284 = arith.mulf %266, %283 : vector<1x16xf32>
    %285 = arith.mulf %271, %284 : vector<1x16xf32>
    %286 = arith.subf %267, %285 : vector<1x16xf32>
    %287 = vector.broadcast %284 : vector<1x16xf32> to vector<128x16xf32>
    %288 = arith.mulf %265, %287 : vector<128x16xf32>
    %289 = vector.broadcast %286 : vector<1x16xf32> to vector<128x16xf32>
    %290 = arith.addf %288, %289 : vector<128x16xf32>
    %cst_125 = arith.constant 0.000000e+00 : f32
    %291 = vector.broadcast %cst_125 : f32 to vector<128x16xf32>
    %292 = arith.maximumf %290, %291 : vector<128x16xf32>
    %293 = vector.shape_cast %292 : vector<128x16xf32> to vector<2x8x8x16xf32>
    %c0_126 = arith.constant 0 : index
    %c0_127 = arith.constant 0 : index
    %c0_128 = arith.constant 0 : index
    %c0_129 = arith.constant 0 : index
    %294 = vector.load %arg10[%c0_126, %c0_127, %c0_128, %c0_129] : memref<2x8x8x16xf32, #tpu.memory_space<vmem>>, vector<2x8x8x16xf32>
    tpu.vector_store %arg10[%c0_126, %c0_127, %c0_128, %c0_129], %293 {strides = array<i32>} : memref<2x8x8x16xf32, #tpu.memory_space<vmem>>, vector<2x8x8x16xf32>,
    %cst_130 = arith.constant 0.000000e+00 : f32
    %295 = vector.broadcast %cst_130 : f32 to vector<2x128xf32>
    %c0_131 = arith.constant 0 : index
    %c0_132 = arith.constant 0 : index
    %c0_133 = arith.constant 0 : index
    %c0_134 = arith.constant 0 : index
    %296 = vector.load %arg10[%c0_131, %c0_132, %c0_133, %c0_134] : memref<2x8x8x16xf32, #tpu.memory_space<vmem>>, vector<2x1x1x16xf32>
    %297 = vector.shape_cast %296 : vector<2x1x1x16xf32> to vector<2x16xf32>
    %c0_135 = arith.constant 0 : index
    %c0_136 = arith.constant 0 : index
    %c1_137 = arith.constant 1 : index
    %c0_138 = arith.constant 0 : index
    %298 = vector.load %arg10[%c0_135, %c0_136, %c1_137, %c0_138] : memref<2x8x8x16xf32, #tpu.memory_space<vmem>>, vector<2x1x1x16xf32>
    %299 = vector.shape_cast %298 : vector<2x1x1x16xf32> to vector<2x16xf32>
    %300 = arith.maximumf %297, %299 : vector<2x16xf32>
    %c0_139 = arith.constant 0 : index
    %c1_140 = arith.constant 1 : index
    %c0_141 = arith.constant 0 : index
    %c0_142 = arith.constant 0 : index
    %301 = vector.load %arg10[%c0_139, %c1_140, %c0_141, %c0_142] : memref<2x8x8x16xf32, #tpu.memory_space<vmem>>, vector<2x1x1x16xf32>
    %302 = vector.shape_cast %301 : vector<2x1x1x16xf32> to vector<2x16xf32>
    %c0_143 = arith.constant 0 : index
    %c1_144 = arith.constant 1 : index
    %c1_145 = arith.constant 1 : index
    %c0_146 = arith.constant 0 : index
    %303 = vector.load %arg10[%c0_143, %c1_144, %c1_145, %c0_146] : memref<2x8x8x16xf32, #tpu.memory_space<vmem>>, vector<2x1x1x16xf32>
    %304 = vector.shape_cast %303 : vector<2x1x1x16xf32> to vector<2x16xf32>
    %305 = arith.maximumf %302, %304 : vector<2x16xf32>
    %306 = arith.maximumf %300, %305 : vector<2x16xf32>
    %307 = arith.truncf %306 : vector<2x16xf32> to vector<2x16xbf16>
    %c0_147 = arith.constant 0 : index
    %c0_148 = arith.constant 0 : index
    %c0_149 = arith.constant 0 : index
    %308 = vector.load %arg7[%c0_147, %c0_148, %c0_149] : memref<16x16x128xbf16, #tpu.memory_space<vmem>>, vector<1x16x128xbf16>
    %309 = vector.shape_cast %308 : vector<1x16x128xbf16> to vector<16x128xbf16>
    %cst_150 = arith.constant dense<0.000000e+00> : vector<2x128xf32>
    %310 = tpu.matmul %307, %309, %cst_150 {dimension_numbers = #tpu.dot_dimension_numbers<[1], [0], [0], [1], [0, 0, 1, 1], [], []>} : vector<2x16xbf16>, vector<16x128xbf16>, vector<2x128xf32> -> vector<2x128xf32>
    %311 = arith.addf %295, %310 : vector<2x128xf32>
    %c0_151 = arith.constant 0 : index
    %c0_152 = arith.constant 0 : index
    %c2_153 = arith.constant 2 : index
    %c0_154 = arith.constant 0 : index
    %312 = vector.load %arg10[%c0_151, %c0_152, %c2_153, %c0_154] : memref<2x8x8x16xf32, #tpu.memory_space<vmem>>, vector<2x1x1x16xf32>
    %313 = vector.shape_cast %312 : vector<2x1x1x16xf32> to vector<2x16xf32>
    %c0_155 = arith.constant 0 : index
    %c0_156 = arith.constant 0 : index
    %c3_157 = arith.constant 3 : index
    %c0_158 = arith.constant 0 : index
    %314 = vector.load %arg10[%c0_155, %c0_156, %c3_157, %c0_158] : memref<2x8x8x16xf32, #tpu.memory_space<vmem>>, vector<2x1x1x16xf32>
    %315 = vector.shape_cast %314 : vector<2x1x1x16xf32> to vector<2x16xf32>
    %316 = arith.maximumf %313, %315 : vector<2x16xf32>
    %c0_159 = arith.constant 0 : index
    %c1_160 = arith.constant 1 : index
    %c2_161 = arith.constant 2 : index
    %c0_162 = arith.constant 0 : index
    %317 = vector.load %arg10[%c0_159, %c1_160, %c2_161, %c0_162] : memref<2x8x8x16xf32, #tpu.memory_space<vmem>>, vector<2x1x1x16xf32>
    %318 = vector.shape_cast %317 : vector<2x1x1x16xf32> to vector<2x16xf32>
    %c0_163 = arith.constant 0 : index
    %c1_164 = arith.constant 1 : index
    %c3_165 = arith.constant 3 : index
    %c0_166 = arith.constant 0 : index
    %319 = vector.load %arg10[%c0_163, %c1_164, %c3_165, %c0_166] : memref<2x8x8x16xf32, #tpu.memory_space<vmem>>, vector<2x1x1x16xf32>
    %320 = vector.shape_cast %319 : vector<2x1x1x16xf32> to vector<2x16xf32>
    %321 = arith.maximumf %318, %320 : vector<2x16xf32>
    %322 = arith.maximumf %316, %321 : vector<2x16xf32>
    %323 = arith.truncf %322 : vector<2x16xf32> to vector<2x16xbf16>
    %c1_167 = arith.constant 1 : index
    %c0_168 = arith.constant 0 : index
    %c0_169 = arith.constant 0 : index
    %324 = vector.load %arg7[%c1_167, %c0_168, %c0_169] : memref<16x16x128xbf16, #tpu.memory_space<vmem>>, vector<1x16x128xbf16>
    %325 = vector.shape_cast %324 : vector<1x16x128xbf16> to vector<16x128xbf16>
    %cst_170 = arith.constant dense<0.000000e+00> : vector<2x128xf32>
    %326 = tpu.matmul %323, %325, %cst_170 {dimension_numbers = #tpu.dot_dimension_numbers<[1], [0], [0], [1], [0, 0, 1, 1], [], []>} : vector<2x16xbf16>, vector<16x128xbf16>, vector<2x128xf32> -> vector<2x128xf32>
    %327 = arith.addf %311, %326 : vector<2x128xf32>
    %c0_171 = arith.constant 0 : index
    %c0_172 = arith.constant 0 : index
    %c4_173 = arith.constant 4 : index
    %c0_174 = arith.constant 0 : index
    %328 = vector.load %arg10[%c0_171, %c0_172, %c4_173, %c0_174] : memref<2x8x8x16xf32, #tpu.memory_space<vmem>>, vector<2x1x1x16xf32>
    %329 = vector.shape_cast %328 : vector<2x1x1x16xf32> to vector<2x16xf32>
    %c0_175 = arith.constant 0 : index
    %c0_176 = arith.constant 0 : index
    %c5_177 = arith.constant 5 : index
    %c0_178 = arith.constant 0 : index
    %330 = vector.load %arg10[%c0_175, %c0_176, %c5_177, %c0_178] : memref<2x8x8x16xf32, #tpu.memory_space<vmem>>, vector<2x1x1x16xf32>
    %331 = vector.shape_cast %330 : vector<2x1x1x16xf32> to vector<2x16xf32>
    %332 = arith.maximumf %329, %331 : vector<2x16xf32>
    %c0_179 = arith.constant 0 : index
    %c1_180 = arith.constant 1 : index
    %c4_181 = arith.constant 4 : index
    %c0_182 = arith.constant 0 : index
    %333 = vector.load %arg10[%c0_179, %c1_180, %c4_181, %c0_182] : memref<2x8x8x16xf32, #tpu.memory_space<vmem>>, vector<2x1x1x16xf32>
    %334 = vector.shape_cast %333 : vector<2x1x1x16xf32> to vector<2x16xf32>
    %c0_183 = arith.constant 0 : index
    %c1_184 = arith.constant 1 : index
    %c5_185 = arith.constant 5 : index
    %c0_186 = arith.constant 0 : index
    %335 = vector.load %arg10[%c0_183, %c1_184, %c5_185, %c0_186] : memref<2x8x8x16xf32, #tpu.memory_space<vmem>>, vector<2x1x1x16xf32>
    %336 = vector.shape_cast %335 : vector<2x1x1x16xf32> to vector<2x16xf32>
    %337 = arith.maximumf %334, %336 : vector<2x16xf32>
    %338 = arith.maximumf %332, %337 : vector<2x16xf32>
    %339 = arith.truncf %338 : vector<2x16xf32> to vector<2x16xbf16>
    %c2_187 = arith.constant 2 : index
    %c0_188 = arith.constant 0 : index
    %c0_189 = arith.constant 0 : index
    %340 = vector.load %arg7[%c2_187, %c0_188, %c0_189] : memref<16x16x128xbf16, #tpu.memory_space<vmem>>, vector<1x16x128xbf16>
    %341 = vector.shape_cast %340 : vector<1x16x128xbf16> to vector<16x128xbf16>
    %cst_190 = arith.constant dense<0.000000e+00> : vector<2x128xf32>
    %342 = tpu.matmul %339, %341, %cst_190 {dimension_numbers = #tpu.dot_dimension_numbers<[1], [0], [0], [1], [0, 0, 1, 1], [], []>} : vector<2x16xbf16>, vector<16x128xbf16>, vector<2x128xf32> -> vector<2x128xf32>
    %343 = arith.addf %327, %342 : vector<2x128xf32>
    %c0_191 = arith.constant 0 : index
    %c0_192 = arith.constant 0 : index
    %c6_193 = arith.constant 6 : index
    %c0_194 = arith.constant 0 : index
    %344 = vector.load %arg10[%c0_191, %c0_192, %c6_193, %c0_194] : memref<2x8x8x16xf32, #tpu.memory_space<vmem>>, vector<2x1x1x16xf32>
    %345 = vector.shape_cast %344 : vector<2x1x1x16xf32> to vector<2x16xf32>
    %c0_195 = arith.constant 0 : index
    %c0_196 = arith.constant 0 : index
    %c7_197 = arith.constant 7 : index
    %c0_198 = arith.constant 0 : index
    %346 = vector.load %arg10[%c0_195, %c0_196, %c7_197, %c0_198] : memref<2x8x8x16xf32, #tpu.memory_space<vmem>>, vector<2x1x1x16xf32>
    %347 = vector.shape_cast %346 : vector<2x1x1x16xf32> to vector<2x16xf32>
    %348 = arith.maximumf %345, %347 : vector<2x16xf32>
    %c0_199 = arith.constant 0 : index
    %c1_200 = arith.constant 1 : index
    %c6_201 = arith.constant 6 : index
    %c0_202 = arith.constant 0 : index
    %349 = vector.load %arg10[%c0_199, %c1_200, %c6_201, %c0_202] : memref<2x8x8x16xf32, #tpu.memory_space<vmem>>, vector<2x1x1x16xf32>
    %350 = vector.shape_cast %349 : vector<2x1x1x16xf32> to vector<2x16xf32>
    %c0_203 = arith.constant 0 : index
    %c1_204 = arith.constant 1 : index
    %c7_205 = arith.constant 7 : index
    %c0_206 = arith.constant 0 : index
    %351 = vector.load %arg10[%c0_203, %c1_204, %c7_205, %c0_206] : memref<2x8x8x16xf32, #tpu.memory_space<vmem>>, vector<2x1x1x16xf32>
    %352 = vector.shape_cast %351 : vector<2x1x1x16xf32> to vector<2x16xf32>
    %353 = arith.maximumf %350, %352 : vector<2x16xf32>
    %354 = arith.maximumf %348, %353 : vector<2x16xf32>
    %355 = arith.truncf %354 : vector<2x16xf32> to vector<2x16xbf16>
    %c3_207 = arith.constant 3 : index
    %c0_208 = arith.constant 0 : index
    %c0_209 = arith.constant 0 : index
    %356 = vector.load %arg7[%c3_207, %c0_208, %c0_209] : memref<16x16x128xbf16, #tpu.memory_space<vmem>>, vector<1x16x128xbf16>
    %357 = vector.shape_cast %356 : vector<1x16x128xbf16> to vector<16x128xbf16>
    %cst_210 = arith.constant dense<0.000000e+00> : vector<2x128xf32>
    %358 = tpu.matmul %355, %357, %cst_210 {dimension_numbers = #tpu.dot_dimension_numbers<[1], [0], [0], [1], [0, 0, 1, 1], [], []>} : vector<2x16xbf16>, vector<16x128xbf16>, vector<2x128xf32> -> vector<2x128xf32>
    %359 = arith.addf %343, %358 : vector<2x128xf32>
    %c0_211 = arith.constant 0 : index
    %c2_212 = arith.constant 2 : index
    %c0_213 = arith.constant 0 : index
    %c0_214 = arith.constant 0 : index
    %360 = vector.load %arg10[%c0_211, %c2_212, %c0_213, %c0_214] : memref<2x8x8x16xf32, #tpu.memory_space<vmem>>, vector<2x1x1x16xf32>
    %361 = vector.shape_cast %360 : vector<2x1x1x16xf32> to vector<2x16xf32>
    %c0_215 = arith.constant 0 : index
    %c2_216 = arith.constant 2 : index
    %c1_217 = arith.constant 1 : index
    %c0_218 = arith.constant 0 : index
    %362 = vector.load %arg10[%c0_215, %c2_216, %c1_217, %c0_218] : memref<2x8x8x16xf32, #tpu.memory_space<vmem>>, vector<2x1x1x16xf32>
    %363 = vector.shape_cast %362 : vector<2x1x1x16xf32> to vector<2x16xf32>
    %364 = arith.maximumf %361, %363 : vector<2x16xf32>
    %c0_219 = arith.constant 0 : index
    %c3_220 = arith.constant 3 : index
    %c0_221 = arith.constant 0 : index
    %c0_222 = arith.constant 0 : index
    %365 = vector.load %arg10[%c0_219, %c3_220, %c0_221, %c0_222] : memref<2x8x8x16xf32, #tpu.memory_space<vmem>>, vector<2x1x1x16xf32>
    %366 = vector.shape_cast %365 : vector<2x1x1x16xf32> to vector<2x16xf32>
    %c0_223 = arith.constant 0 : index
    %c3_224 = arith.constant 3 : index
    %c1_225 = arith.constant 1 : index
    %c0_226 = arith.constant 0 : index
    %367 = vector.load %arg10[%c0_223, %c3_224, %c1_225, %c0_226] : memref<2x8x8x16xf32, #tpu.memory_space<vmem>>, vector<2x1x1x16xf32>
    %368 = vector.shape_cast %367 : vector<2x1x1x16xf32> to vector<2x16xf32>
    %369 = arith.maximumf %366, %368 : vector<2x16xf32>
    %370 = arith.maximumf %364, %369 : vector<2x16xf32>
    %371 = arith.truncf %370 : vector<2x16xf32> to vector<2x16xbf16>
    %c4_227 = arith.constant 4 : index
    %c0_228 = arith.constant 0 : index
    %c0_229 = arith.constant 0 : index
    %372 = vector.load %arg7[%c4_227, %c0_228, %c0_229] : memref<16x16x128xbf16, #tpu.memory_space<vmem>>, vector<1x16x128xbf16>
    %373 = vector.shape_cast %372 : vector<1x16x128xbf16> to vector<16x128xbf16>
    %cst_230 = arith.constant dense<0.000000e+00> : vector<2x128xf32>
    %374 = tpu.matmul %371, %373, %cst_230 {dimension_numbers = #tpu.dot_dimension_numbers<[1], [0], [0], [1], [0, 0, 1, 1], [], []>} : vector<2x16xbf16>, vector<16x128xbf16>, vector<2x128xf32> -> vector<2x128xf32>
    %375 = arith.addf %359, %374 : vector<2x128xf32>
    %c0_231 = arith.constant 0 : index
    %c2_232 = arith.constant 2 : index
    %c2_233 = arith.constant 2 : index
    %c0_234 = arith.constant 0 : index
    %376 = vector.load %arg10[%c0_231, %c2_232, %c2_233, %c0_234] : memref<2x8x8x16xf32, #tpu.memory_space<vmem>>, vector<2x1x1x16xf32>
    %377 = vector.shape_cast %376 : vector<2x1x1x16xf32> to vector<2x16xf32>
    %c0_235 = arith.constant 0 : index
    %c2_236 = arith.constant 2 : index
    %c3_237 = arith.constant 3 : index
    %c0_238 = arith.constant 0 : index
    %378 = vector.load %arg10[%c0_235, %c2_236, %c3_237, %c0_238] : memref<2x8x8x16xf32, #tpu.memory_space<vmem>>, vector<2x1x1x16xf32>
    %379 = vector.shape_cast %378 : vector<2x1x1x16xf32> to vector<2x16xf32>
    %380 = arith.maximumf %377, %379 : vector<2x16xf32>
    %c0_239 = arith.constant 0 : index
    %c3_240 = arith.constant 3 : index
    %c2_241 = arith.constant 2 : index
    %c0_242 = arith.constant 0 : index
    %381 = vector.load %arg10[%c0_239, %c3_240, %c2_241, %c0_242] : memref<2x8x8x16xf32, #tpu.memory_space<vmem>>, vector<2x1x1x16xf32>
    %382 = vector.shape_cast %381 : vector<2x1x1x16xf32> to vector<2x16xf32>
    %c0_243 = arith.constant 0 : index
    %c3_244 = arith.constant 3 : index
    %c3_245 = arith.constant 3 : index
    %c0_246 = arith.constant 0 : index
    %383 = vector.load %arg10[%c0_243, %c3_244, %c3_245, %c0_246] : memref<2x8x8x16xf32, #tpu.memory_space<vmem>>, vector<2x1x1x16xf32>
    %384 = vector.shape_cast %383 : vector<2x1x1x16xf32> to vector<2x16xf32>
    %385 = arith.maximumf %382, %384 : vector<2x16xf32>
    %386 = arith.maximumf %380, %385 : vector<2x16xf32>
    %387 = arith.truncf %386 : vector<2x16xf32> to vector<2x16xbf16>
    %c5_247 = arith.constant 5 : index
    %c0_248 = arith.constant 0 : index
    %c0_249 = arith.constant 0 : index
    %388 = vector.load %arg7[%c5_247, %c0_248, %c0_249] : memref<16x16x128xbf16, #tpu.memory_space<vmem>>, vector<1x16x128xbf16>
    %389 = vector.shape_cast %388 : vector<1x16x128xbf16> to vector<16x128xbf16>
    %cst_250 = arith.constant dense<0.000000e+00> : vector<2x128xf32>
    %390 = tpu.matmul %387, %389, %cst_250 {dimension_numbers = #tpu.dot_dimension_numbers<[1], [0], [0], [1], [0, 0, 1, 1], [], []>} : vector<2x16xbf16>, vector<16x128xbf16>, vector<2x128xf32> -> vector<2x128xf32>
    %391 = arith.addf %375, %390 : vector<2x128xf32>
    %c0_251 = arith.constant 0 : index
    %c2_252 = arith.constant 2 : index
    %c4_253 = arith.constant 4 : index
    %c0_254 = arith.constant 0 : index
    %392 = vector.load %arg10[%c0_251, %c2_252, %c4_253, %c0_254] : memref<2x8x8x16xf32, #tpu.memory_space<vmem>>, vector<2x1x1x16xf32>
    %393 = vector.shape_cast %392 : vector<2x1x1x16xf32> to vector<2x16xf32>
    %c0_255 = arith.constant 0 : index
    %c2_256 = arith.constant 2 : index
    %c5_257 = arith.constant 5 : index
    %c0_258 = arith.constant 0 : index
    %394 = vector.load %arg10[%c0_255, %c2_256, %c5_257, %c0_258] : memref<2x8x8x16xf32, #tpu.memory_space<vmem>>, vector<2x1x1x16xf32>
    %395 = vector.shape_cast %394 : vector<2x1x1x16xf32> to vector<2x16xf32>
    %396 = arith.maximumf %393, %395 : vector<2x16xf32>
    %c0_259 = arith.constant 0 : index
    %c3_260 = arith.constant 3 : index
    %c4_261 = arith.constant 4 : index
    %c0_262 = arith.constant 0 : index
    %397 = vector.load %arg10[%c0_259, %c3_260, %c4_261, %c0_262] : memref<2x8x8x16xf32, #tpu.memory_space<vmem>>, vector<2x1x1x16xf32>
    %398 = vector.shape_cast %397 : vector<2x1x1x16xf32> to vector<2x16xf32>
    %c0_263 = arith.constant 0 : index
    %c3_264 = arith.constant 3 : index
    %c5_265 = arith.constant 5 : index
    %c0_266 = arith.constant 0 : index
    %399 = vector.load %arg10[%c0_263, %c3_264, %c5_265, %c0_266] : memref<2x8x8x16xf32, #tpu.memory_space<vmem>>, vector<2x1x1x16xf32>
    %400 = vector.shape_cast %399 : vector<2x1x1x16xf32> to vector<2x16xf32>
    %401 = arith.maximumf %398, %400 : vector<2x16xf32>
    %402 = arith.maximumf %396, %401 : vector<2x16xf32>
    %403 = arith.truncf %402 : vector<2x16xf32> to vector<2x16xbf16>
    %c6_267 = arith.constant 6 : index
    %c0_268 = arith.constant 0 : index
    %c0_269 = arith.constant 0 : index
    %404 = vector.load %arg7[%c6_267, %c0_268, %c0_269] : memref<16x16x128xbf16, #tpu.memory_space<vmem>>, vector<1x16x128xbf16>
    %405 = vector.shape_cast %404 : vector<1x16x128xbf16> to vector<16x128xbf16>
    %cst_270 = arith.constant dense<0.000000e+00> : vector<2x128xf32>
    %406 = tpu.matmul %403, %405, %cst_270 {dimension_numbers = #tpu.dot_dimension_numbers<[1], [0], [0], [1], [0, 0, 1, 1], [], []>} : vector<2x16xbf16>, vector<16x128xbf16>, vector<2x128xf32> -> vector<2x128xf32>
    %407 = arith.addf %391, %406 : vector<2x128xf32>
    %c0_271 = arith.constant 0 : index
    %c2_272 = arith.constant 2 : index
    %c6_273 = arith.constant 6 : index
    %c0_274 = arith.constant 0 : index
    %408 = vector.load %arg10[%c0_271, %c2_272, %c6_273, %c0_274] : memref<2x8x8x16xf32, #tpu.memory_space<vmem>>, vector<2x1x1x16xf32>
    %409 = vector.shape_cast %408 : vector<2x1x1x16xf32> to vector<2x16xf32>
    %c0_275 = arith.constant 0 : index
    %c2_276 = arith.constant 2 : index
    %c7_277 = arith.constant 7 : index
    %c0_278 = arith.constant 0 : index
    %410 = vector.load %arg10[%c0_275, %c2_276, %c7_277, %c0_278] : memref<2x8x8x16xf32, #tpu.memory_space<vmem>>, vector<2x1x1x16xf32>
    %411 = vector.shape_cast %410 : vector<2x1x1x16xf32> to vector<2x16xf32>
    %412 = arith.maximumf %409, %411 : vector<2x16xf32>
    %c0_279 = arith.constant 0 : index
    %c3_280 = arith.constant 3 : index
    %c6_281 = arith.constant 6 : index
    %c0_282 = arith.constant 0 : index
    %413 = vector.load %arg10[%c0_279, %c3_280, %c6_281, %c0_282] : memref<2x8x8x16xf32, #tpu.memory_space<vmem>>, vector<2x1x1x16xf32>
    %414 = vector.shape_cast %413 : vector<2x1x1x16xf32> to vector<2x16xf32>
    %c0_283 = arith.constant 0 : index
    %c3_284 = arith.constant 3 : index
    %c7_285 = arith.constant 7 : index
    %c0_286 = arith.constant 0 : index
    %415 = vector.load %arg10[%c0_283, %c3_284, %c7_285, %c0_286] : memref<2x8x8x16xf32, #tpu.memory_space<vmem>>, vector<2x1x1x16xf32>
    %416 = vector.shape_cast %415 : vector<2x1x1x16xf32> to vector<2x16xf32>
    %417 = arith.maximumf %414, %416 : vector<2x16xf32>
    %418 = arith.maximumf %412, %417 : vector<2x16xf32>
    %419 = arith.truncf %418 : vector<2x16xf32> to vector<2x16xbf16>
    %c7_287 = arith.constant 7 : index
    %c0_288 = arith.constant 0 : index
    %c0_289 = arith.constant 0 : index
    %420 = vector.load %arg7[%c7_287, %c0_288, %c0_289] : memref<16x16x128xbf16, #tpu.memory_space<vmem>>, vector<1x16x128xbf16>
    %421 = vector.shape_cast %420 : vector<1x16x128xbf16> to vector<16x128xbf16>
    %cst_290 = arith.constant dense<0.000000e+00> : vector<2x128xf32>
    %422 = tpu.matmul %419, %421, %cst_290 {dimension_numbers = #tpu.dot_dimension_numbers<[1], [0], [0], [1], [0, 0, 1, 1], [], []>} : vector<2x16xbf16>, vector<16x128xbf16>, vector<2x128xf32> -> vector<2x128xf32>
    %423 = arith.addf %407, %422 : vector<2x128xf32>
    %c0_291 = arith.constant 0 : index
    %c4_292 = arith.constant 4 : index
    %c0_293 = arith.constant 0 : index
    %c0_294 = arith.constant 0 : index
    %424 = vector.load %arg10[%c0_291, %c4_292, %c0_293, %c0_294] : memref<2x8x8x16xf32, #tpu.memory_space<vmem>>, vector<2x1x1x16xf32>
    %425 = vector.shape_cast %424 : vector<2x1x1x16xf32> to vector<2x16xf32>
    %c0_295 = arith.constant 0 : index
    %c4_296 = arith.constant 4 : index
    %c1_297 = arith.constant 1 : index
    %c0_298 = arith.constant 0 : index
    %426 = vector.load %arg10[%c0_295, %c4_296, %c1_297, %c0_298] : memref<2x8x8x16xf32, #tpu.memory_space<vmem>>, vector<2x1x1x16xf32>
    %427 = vector.shape_cast %426 : vector<2x1x1x16xf32> to vector<2x16xf32>
    %428 = arith.maximumf %425, %427 : vector<2x16xf32>
    %c0_299 = arith.constant 0 : index
    %c5_300 = arith.constant 5 : index
    %c0_301 = arith.constant 0 : index
    %c0_302 = arith.constant 0 : index
    %429 = vector.load %arg10[%c0_299, %c5_300, %c0_301, %c0_302] : memref<2x8x8x16xf32, #tpu.memory_space<vmem>>, vector<2x1x1x16xf32>
    %430 = vector.shape_cast %429 : vector<2x1x1x16xf32> to vector<2x16xf32>
    %c0_303 = arith.constant 0 : index
    %c5_304 = arith.constant 5 : index
    %c1_305 = arith.constant 1 : index
    %c0_306 = arith.constant 0 : index
    %431 = vector.load %arg10[%c0_303, %c5_304, %c1_305, %c0_306] : memref<2x8x8x16xf32, #tpu.memory_space<vmem>>, vector<2x1x1x16xf32>
    %432 = vector.shape_cast %431 : vector<2x1x1x16xf32> to vector<2x16xf32>
    %433 = arith.maximumf %430, %432 : vector<2x16xf32>
    %434 = arith.maximumf %428, %433 : vector<2x16xf32>
    %435 = arith.truncf %434 : vector<2x16xf32> to vector<2x16xbf16>
    %c8_307 = arith.constant 8 : index
    %c0_308 = arith.constant 0 : index
    %c0_309 = arith.constant 0 : index
    %436 = vector.load %arg7[%c8_307, %c0_308, %c0_309] : memref<16x16x128xbf16, #tpu.memory_space<vmem>>, vector<1x16x128xbf16>
    %437 = vector.shape_cast %436 : vector<1x16x128xbf16> to vector<16x128xbf16>
    %cst_310 = arith.constant dense<0.000000e+00> : vector<2x128xf32>
    %438 = tpu.matmul %435, %437, %cst_310 {dimension_numbers = #tpu.dot_dimension_numbers<[1], [0], [0], [1], [0, 0, 1, 1], [], []>} : vector<2x16xbf16>, vector<16x128xbf16>, vector<2x128xf32> -> vector<2x128xf32>
    %439 = arith.addf %423, %438 : vector<2x128xf32>
    %c0_311 = arith.constant 0 : index
    %c4_312 = arith.constant 4 : index
    %c2_313 = arith.constant 2 : index
    %c0_314 = arith.constant 0 : index
    %440 = vector.load %arg10[%c0_311, %c4_312, %c2_313, %c0_314] : memref<2x8x8x16xf32, #tpu.memory_space<vmem>>, vector<2x1x1x16xf32>
    %441 = vector.shape_cast %440 : vector<2x1x1x16xf32> to vector<2x16xf32>
    %c0_315 = arith.constant 0 : index
    %c4_316 = arith.constant 4 : index
    %c3_317 = arith.constant 3 : index
    %c0_318 = arith.constant 0 : index
    %442 = vector.load %arg10[%c0_315, %c4_316, %c3_317, %c0_318] : memref<2x8x8x16xf32, #tpu.memory_space<vmem>>, vector<2x1x1x16xf32>
    %443 = vector.shape_cast %442 : vector<2x1x1x16xf32> to vector<2x16xf32>
    %444 = arith.maximumf %441, %443 : vector<2x16xf32>
    %c0_319 = arith.constant 0 : index
    %c5_320 = arith.constant 5 : index
    %c2_321 = arith.constant 2 : index
    %c0_322 = arith.constant 0 : index
    %445 = vector.load %arg10[%c0_319, %c5_320, %c2_321, %c0_322] : memref<2x8x8x16xf32, #tpu.memory_space<vmem>>, vector<2x1x1x16xf32>
    %446 = vector.shape_cast %445 : vector<2x1x1x16xf32> to vector<2x16xf32>
    %c0_323 = arith.constant 0 : index
    %c5_324 = arith.constant 5 : index
    %c3_325 = arith.constant 3 : index
    %c0_326 = arith.constant 0 : index
    %447 = vector.load %arg10[%c0_323, %c5_324, %c3_325, %c0_326] : memref<2x8x8x16xf32, #tpu.memory_space<vmem>>, vector<2x1x1x16xf32>
    %448 = vector.shape_cast %447 : vector<2x1x1x16xf32> to vector<2x16xf32>
    %449 = arith.maximumf %446, %448 : vector<2x16xf32>
    %450 = arith.maximumf %444, %449 : vector<2x16xf32>
    %451 = arith.truncf %450 : vector<2x16xf32> to vector<2x16xbf16>
    %c9 = arith.constant 9 : index
    %c0_327 = arith.constant 0 : index
    %c0_328 = arith.constant 0 : index
    %452 = vector.load %arg7[%c9, %c0_327, %c0_328] : memref<16x16x128xbf16, #tpu.memory_space<vmem>>, vector<1x16x128xbf16>
    %453 = vector.shape_cast %452 : vector<1x16x128xbf16> to vector<16x128xbf16>
    %cst_329 = arith.constant dense<0.000000e+00> : vector<2x128xf32>
    %454 = tpu.matmul %451, %453, %cst_329 {dimension_numbers = #tpu.dot_dimension_numbers<[1], [0], [0], [1], [0, 0, 1, 1], [], []>} : vector<2x16xbf16>, vector<16x128xbf16>, vector<2x128xf32> -> vector<2x128xf32>
    %455 = arith.addf %439, %454 : vector<2x128xf32>
    %c0_330 = arith.constant 0 : index
    %c4_331 = arith.constant 4 : index
    %c4_332 = arith.constant 4 : index
    %c0_333 = arith.constant 0 : index
    %456 = vector.load %arg10[%c0_330, %c4_331, %c4_332, %c0_333] : memref<2x8x8x16xf32, #tpu.memory_space<vmem>>, vector<2x1x1x16xf32>
    %457 = vector.shape_cast %456 : vector<2x1x1x16xf32> to vector<2x16xf32>
    %c0_334 = arith.constant 0 : index
    %c4_335 = arith.constant 4 : index
    %c5_336 = arith.constant 5 : index
    %c0_337 = arith.constant 0 : index
    %458 = vector.load %arg10[%c0_334, %c4_335, %c5_336, %c0_337] : memref<2x8x8x16xf32, #tpu.memory_space<vmem>>, vector<2x1x1x16xf32>
    %459 = vector.shape_cast %458 : vector<2x1x1x16xf32> to vector<2x16xf32>
    %460 = arith.maximumf %457, %459 : vector<2x16xf32>
    %c0_338 = arith.constant 0 : index
    %c5_339 = arith.constant 5 : index
    %c4_340 = arith.constant 4 : index
    %c0_341 = arith.constant 0 : index
    %461 = vector.load %arg10[%c0_338, %c5_339, %c4_340, %c0_341] : memref<2x8x8x16xf32, #tpu.memory_space<vmem>>, vector<2x1x1x16xf32>
    %462 = vector.shape_cast %461 : vector<2x1x1x16xf32> to vector<2x16xf32>
    %c0_342 = arith.constant 0 : index
    %c5_343 = arith.constant 5 : index
    %c5_344 = arith.constant 5 : index
    %c0_345 = arith.constant 0 : index
    %463 = vector.load %arg10[%c0_342, %c5_343, %c5_344, %c0_345] : memref<2x8x8x16xf32, #tpu.memory_space<vmem>>, vector<2x1x1x16xf32>
    %464 = vector.shape_cast %463 : vector<2x1x1x16xf32> to vector<2x16xf32>
    %465 = arith.maximumf %462, %464 : vector<2x16xf32>
    %466 = arith.maximumf %460, %465 : vector<2x16xf32>
    %467 = arith.truncf %466 : vector<2x16xf32> to vector<2x16xbf16>
    %c10 = arith.constant 10 : index
    %c0_346 = arith.constant 0 : index
    %c0_347 = arith.constant 0 : index
    %468 = vector.load %arg7[%c10, %c0_346, %c0_347] : memref<16x16x128xbf16, #tpu.memory_space<vmem>>, vector<1x16x128xbf16>
    %469 = vector.shape_cast %468 : vector<1x16x128xbf16> to vector<16x128xbf16>
    %cst_348 = arith.constant dense<0.000000e+00> : vector<2x128xf32>
    %470 = tpu.matmul %467, %469, %cst_348 {dimension_numbers = #tpu.dot_dimension_numbers<[1], [0], [0], [1], [0, 0, 1, 1], [], []>} : vector<2x16xbf16>, vector<16x128xbf16>, vector<2x128xf32> -> vector<2x128xf32>
    %471 = arith.addf %455, %470 : vector<2x128xf32>
    %c0_349 = arith.constant 0 : index
    %c4_350 = arith.constant 4 : index
    %c6_351 = arith.constant 6 : index
    %c0_352 = arith.constant 0 : index
    %472 = vector.load %arg10[%c0_349, %c4_350, %c6_351, %c0_352] : memref<2x8x8x16xf32, #tpu.memory_space<vmem>>, vector<2x1x1x16xf32>
    %473 = vector.shape_cast %472 : vector<2x1x1x16xf32> to vector<2x16xf32>
    %c0_353 = arith.constant 0 : index
    %c4_354 = arith.constant 4 : index
    %c7_355 = arith.constant 7 : index
    %c0_356 = arith.constant 0 : index
    %474 = vector.load %arg10[%c0_353, %c4_354, %c7_355, %c0_356] : memref<2x8x8x16xf32, #tpu.memory_space<vmem>>, vector<2x1x1x16xf32>
    %475 = vector.shape_cast %474 : vector<2x1x1x16xf32> to vector<2x16xf32>
    %476 = arith.maximumf %473, %475 : vector<2x16xf32>
    %c0_357 = arith.constant 0 : index
    %c5_358 = arith.constant 5 : index
    %c6_359 = arith.constant 6 : index
    %c0_360 = arith.constant 0 : index
    %477 = vector.load %arg10[%c0_357, %c5_358, %c6_359, %c0_360] : memref<2x8x8x16xf32, #tpu.memory_space<vmem>>, vector<2x1x1x16xf32>
    %478 = vector.shape_cast %477 : vector<2x1x1x16xf32> to vector<2x16xf32>
    %c0_361 = arith.constant 0 : index
    %c5_362 = arith.constant 5 : index
    %c7_363 = arith.constant 7 : index
    %c0_364 = arith.constant 0 : index
    %479 = vector.load %arg10[%c0_361, %c5_362, %c7_363, %c0_364] : memref<2x8x8x16xf32, #tpu.memory_space<vmem>>, vector<2x1x1x16xf32>
    %480 = vector.shape_cast %479 : vector<2x1x1x16xf32> to vector<2x16xf32>
    %481 = arith.maximumf %478, %480 : vector<2x16xf32>
    %482 = arith.maximumf %476, %481 : vector<2x16xf32>
    %483 = arith.truncf %482 : vector<2x16xf32> to vector<2x16xbf16>
    %c11 = arith.constant 11 : index
    %c0_365 = arith.constant 0 : index
    %c0_366 = arith.constant 0 : index
    %484 = vector.load %arg7[%c11, %c0_365, %c0_366] : memref<16x16x128xbf16, #tpu.memory_space<vmem>>, vector<1x16x128xbf16>
    %485 = vector.shape_cast %484 : vector<1x16x128xbf16> to vector<16x128xbf16>
    %cst_367 = arith.constant dense<0.000000e+00> : vector<2x128xf32>
    %486 = tpu.matmul %483, %485, %cst_367 {dimension_numbers = #tpu.dot_dimension_numbers<[1], [0], [0], [1], [0, 0, 1, 1], [], []>} : vector<2x16xbf16>, vector<16x128xbf16>, vector<2x128xf32> -> vector<2x128xf32>
    %487 = arith.addf %471, %486 : vector<2x128xf32>
    %c0_368 = arith.constant 0 : index
    %c6_369 = arith.constant 6 : index
    %c0_370 = arith.constant 0 : index
    %c0_371 = arith.constant 0 : index
    %488 = vector.load %arg10[%c0_368, %c6_369, %c0_370, %c0_371] : memref<2x8x8x16xf32, #tpu.memory_space<vmem>>, vector<2x1x1x16xf32>
    %489 = vector.shape_cast %488 : vector<2x1x1x16xf32> to vector<2x16xf32>
    %c0_372 = arith.constant 0 : index
    %c6_373 = arith.constant 6 : index
    %c1_374 = arith.constant 1 : index
    %c0_375 = arith.constant 0 : index
    %490 = vector.load %arg10[%c0_372, %c6_373, %c1_374, %c0_375] : memref<2x8x8x16xf32, #tpu.memory_space<vmem>>, vector<2x1x1x16xf32>
    %491 = vector.shape_cast %490 : vector<2x1x1x16xf32> to vector<2x16xf32>
    %492 = arith.maximumf %489, %491 : vector<2x16xf32>
    %c0_376 = arith.constant 0 : index
    %c7_377 = arith.constant 7 : index
    %c0_378 = arith.constant 0 : index
    %c0_379 = arith.constant 0 : index
    %493 = vector.load %arg10[%c0_376, %c7_377, %c0_378, %c0_379] : memref<2x8x8x16xf32, #tpu.memory_space<vmem>>, vector<2x1x1x16xf32>
    %494 = vector.shape_cast %493 : vector<2x1x1x16xf32> to vector<2x16xf32>
    %c0_380 = arith.constant 0 : index
    %c7_381 = arith.constant 7 : index
    %c1_382 = arith.constant 1 : index
    %c0_383 = arith.constant 0 : index
    %495 = vector.load %arg10[%c0_380, %c7_381, %c1_382, %c0_383] : memref<2x8x8x16xf32, #tpu.memory_space<vmem>>, vector<2x1x1x16xf32>
    %496 = vector.shape_cast %495 : vector<2x1x1x16xf32> to vector<2x16xf32>
    %497 = arith.maximumf %494, %496 : vector<2x16xf32>
    %498 = arith.maximumf %492, %497 : vector<2x16xf32>
    %499 = arith.truncf %498 : vector<2x16xf32> to vector<2x16xbf16>
    %c12 = arith.constant 12 : index
    %c0_384 = arith.constant 0 : index
    %c0_385 = arith.constant 0 : index
    %500 = vector.load %arg7[%c12, %c0_384, %c0_385] : memref<16x16x128xbf16, #tpu.memory_space<vmem>>, vector<1x16x128xbf16>
    %501 = vector.shape_cast %500 : vector<1x16x128xbf16> to vector<16x128xbf16>
    %cst_386 = arith.constant dense<0.000000e+00> : vector<2x128xf32>
    %502 = tpu.matmul %499, %501, %cst_386 {dimension_numbers = #tpu.dot_dimension_numbers<[1], [0], [0], [1], [0, 0, 1, 1], [], []>} : vector<2x16xbf16>, vector<16x128xbf16>, vector<2x128xf32> -> vector<2x128xf32>
    %503 = arith.addf %487, %502 : vector<2x128xf32>
    %c0_387 = arith.constant 0 : index
    %c6_388 = arith.constant 6 : index
    %c2_389 = arith.constant 2 : index
    %c0_390 = arith.constant 0 : index
    %504 = vector.load %arg10[%c0_387, %c6_388, %c2_389, %c0_390] : memref<2x8x8x16xf32, #tpu.memory_space<vmem>>, vector<2x1x1x16xf32>
    %505 = vector.shape_cast %504 : vector<2x1x1x16xf32> to vector<2x16xf32>
    %c0_391 = arith.constant 0 : index
    %c6_392 = arith.constant 6 : index
    %c3_393 = arith.constant 3 : index
    %c0_394 = arith.constant 0 : index
    %506 = vector.load %arg10[%c0_391, %c6_392, %c3_393, %c0_394] : memref<2x8x8x16xf32, #tpu.memory_space<vmem>>, vector<2x1x1x16xf32>
    %507 = vector.shape_cast %506 : vector<2x1x1x16xf32> to vector<2x16xf32>
    %508 = arith.maximumf %505, %507 : vector<2x16xf32>
    %c0_395 = arith.constant 0 : index
    %c7_396 = arith.constant 7 : index
    %c2_397 = arith.constant 2 : index
    %c0_398 = arith.constant 0 : index
    %509 = vector.load %arg10[%c0_395, %c7_396, %c2_397, %c0_398] : memref<2x8x8x16xf32, #tpu.memory_space<vmem>>, vector<2x1x1x16xf32>
    %510 = vector.shape_cast %509 : vector<2x1x1x16xf32> to vector<2x16xf32>
    %c0_399 = arith.constant 0 : index
    %c7_400 = arith.constant 7 : index
    %c3_401 = arith.constant 3 : index
    %c0_402 = arith.constant 0 : index
    %511 = vector.load %arg10[%c0_399, %c7_400, %c3_401, %c0_402] : memref<2x8x8x16xf32, #tpu.memory_space<vmem>>, vector<2x1x1x16xf32>
    %512 = vector.shape_cast %511 : vector<2x1x1x16xf32> to vector<2x16xf32>
    %513 = arith.maximumf %510, %512 : vector<2x16xf32>
    %514 = arith.maximumf %508, %513 : vector<2x16xf32>
    %515 = arith.truncf %514 : vector<2x16xf32> to vector<2x16xbf16>
    %c13 = arith.constant 13 : index
    %c0_403 = arith.constant 0 : index
    %c0_404 = arith.constant 0 : index
    %516 = vector.load %arg7[%c13, %c0_403, %c0_404] : memref<16x16x128xbf16, #tpu.memory_space<vmem>>, vector<1x16x128xbf16>
    %517 = vector.shape_cast %516 : vector<1x16x128xbf16> to vector<16x128xbf16>
    %cst_405 = arith.constant dense<0.000000e+00> : vector<2x128xf32>
    %518 = tpu.matmul %515, %517, %cst_405 {dimension_numbers = #tpu.dot_dimension_numbers<[1], [0], [0], [1], [0, 0, 1, 1], [], []>} : vector<2x16xbf16>, vector<16x128xbf16>, vector<2x128xf32> -> vector<2x128xf32>
    %519 = arith.addf %503, %518 : vector<2x128xf32>
    %c0_406 = arith.constant 0 : index
    %c6_407 = arith.constant 6 : index
    %c4_408 = arith.constant 4 : index
    %c0_409 = arith.constant 0 : index
    %520 = vector.load %arg10[%c0_406, %c6_407, %c4_408, %c0_409] : memref<2x8x8x16xf32, #tpu.memory_space<vmem>>, vector<2x1x1x16xf32>
    %521 = vector.shape_cast %520 : vector<2x1x1x16xf32> to vector<2x16xf32>
    %c0_410 = arith.constant 0 : index
    %c6_411 = arith.constant 6 : index
    %c5_412 = arith.constant 5 : index
    %c0_413 = arith.constant 0 : index
    %522 = vector.load %arg10[%c0_410, %c6_411, %c5_412, %c0_413] : memref<2x8x8x16xf32, #tpu.memory_space<vmem>>, vector<2x1x1x16xf32>
    %523 = vector.shape_cast %522 : vector<2x1x1x16xf32> to vector<2x16xf32>
    %524 = arith.maximumf %521, %523 : vector<2x16xf32>
    %c0_414 = arith.constant 0 : index
    %c7_415 = arith.constant 7 : index
    %c4_416 = arith.constant 4 : index
    %c0_417 = arith.constant 0 : index
    %525 = vector.load %arg10[%c0_414, %c7_415, %c4_416, %c0_417] : memref<2x8x8x16xf32, #tpu.memory_space<vmem>>, vector<2x1x1x16xf32>
    %526 = vector.shape_cast %525 : vector<2x1x1x16xf32> to vector<2x16xf32>
    %c0_418 = arith.constant 0 : index
    %c7_419 = arith.constant 7 : index
    %c5_420 = arith.constant 5 : index
    %c0_421 = arith.constant 0 : index
    %527 = vector.load %arg10[%c0_418, %c7_419, %c5_420, %c0_421] : memref<2x8x8x16xf32, #tpu.memory_space<vmem>>, vector<2x1x1x16xf32>
    %528 = vector.shape_cast %527 : vector<2x1x1x16xf32> to vector<2x16xf32>
    %529 = arith.maximumf %526, %528 : vector<2x16xf32>
    %530 = arith.maximumf %524, %529 : vector<2x16xf32>
    %531 = arith.truncf %530 : vector<2x16xf32> to vector<2x16xbf16>
    %c14 = arith.constant 14 : index
    %c0_422 = arith.constant 0 : index
    %c0_423 = arith.constant 0 : index
    %532 = vector.load %arg7[%c14, %c0_422, %c0_423] : memref<16x16x128xbf16, #tpu.memory_space<vmem>>, vector<1x16x128xbf16>
    %533 = vector.shape_cast %532 : vector<1x16x128xbf16> to vector<16x128xbf16>
    %cst_424 = arith.constant dense<0.000000e+00> : vector<2x128xf32>
    %534 = tpu.matmul %531, %533, %cst_424 {dimension_numbers = #tpu.dot_dimension_numbers<[1], [0], [0], [1], [0, 0, 1, 1], [], []>} : vector<2x16xbf16>, vector<16x128xbf16>, vector<2x128xf32> -> vector<2x128xf32>
    %535 = arith.addf %519, %534 : vector<2x128xf32>
    %c0_425 = arith.constant 0 : index
    %c6_426 = arith.constant 6 : index
    %c6_427 = arith.constant 6 : index
    %c0_428 = arith.constant 0 : index
    %536 = vector.load %arg10[%c0_425, %c6_426, %c6_427, %c0_428] : memref<2x8x8x16xf32, #tpu.memory_space<vmem>>, vector<2x1x1x16xf32>
    %537 = vector.shape_cast %536 : vector<2x1x1x16xf32> to vector<2x16xf32>
    %c0_429 = arith.constant 0 : index
    %c6_430 = arith.constant 6 : index
    %c7_431 = arith.constant 7 : index
    %c0_432 = arith.constant 0 : index
    %538 = vector.load %arg10[%c0_429, %c6_430, %c7_431, %c0_432] : memref<2x8x8x16xf32, #tpu.memory_space<vmem>>, vector<2x1x1x16xf32>
    %539 = vector.shape_cast %538 : vector<2x1x1x16xf32> to vector<2x16xf32>
    %540 = arith.maximumf %537, %539 : vector<2x16xf32>
    %c0_433 = arith.constant 0 : index
    %c7_434 = arith.constant 7 : index
    %c6_435 = arith.constant 6 : index
    %c0_436 = arith.constant 0 : index
    %541 = vector.load %arg10[%c0_433, %c7_434, %c6_435, %c0_436] : memref<2x8x8x16xf32, #tpu.memory_space<vmem>>, vector<2x1x1x16xf32>
    %542 = vector.shape_cast %541 : vector<2x1x1x16xf32> to vector<2x16xf32>
    %c0_437 = arith.constant 0 : index
    %c7_438 = arith.constant 7 : index
    %c7_439 = arith.constant 7 : index
    %c0_440 = arith.constant 0 : index
    %543 = vector.load %arg10[%c0_437, %c7_438, %c7_439, %c0_440] : memref<2x8x8x16xf32, #tpu.memory_space<vmem>>, vector<2x1x1x16xf32>
    %544 = vector.shape_cast %543 : vector<2x1x1x16xf32> to vector<2x16xf32>
    %545 = arith.maximumf %542, %544 : vector<2x16xf32>
    %546 = arith.maximumf %540, %545 : vector<2x16xf32>
    %547 = arith.truncf %546 : vector<2x16xf32> to vector<2x16xbf16>
    %c15 = arith.constant 15 : index
    %c0_441 = arith.constant 0 : index
    %c0_442 = arith.constant 0 : index
    %548 = vector.load %arg7[%c15, %c0_441, %c0_442] : memref<16x16x128xbf16, #tpu.memory_space<vmem>>, vector<1x16x128xbf16>
    %549 = vector.shape_cast %548 : vector<1x16x128xbf16> to vector<16x128xbf16>
    %cst_443 = arith.constant dense<0.000000e+00> : vector<2x128xf32>
    %550 = tpu.matmul %547, %549, %cst_443 {dimension_numbers = #tpu.dot_dimension_numbers<[1], [0], [0], [1], [0, 0, 1, 1], [], []>} : vector<2x16xbf16>, vector<16x128xbf16>, vector<2x128xf32> -> vector<2x128xf32>
    %551 = arith.addf %535, %550 : vector<2x128xf32>
    %c0_444 = arith.constant 0 : index
    %c0_445 = arith.constant 0 : index
    %552 = vector.load %arg8[%c0_444, %c0_445] : memref<1x128xf32, #tpu.memory_space<vmem>>, vector<1x128xf32>
    %553 = vector.broadcast %552 : vector<1x128xf32> to vector<2x128xf32>
    %554 = arith.addf %551, %553 : vector<2x128xf32>
    %cst_446 = arith.constant dense<0xFF800000> : vector<2xf32>
    %555 = vector.multi_reduction <maximumf>, %554, %cst_446 [1] : vector<2x128xf32> to vector<2xf32>
    %556 = vector.shape_cast %555 : vector<2xf32> to vector<2x1xf32>
    %557 = vector.broadcast %556 : vector<2x1xf32> to vector<2x128xf32>
    %558 = arith.subf %554, %557 : vector<2x128xf32>
    %559 = math.exp %558 : vector<2x128xf32>
    %cst_447 = arith.constant dense<0.000000e+00> : vector<2xf32>
    %560 = vector.multi_reduction <add>, %559, %cst_447 [1] : vector<2x128xf32> to vector<2xf32>
    %561 = vector.shape_cast %560 : vector<2xf32> to vector<2x1xf32>
    %562 = math.log %561 : vector<2x1xf32>
    %563 = vector.broadcast %562 : vector<2x1xf32> to vector<2x128xf32>
    %564 = arith.subf %558, %563 : vector<2x128xf32>
    %c0_448 = arith.constant 0 : index
    %c0_449 = arith.constant 0 : index
    %565 = vector.load %arg9[%c0_448, %c0_449] : memref<2x128xf32, #tpu.memory_space<vmem>>, vector<2x128xf32>
    tpu.vector_store %arg9[%c0_448, %c0_449], %564 {strides = array<i32>} : memref<2x128xf32, #tpu.memory_space<vmem>>, vector<2x128xf32>,
    return
  }
}

</mosaic_0001>

<llo_original>
// kernel: conv_layer_multi_forward.1
$region0: #{conv_layer_multi_forward.1}
  #allocation0 [shape = 'u32[]', space=smem, size = 0x4, offset = 0x4, fixed_abs, tag = 'smem constant byte address 0x4 - core index']
  #allocation1 [shape = 'u32[144,128]{1,0:T(1,128)}', space=vmem, size = 0x12000, scoped, tag = 'internal scratch']
  #allocation2 [shape = 'f32[2,8,8,16]{3,2,1,0:T(8,128)}', space=vmem, size = 0x10000, scoped, tag = 'scratch operand']
  %s0 = inlined_call_operand.vmem [shape: bf16[512,36], index: 0, kind: input, shape index: {}]
  %s1 = inlined_call_operand.vmem [shape: bf16[36,8], index: 1, kind: input, shape index: {}]
  %s2 = inlined_call_operand.vmem [shape: f32[1,8], index: 2, kind: input, shape index: {}]
  %s3 = inlined_call_operand.vmem [shape: f32[1,8], index: 3, kind: input, shape index: {}]
  %s4 = inlined_call_operand.vmem [shape: bf16[9,8,16], index: 4, kind: input, shape index: {}]
  %s5 = inlined_call_operand.vmem [shape: f32[1,16], index: 5, kind: input, shape index: {}]
  %s6 = inlined_call_operand.vmem [shape: f32[1,16], index: 6, kind: input, shape index: {}]
  %s7 = inlined_call_operand.vmem [shape: bf16[16,16,128], index: 7, kind: input, shape index: {}]
  %s8 = inlined_call_operand.vmem [shape: f32[1,128], index: 8, kind: input, shape index: {}]
  %s9 = inlined_call_operand.hbm [shape: f32[2,128], index: 9, kind: output, shape index: {}]
  %s10 = sld [smem:[#allocation0]]
  $region46: #{conv_layer_multi_forward.1} parent=0
    _
  %s12 = ssub.s32 1, %s10
  %s13 = scalar_select 0, %s12, %s10
  $region1: #{conv_layer_multi_forward.1} parent=0
    #allocation3 [shape = 'u8[1024]{0}', space=vmem, size = 0x400, scoped, tag = 'output window, operand 0, single buffered']
    #allocation4 [shape = 's32[1]{0}', space=sflag, size = 0x4, scoped, tag = 'scoped memory for conv_layer_multi_forward.1']
    %14 = vsyncpa [#allocation4], 0
    // Predicated region
    $region2: #{conv_layer_multi_forward.1} parent=1 // pred_check
      _
    $region3: #{conv_layer_multi_forward.1} parent=1 // pred_check_branch
      %16 = sbr.rel (0) target = $region5
    $region4: #{conv_layer_multi_forward.1} parent=1 // pred_region
      _
    $region5: #{conv_layer_multi_forward.1} parent=1 // pred_fallthru
      _
    // Predicated region
    $region6: #{conv_layer_multi_forward.1} parent=1 // pred_check
      _
    $region7: #{conv_layer_multi_forward.1} parent=1 // pred_check_branch
      %18 = sbr.rel (0) target = $region9
    $region8: #{conv_layer_multi_forward.1} parent=1 // pred_region
      _
    $region9: #{conv_layer_multi_forward.1} parent=1 // pred_fallthru
      _
    // Predicated region
    $region10: #{conv_layer_multi_forward.1} parent=1 // pred_check
      _
    $region11: #{conv_layer_multi_forward.1} parent=1 // pred_check_branch
      %20 = sbr.rel (0) target = $region13
    $region12: #{conv_layer_multi_forward.1} parent=1 // pred_region
      _
    $region13: #{conv_layer_multi_forward.1} parent=1 // pred_fallthru
      _
    // Predicated region
    $region14: #{conv_layer_multi_forward.1} parent=1 // pred_check
      _
    $region15: #{conv_layer_multi_forward.1} parent=1 // pred_check_branch
      %22 = sbr.rel (0) target = $region17
    $region16: #{conv_layer_multi_forward.1} parent=1 // pred_region
      _
    $region17: #{conv_layer_multi_forward.1} parent=1 // pred_fallthru
      _
    // Predicated region
    $region18: #{conv_layer_multi_forward.1} parent=1 // pred_check
      _
    $region19: #{conv_layer_multi_forward.1} parent=1 // pred_check_branch
      %24 = sbr.rel (0) target = $region21
    $region20: #{conv_layer_multi_forward.1} parent=1 // pred_region
      _
    $region21: #{conv_layer_multi_forward.1} parent=1 // pred_fallthru
      _
    // Predicated region
    $region22: #{conv_layer_multi_forward.1} parent=1 // pred_check
      _
    $region23: #{conv_layer_multi_forward.1} parent=1 // pred_check_branch
      %26 = sbr.rel (0) target = $region25
    $region24: #{conv_layer_multi_forward.1} parent=1 // pred_region
      _
    $region25: #{conv_layer_multi_forward.1} parent=1 // pred_fallthru
      _
    // Predicated region
    $region26: #{conv_layer_multi_forward.1} parent=1 // pred_check
      _
    $region27: #{conv_layer_multi_forward.1} parent=1 // pred_check_branch
      %28 = sbr.rel (0) target = $region29
    $region28: #{conv_layer_multi_forward.1} parent=1 // pred_region
      _
    $region29: #{conv_layer_multi_forward.1} parent=1 // pred_fallthru
      _
    // Predicated region
    $region30: #{conv_layer_multi_forward.1} parent=1 // pred_check
      _
    $region31: #{conv_layer_multi_forward.1} parent=1 // pred_check_branch
      %30 = sbr.rel (0) target = $region33
    $region32: #{conv_layer_multi_forward.1} parent=1 // pred_region
      _
    $region33: #{conv_layer_multi_forward.1} parent=1 // pred_fallthru
      _
    // Predicated region
    $region34: #{conv_layer_multi_forward.1} parent=1 // pred_check
      _
    $region35: #{conv_layer_multi_forward.1} parent=1 // pred_check_branch
      %32 = sbr.rel (0) target = $region37
    $region36: #{conv_layer_multi_forward.1} parent=1 // pred_region
      _
    $region37: #{conv_layer_multi_forward.1} parent=1 // pred_fallthru
      _
    %v34 = vld [vmem:[%s0] sm:$0xf]
    %v35 = vld [vmem:[%s0 + $0x4] sm:$0xf]
    %v36 = vld [vmem:[%s0 + $0x8] sm:$0xf]
    %v37 = vld [vmem:[%s0 + $0xc] sm:$0xf]
    %v38 = vld [vmem:[%s0 + $0x10] sm:$0xf]
    %v39 = vld [vmem:[%s0 + $0x14] sm:$0xf]
    %v40 = vld [vmem:[%s0 + $0x18] sm:$0xf]
    %v41 = vld [vmem:[%s0 + $0x1c] sm:$0xf]
    %v42 = vld [vmem:[%s0 + $0x20] sm:$0xf]
    %v43 = vld [vmem:[%s0 + $0x24] sm:$0xf]
    %v44 = vld [vmem:[%s0 + $0x28] sm:$0xf]
    %v45 = vld [vmem:[%s0 + $0x2c] sm:$0xf]
    %v46 = vld [vmem:[%s0 + $0x30] sm:$0xf]
    %v47 = vld [vmem:[%s0 + $0x34] sm:$0xf]
    %v48 = vld [vmem:[%s0 + $0x38] sm:$0xf]
    %v49 = vld [vmem:[%s0 + $0x3c] sm:$0xf]
    %v50 = vld [vmem:[%s0 + $0x40] sm:$0xf]
    %v51 = vld [vmem:[%s0 + $0x44] sm:$0xf]
    %v52 = vld [vmem:[%s0 + $0x48] sm:$0xf]
    %v53 = vld [vmem:[%s0 + $0x4c] sm:$0xf]
    %v54 = vld [vmem:[%s0 + $0x50] sm:$0xf]
    %v55 = vld [vmem:[%s0 + $0x54] sm:$0xf]
    %v56 = vld [vmem:[%s0 + $0x58] sm:$0xf]
    %v57 = vld [vmem:[%s0 + $0x5c] sm:$0xf]
    %v58 = vld [vmem:[%s0 + $0x60] sm:$0xf]
    %v59 = vld [vmem:[%s0 + $0x64] sm:$0xf]
    %v60 = vld [vmem:[%s0 + $0x68] sm:$0xf]
    %v61 = vld [vmem:[%s0 + $0x6c] sm:$0xf]
    %v62 = vld [vmem:[%s0 + $0x70] sm:$0xf]
    %v63 = vld [vmem:[%s0 + $0x74] sm:$0xf]
    %v64 = vld [vmem:[%s0 + $0x78] sm:$0xf]
    %v65 = vld [vmem:[%s0 + $0x7c] sm:$0xf]
    %v66 = vld [vmem:[%s0 + $0x80] sm:$0xf]
    %v67 = vld [vmem:[%s0 + $0x84] sm:$0xf]
    %v68 = vld [vmem:[%s0 + $0x88] sm:$0xf]
    %v69 = vld [vmem:[%s0 + $0x8c] sm:$0xf]
    %v70 = vld [vmem:[%s0 + $0x90] sm:$0xf]
    %v71 = vld [vmem:[%s0 + $0x94] sm:$0xf]
    %v72 = vld [vmem:[%s0 + $0x98] sm:$0xf]
    %v73 = vld [vmem:[%s0 + $0x9c] sm:$0xf]
    %v74 = vld [vmem:[%s0 + $0xa0] sm:$0xf]
    %v75 = vld [vmem:[%s0 + $0xa4] sm:$0xf]
    %v76 = vld [vmem:[%s0 + $0xa8] sm:$0xf]
    %v77 = vld [vmem:[%s0 + $0xac] sm:$0xf]
    %v78 = vld [vmem:[%s0 + $0xb0] sm:$0xf]
    %v79 = vld [vmem:[%s0 + $0xb4] sm:$0xf]
    %v80 = vld [vmem:[%s0 + $0xb8] sm:$0xf]
    %v81 = vld [vmem:[%s0 + $0xbc] sm:$0xf]
    %v82 = vld [vmem:[%s0 + $0xc0] sm:$0xf]
    %v83 = vld [vmem:[%s0 + $0xc4] sm:$0xf]
    %v84 = vld [vmem:[%s0 + $0xc8] sm:$0xf]
    %v85 = vld [vmem:[%s0 + $0xcc] sm:$0xf]
    %v86 = vld [vmem:[%s0 + $0xd0] sm:$0xf]
    %v87 = vld [vmem:[%s0 + $0xd4] sm:$0xf]
    %v88 = vld [vmem:[%s0 + $0xd8] sm:$0xf]
    %v89 = vld [vmem:[%s0 + $0xdc] sm:$0xf]
    %v90 = vld [vmem:[%s0 + $0xe0] sm:$0xf]
    %v91 = vld [vmem:[%s0 + $0xe4] sm:$0xf]
    %v92 = vld [vmem:[%s0 + $0xe8] sm:$0xf]
    %v93 = vld [vmem:[%s0 + $0xec] sm:$0xf]
    %v94 = vld [vmem:[%s0 + $0xf0] sm:$0xf]
    %v95 = vld [vmem:[%s0 + $0xf4] sm:$0xf]
    %v96 = vld [vmem:[%s0 + $0xf8] sm:$0xf]
    %v97 = vld [vmem:[%s0 + $0xfc] sm:$0xf]
    %v98 = vld [vmem:[%s1] sm:$0xf]
    %v99 = vld [vmem:[%s1 + $0x4] sm:$0xf]
    %v100 = vld [vmem:[%s1 + $0x8] sm:$0xf]
    %v101 = vld [vmem:[%s1 + $0xc] sm:$0xf]
    %v102 = vld [vmem:[%s1 + $0x10] sm:$0x3]
    %v167 = vunpack.c.l.b16 %v34
    %v168 = vunpack.c.l.b16 %v35
    %v169 = vunpack.c.l.b16 %v36
    %v170 = vunpack.c.l.b16 %v37
    %v171 = vunpack.c.l.b16 %v38
    %v172 = vunpack.c.l.b16 %v39
    %v173 = vunpack.c.l.b16 %v40
    %v174 = vunpack.c.l.b16 %v41
    %v175 = vunpack.c.l.b16 %v42
    %v176 = vunpack.c.l.b16 %v43
    %v177 = vunpack.c.l.b16 %v44
    %v178 = vunpack.c.l.b16 %v45
    %v179 = vunpack.c.l.b16 %v46
    %v180 = vunpack.c.l.b16 %v47
    %v181 = vunpack.c.l.b16 %v48
    %v182 = vunpack.c.l.b16 %v49
    %v183 = vunpack.c.l.b16 %v50
    %v184 = vunpack.c.l.b16 %v51
    %v185 = vunpack.c.l.b16 %v52
    %v186 = vunpack.c.l.b16 %v53
    %v187 = vunpack.c.l.b16 %v54
    %v188 = vunpack.c.l.b16 %v55
    %v189 = vunpack.c.l.b16 %v56
    %v190 = vunpack.c.l.b16 %v57
    %v191 = vunpack.c.l.b16 %v58
    %v192 = vunpack.c.l.b16 %v59
    %v193 = vunpack.c.l.b16 %v60
    %v194 = vunpack.c.l.b16 %v61
    %v195 = vunpack.c.l.b16 %v62
    %v196 = vunpack.c.l.b16 %v63
    %v197 = vunpack.c.l.b16 %v64
    %v198 = vunpack.c.l.b16 %v65
    %v199 = vunpack.c.l.b16 %v66
    %v200 = vunpack.c.l.b16 %v67
    %v201 = vunpack.c.l.b16 %v68
    %v202 = vunpack.c.l.b16 %v69
    %v203 = vunpack.c.l.b16 %v70
    %v204 = vunpack.c.l.b16 %v71
    %v205 = vunpack.c.l.b16 %v72
    %v206 = vunpack.c.l.b16 %v73
    %v207 = vunpack.c.l.b16 %v74
    %v208 = vunpack.c.l.b16 %v75
    %v209 = vunpack.c.l.b16 %v76
    %v210 = vunpack.c.l.b16 %v77
    %v211 = vunpack.c.l.b16 %v78
    %v212 = vunpack.c.l.b16 %v79
    %v213 = vunpack.c.l.b16 %v80
    %v214 = vunpack.c.l.b16 %v81
    %v215 = vunpack.c.l.b16 %v82
    %v216 = vunpack.c.l.b16 %v83
    %v217 = vunpack.c.l.b16 %v84
    %v218 = vunpack.c.l.b16 %v85
    %v219 = vunpack.c.l.b16 %v86
    %v220 = vunpack.c.l.b16 %v87
    %v221 = vunpack.c.l.b16 %v88
    %v222 = vunpack.c.l.b16 %v89
    %v223 = vunpack.c.l.b16 %v90
    %v224 = vunpack.c.l.b16 %v91
    %v225 = vunpack.c.l.b16 %v92
    %v226 = vunpack.c.l.b16 %v93
    %v227 = vunpack.c.l.b16 %v94
    %v228 = vunpack.c.l.b16 %v95
    %v229 = vunpack.c.l.b16 %v96
    %v230 = vunpack.c.l.b16 %v97
    %v231 = vpack.c.b16 %v168, %v167
    %v232 = vpack.c.b16 %v170, %v169
    %v233 = vpack.c.b16 %v172, %v171
    %v234 = vpack.c.b16 %v174, %v173
    %v235 = vpack.c.b16 %v176, %v175
    %v236 = vpack.c.b16 %v178, %v177
    %v237 = vpack.c.b16 %v180, %v179
    %v238 = vpack.c.b16 %v182, %v181
    %v239 = vpack.c.b16 %v184, %v183
    %v240 = vpack.c.b16 %v186, %v185
    %v241 = vpack.c.b16 %v188, %v187
    %v242 = vpack.c.b16 %v190, %v189
    %v243 = vpack.c.b16 %v192, %v191
    %v244 = vpack.c.b16 %v194, %v193
    %v245 = vpack.c.b16 %v196, %v195
    %v246 = vpack.c.b16 %v198, %v197
    %v247 = vpack.c.b16 %v200, %v199
    %v248 = vpack.c.b16 %v202, %v201
    %v249 = vpack.c.b16 %v204, %v203
    %v250 = vpack.c.b16 %v206, %v205
    %v251 = vpack.c.b16 %v208, %v207
    %v252 = vpack.c.b16 %v210, %v209
    %v253 = vpack.c.b16 %v212, %v211
    %v254 = vpack.c.b16 %v214, %v213
    %v255 = vpack.c.b16 %v216, %v215
    %v256 = vpack.c.b16 %v218, %v217
    %v257 = vpack.c.b16 %v220, %v219
    %v258 = vpack.c.b16 %v222, %v221
    %v259 = vpack.c.b16 %v224, %v223
    %v260 = vpack.c.b16 %v226, %v225
    %v261 = vpack.c.b16 %v228, %v227
    %v262 = vpack.c.b16 %v230, %v229
    %v268 = vunpack.c.l.b16 %v98
    %v269 = vunpack.c.l.b16 %v99
    %v270 = vunpack.c.l.b16 %v100
    %v271 = vunpack.c.l.b16 %v101
    %v272 = vunpack.c.l.b16 %v102
    %v273 = vpack.c.b16 %v269, %v268
    %v274 = vpack.c.b16 %v271, %v270
    %v275 = vpack.c.b16 %v272, %v272
    %vm278 = vcmask 293888
    %v280 = vsel %vm278, %v231, 0
    %v283 = vsel %vm278, %v232, 0
    %v286 = vsel %vm278, %v233, 0
    %v289 = vsel %vm278, %v234, 0
    %v292 = vsel %vm278, %v235, 0
    %v295 = vsel %vm278, %v236, 0
    %v298 = vsel %vm278, %v237, 0
    %v301 = vsel %vm278, %v238, 0
    %v304 = vsel %vm278, %v239, 0
    %v307 = vsel %vm278, %v240, 0
    %v310 = vsel %vm278, %v241, 0
    %v313 = vsel %vm278, %v242, 0
    %v316 = vsel %vm278, %v243, 0
    %v319 = vsel %vm278, %v244, 0
    %v322 = vsel %vm278, %v245, 0
    %v325 = vsel %vm278, %v246, 0
    %v328 = vsel %vm278, %v247, 0
    %v331 = vsel %vm278, %v248, 0
    %v334 = vsel %vm278, %v249, 0
    %v337 = vsel %vm278, %v250, 0
    %v340 = vsel %vm278, %v251, 0
    %v343 = vsel %vm278, %v252, 0
    %v346 = vsel %vm278, %v253, 0
    %v349 = vsel %vm278, %v254, 0
    %v352 = vsel %vm278, %v255, 0
    %v355 = vsel %vm278, %v256, 0
    %v358 = vsel %vm278, %v257, 0
    %v361 = vsel %vm278, %v258, 0
    %v364 = vsel %vm278, %v259, 0
    %v367 = vsel %vm278, %v260, 0
    %v370 = vsel %vm278, %v261, 0
    %v373 = vsel %vm278, %v262, 0
    %vm375 = vcmask 1041408
    %v377 = vsel %vm375, %v275, 0
    %379 = vmatprep.subr.bf16.mxu0 0
    %380 = vmatpush1.bf16.msra.mxu0 %v273
    %381 = vmatprep.subr.bf16.mxu0 0
    %382 = vmatpush1.bf16.msra.mxu0 %v274
    %383 = vmatprep.subr.bf16.mxu0 0
    %384 = vmatpush1.bf16.msra.mxu0 %v377
    %385 = vmatprep.subr.bf16.mxu0 0
    %386 = vmatpush1.bf16.msra.mxu0 0
    %387 = vmatprep.subr.bf16.mxu0 0
    %388 = vmatpush1.bf16.msra.mxu0 0
    %389 = vmatprep.subr.bf16.mxu0 0
    %390 = vmatpush1.bf16.msra.mxu0 0
    %391 = vmatprep.subr.bf16.mxu0 0
    %392 = vmatpush1.bf16.msra.mxu0 0
    %393 = vmatprep.subr.bf16.mxu0 0
    %394 = vmatpush1.bf16.msra.mxu0 0
    %395 = vmatprep.subr.bf16.mxu0 0
    %396 = vmatpush1.bf16.msra.mxu0 0
    %397 = vmatprep.subr.bf16.mxu0 0
    %398 = vmatpush1.bf16.msra.mxu0 0
    %399 = vmatprep.subr.bf16.mxu0 0
    %400 = vmatpush1.bf16.msra.mxu0 0
    %401 = vmatprep.subr.bf16.mxu0 0
    %402 = vmatpush1.bf16.msra.mxu0 0
    %403 = vmatprep.subr.bf16.mxu0 0
    %404 = vmatpush1.bf16.msra.mxu0 0
    %405 = vmatprep.subr.bf16.mxu0 0
    %406 = vmatpush1.bf16.msra.mxu0 0
    %407 = vmatprep.subr.bf16.mxu0 0
    %408 = vmatpush1.bf16.msra.mxu0 0
    %409 = vmatprep.subr.bf16.mxu0 0
    %410 = vmatpush1.bf16.msra.mxu0 0
    %411 = vmatprep.mubr.bf16.mxu0 0
    %412 = vmatmul.mubr.bf16.gmra.mrb[0].mxu0 %v280
    %v413 = vpop.f32.mrb[0].mxu0
    %v414 = vadd.f32 0.0, %v413
    %v415 = vpop.f32.mrb[0].mxu0
    %v416 = vpop.f32.mrb[0].mxu0
    %v417 = vadd.f32 0.0, %v416
    %v418 = vpop.f32.mrb[0].mxu0
    %419 = vmatprep.mubr.bf16.mxu0 0
    %420 = vmatmul.mubr.bf16.gmra.mrb[0].mxu0 %v283
    %v421 = vpop.f32.mrb[0].mxu0
    %v422 = vadd.f32 0.0, %v421
    %v423 = vpop.f32.mrb[0].mxu0
    %v424 = vpop.f32.mrb[0].mxu0
    %v425 = vadd.f32 0.0, %v424
    %v426 = vpop.f32.mrb[0].mxu0
    %427 = vmatprep.mubr.bf16.mxu0 0
    %428 = vmatmul.mubr.bf16.gmra.mrb[0].mxu0 %v286
    %v429 = vpop.f32.mrb[0].mxu0
    %v430 = vadd.f32 0.0, %v429
    %v431 = vpop.f32.mrb[0].mxu0
    %v432 = vpop.f32.mrb[0].mxu0
    %v433 = vadd.f32 0.0, %v432
    %v434 = vpop.f32.mrb[0].mxu0
    %435 = vmatprep.mubr.bf16.mxu0 0
    %436 = vmatmul.mubr.bf16.gmra.mrb[0].mxu0 %v289
    %v437 = vpop.f32.mrb[0].mxu0
    %v438 = vadd.f32 0.0, %v437
    %v439 = vpop.f32.mrb[0].mxu0
    %v440 = vpop.f32.mrb[0].mxu0
    %v441 = vadd.f32 0.0, %v440
    %v442 = vpop.f32.mrb[0].mxu0
    %443 = vmatprep.mubr.bf16.mxu0 0
    %444 = vmatmul.mubr.bf16.gmra.mrb[0].mxu0 %v292
    %v445 = vpop.f32.mrb[0].mxu0
    %v446 = vadd.f32 0.0, %v445
    %v447 = vpop.f32.mrb[0].mxu0
    %v448 = vpop.f32.mrb[0].mxu0
    %v449 = vadd.f32 0.0, %v448
    %v450 = vpop.f32.mrb[0].mxu0
    %451 = vmatprep.mubr.bf16.mxu0 0
    %452 = vmatmul.mubr.bf16.gmra.mrb[0].mxu0 %v295
    %v453 = vpop.f32.mrb[0].mxu0
    %v454 = vadd.f32 0.0, %v453
    %v455 = vpop.f32.mrb[0].mxu0
    %v456 = vpop.f32.mrb[0].mxu0
    %v457 = vadd.f32 0.0, %v456
    %v458 = vpop.f32.mrb[0].mxu0
    %459 = vmatprep.mubr.bf16.mxu0 0
    %460 = vmatmul.mubr.bf16.gmra.mrb[0].mxu0 %v298
    %v461 = vpop.f32.mrb[0].mxu0
    %v462 = vadd.f32 0.0, %v461
    %v463 = vpop.f32.mrb[0].mxu0
    %v464 = vpop.f32.mrb[0].mxu0
    %v465 = vadd.f32 0.0, %v464
    %v466 = vpop.f32.mrb[0].mxu0
    %467 = vmatprep.mubr.bf16.mxu0 0
    %468 = vmatmul.mubr.bf16.gmra.mrb[0].mxu0 %v301
    %v469 = vpop.f32.mrb[0].mxu0
    %v470 = vadd.f32 0.0, %v469
    %v471 = vpop.f32.mrb[0].mxu0
    %v472 = vpop.f32.mrb[0].mxu0
    %v473 = vadd.f32 0.0, %v472
    %v474 = vpop.f32.mrb[0].mxu0
    %475 = vmatprep.mubr.bf16.mxu0 0
    %476 = vmatmul.mubr.bf16.gmra.mrb[0].mxu0 %v304
    %v477 = vpop.f32.mrb[0].mxu0
    %v478 = vadd.f32 0.0, %v477
    %v479 = vpop.f32.mrb[0].mxu0
    %v480 = vpop.f32.mrb[0].mxu0
    %v481 = vadd.f32 0.0, %v480
    %v482 = vpop.f32.mrb[0].mxu0
    %483 = vmatprep.mubr.bf16.mxu0 0
    %484 = vmatmul.mubr.bf16.gmra.mrb[0].mxu0 %v307
    %v485 = vpop.f32.mrb[0].mxu0
    %v486 = vadd.f32 0.0, %v485
    %v487 = vpop.f32.mrb[0].mxu0
    %v488 = vpop.f32.mrb[0].mxu0
    %v489 = vadd.f32 0.0, %v488
    %v490 = vpop.f32.mrb[0].mxu0
    %491 = vmatprep.mubr.bf16.mxu0 0
    %492 = vmatmul.mubr.bf16.gmra.mrb[0].mxu0 %v310
    %v493 = vpop.f32.mrb[0].mxu0
    %v494 = vadd.f32 0.0, %v493
    %v495 = vpop.f32.mrb[0].mxu0
    %v496 = vpop.f32.mrb[0].mxu0
    %v497 = vadd.f32 0.0, %v496
    %v498 = vpop.f32.mrb[0].mxu0
    %499 = vmatprep.mubr.bf16.mxu0 0
    %500 = vmatmul.mubr.bf16.gmra.mrb[0].mxu0 %v313
    %v501 = vpop.f32.mrb[0].mxu0
    %v502 = vadd.f32 0.0, %v501
    %v503 = vpop.f32.mrb[0].mxu0
    %v504 = vpop.f32.mrb[0].mxu0
    %v505 = vadd.f32 0.0, %v504
    %v506 = vpop.f32.mrb[0].mxu0
    %507 = vmatprep.mubr.bf16.mxu0 0
    %508 = vmatmul.mubr.bf16.gmra.mrb[0].mxu0 %v316
    %v509 = vpop.f32.mrb[0].mxu0
    %v510 = vadd.f32 0.0, %v509
    %v511 = vpop.f32.mrb[0].mxu0
    %v512 = vpop.f32.mrb[0].mxu0
    %v513 = vadd.f32 0.0, %v512
    %v514 = vpop.f32.mrb[0].mxu0
    %515 = vmatprep.mubr.bf16.mxu0 0
    %516 = vmatmul.mubr.bf16.gmra.mrb[0].mxu0 %v319
    %v517 = vpop.f32.mrb[0].mxu0
    %v518 = vadd.f32 0.0, %v517
    %v519 = vpop.f32.mrb[0].mxu0
    %v520 = vpop.f32.mrb[0].mxu0
    %v521 = vadd.f32 0.0, %v520
    %v522 = vpop.f32.mrb[0].mxu0
    %523 = vmatprep.mubr.bf16.mxu0 0
    %524 = vmatmul.mubr.bf16.gmra.mrb[0].mxu0 %v322
    %v525 = vpop.f32.mrb[0].mxu0
    %v526 = vadd.f32 0.0, %v525
    %v527 = vpop.f32.mrb[0].mxu0
    %v528 = vpop.f32.mrb[0].mxu0
    %v529 = vadd.f32 0.0, %v528
    %v530 = vpop.f32.mrb[0].mxu0
    %531 = vmatprep.mubr.bf16.mxu0 0
    %532 = vmatmul.mubr.bf16.gmra.mrb[0].mxu0 %v325
    %v533 = vpop.f32.mrb[0].mxu0
    %v534 = vadd.f32 0.0, %v533
    %v535 = vpop.f32.mrb[0].mxu0
    %v536 = vpop.f32.mrb[0].mxu0
    %v537 = vadd.f32 0.0, %v536
    %v538 = vpop.f32.mrb[0].mxu0
    %539 = vmatprep.mubr.bf16.mxu0 0
    %540 = vmatmul.mubr.bf16.gmra.mrb[0].mxu0 %v328
    %v541 = vpop.f32.mrb[0].mxu0
    %v542 = vadd.f32 0.0, %v541
    %v543 = vpop.f32.mrb[0].mxu0
    %v544 = vpop.f32.mrb[0].mxu0
    %v545 = vadd.f32 0.0, %v544
    %v546 = vpop.f32.mrb[0].mxu0
    %547 = vmatprep.mubr.bf16.mxu0 0
    %548 = vmatmul.mubr.bf16.gmra.mrb[0].mxu0 %v331
    %v549 = vpop.f32.mrb[0].mxu0
    %v550 = vadd.f32 0.0, %v549
    %v551 = vpop.f32.mrb[0].mxu0
    %v552 = vpop.f32.mrb[0].mxu0
    %v553 = vadd.f32 0.0, %v552
    %v554 = vpop.f32.mrb[0].mxu0
    %555 = vmatprep.mubr.bf16.mxu0 0
    %556 = vmatmul.mubr.bf16.gmra.mrb[0].mxu0 %v334
    %v557 = vpop.f32.mrb[0].mxu0
    %v558 = vadd.f32 0.0, %v557
    %v559 = vpop.f32.mrb[0].mxu0
    %v560 = vpop.f32.mrb[0].mxu0
    %v561 = vadd.f32 0.0, %v560
    %v562 = vpop.f32.mrb[0].mxu0
    %563 = vmatprep.mubr.bf16.mxu0 0
    %564 = vmatmul.mubr.bf16.gmra.mrb[0].mxu0 %v337
    %v565 = vpop.f32.mrb[0].mxu0
    %v566 = vadd.f32 0.0, %v565
    %v567 = vpop.f32.mrb[0].mxu0
    %v568 = vpop.f32.mrb[0].mxu0
    %v569 = vadd.f32 0.0, %v568
    %v570 = vpop.f32.mrb[0].mxu0
    %571 = vmatprep.mubr.bf16.mxu0 0
    %572 = vmatmul.mubr.bf16.gmra.mrb[0].mxu0 %v340
    %v573 = vpop.f32.mrb[0].mxu0
    %v574 = vadd.f32 0.0, %v573
    %v575 = vpop.f32.mrb[0].mxu0
    %v576 = vpop.f32.mrb[0].mxu0
    %v577 = vadd.f32 0.0, %v576
    %v578 = vpop.f32.mrb[0].mxu0
    %579 = vmatprep.mubr.bf16.mxu0 0
    %580 = vmatmul.mubr.bf16.gmra.mrb[0].mxu0 %v343
    %v581 = vpop.f32.mrb[0].mxu0
    %v582 = vadd.f32 0.0, %v581
    %v583 = vpop.f32.mrb[0].mxu0
    %v584 = vpop.f32.mrb[0].mxu0
    %v585 = vadd.f32 0.0, %v584
    %v586 = vpop.f32.mrb[0].mxu0
    %587 = vmatprep.mubr.bf16.mxu0 0
    %588 = vmatmul.mubr.bf16.gmra.mrb[0].mxu0 %v346
    %v589 = vpop.f32.mrb[0].mxu0
    %v590 = vadd.f32 0.0, %v589
    %v591 = vpop.f32.mrb[0].mxu0
    %v592 = vpop.f32.mrb[0].mxu0
    %v593 = vadd.f32 0.0, %v592
    %v594 = vpop.f32.mrb[0].mxu0
    %595 = vmatprep.mubr.bf16.mxu0 0
    %596 = vmatmul.mubr.bf16.gmra.mrb[0].mxu0 %v349
    %v597 = vpop.f32.mrb[0].mxu0
    %v598 = vadd.f32 0.0, %v597
    %v599 = vpop.f32.mrb[0].mxu0
    %v600 = vpop.f32.mrb[0].mxu0
    %v601 = vadd.f32 0.0, %v600
    %v602 = vpop.f32.mrb[0].mxu0
    %603 = vmatprep.mubr.bf16.mxu0 0
    %604 = vmatmul.mubr.bf16.gmra.mrb[0].mxu0 %v352
    %v605 = vpop.f32.mrb[0].mxu0
    %v606 = vadd.f32 0.0, %v605
    %v607 = vpop.f32.mrb[0].mxu0
    %v608 = vpop.f32.mrb[0].mxu0
    %v609 = vadd.f32 0.0, %v608
    %v610 = vpop.f32.mrb[0].mxu0
    %611 = vmatprep.mubr.bf16.mxu0 0
    %612 = vmatmul.mubr.bf16.gmra.mrb[0].mxu0 %v355
    %v613 = vpop.f32.mrb[0].mxu0
    %v614 = vadd.f32 0.0, %v613
    %v615 = vpop.f32.mrb[0].mxu0
    %v616 = vpop.f32.mrb[0].mxu0
    %v617 = vadd.f32 0.0, %v616
    %v618 = vpop.f32.mrb[0].mxu0
    %619 = vmatprep.mubr.bf16.mxu0 0
    %620 = vmatmul.mubr.bf16.gmra.mrb[0].mxu0 %v358
    %v621 = vpop.f32.mrb[0].mxu0
    %v622 = vadd.f32 0.0, %v621
    %v623 = vpop.f32.mrb[0].mxu0
    %v624 = vpop.f32.mrb[0].mxu0
    %v625 = vadd.f32 0.0, %v624
    %v626 = vpop.f32.mrb[0].mxu0
    %627 = vmatprep.mubr.bf16.mxu0 0
    %628 = vmatmul.mubr.bf16.gmra.mrb[0].mxu0 %v361
    %v629 = vpop.f32.mrb[0].mxu0
    %v630 = vadd.f32 0.0, %v629
    %v631 = vpop.f32.mrb[0].mxu0
    %v632 = vpop.f32.mrb[0].mxu0
    %v633 = vadd.f32 0.0, %v632
    %v634 = vpop.f32.mrb[0].mxu0
    %635 = vmatprep.mubr.bf16.mxu0 0
    %636 = vmatmul.mubr.bf16.gmra.mrb[0].mxu0 %v364
    %v637 = vpop.f32.mrb[0].mxu0
    %v638 = vadd.f32 0.0, %v637
    %v639 = vpop.f32.mrb[0].mxu0
    %v640 = vpop.f32.mrb[0].mxu0
    %v641 = vadd.f32 0.0, %v640
    %v642 = vpop.f32.mrb[0].mxu0
    %643 = vmatprep.mubr.bf16.mxu0 0
    %644 = vmatmul.mubr.bf16.gmra.mrb[0].mxu0 %v367
    %v645 = vpop.f32.mrb[0].mxu0
    %v646 = vadd.f32 0.0, %v645
    %v647 = vpop.f32.mrb[0].mxu0
    %v648 = vpop.f32.mrb[0].mxu0
    %v649 = vadd.f32 0.0, %v648
    %v650 = vpop.f32.mrb[0].mxu0
    %651 = vmatprep.mubr.bf16.mxu0 0
    %652 = vmatmul.mubr.bf16.gmra.mrb[0].mxu0 %v370
    %v653 = vpop.f32.mrb[0].mxu0
    %v654 = vadd.f32 0.0, %v653
    %v655 = vpop.f32.mrb[0].mxu0
    %v656 = vpop.f32.mrb[0].mxu0
    %v657 = vadd.f32 0.0, %v656
    %v658 = vpop.f32.mrb[0].mxu0
    %659 = vmatprep.mubr.bf16.mxu0 0
    %660 = vmatmul.mubr.bf16.gmra.mrb[0].mxu0 %v373
    %v661 = vpop.f32.mrb[0].mxu0
    %v662 = vadd.f32 0.0, %v661
    %v663 = vpop.f32.mrb[0].mxu0
    %v664 = vpop.f32.mrb[0].mxu0
    %v665 = vadd.f32 0.0, %v664
    %v666 = vpop.f32.mrb[0].mxu0
    %667 = vdwg.mxu0
    %v668 = vld [vmem:[%s2] sm:$0x1]
    %v669 = vld [vmem:[%s3] sm:$0x1]
    %vm670 = vcmask 64512
    %v671 = vsel %vm670, %v414, 0.0
    %v672 = vsel %vm670, %v417, 0.0
    %v673 = vadd.f32 %v671, %v672
    %v674 = vsel %vm670, %v422, 0.0
    %v675 = vadd.f32 %v673, %v674
    %v676 = vsel %vm670, %v425, 0.0
    %v677 = vadd.f32 %v675, %v676
    %v678 = vsel %vm670, %v430, 0.0
    %v679 = vadd.f32 %v677, %v678
    %v680 = vsel %vm670, %v433, 0.0
    %v681 = vadd.f32 %v679, %v680
    %v682 = vsel %vm670, %v438, 0.0
    %v683 = vadd.f32 %v681, %v682
    %v684 = vsel %vm670, %v441, 0.0
    %v685 = vadd.f32 %v683, %v684
    %v686 = vsel %vm670, %v446, 0.0
    %v687 = vadd.f32 %v685, %v686
    %v688 = vsel %vm670, %v449, 0.0
    %v689 = vadd.f32 %v687, %v688
    %v690 = vsel %vm670, %v454, 0.0
    %v691 = vadd.f32 %v689, %v690
    %v692 = vsel %vm670, %v457, 0.0
    %v693 = vadd.f32 %v691, %v692
    %v694 = vsel %vm670, %v462, 0.0
    %v695 = vadd.f32 %v693, %v694
    %v696 = vsel %vm670, %v465, 0.0
    %v697 = vadd.f32 %v695, %v696
    %v698 = vsel %vm670, %v470, 0.0
    %v699 = vadd.f32 %v697, %v698
    %v700 = vsel %vm670, %v473, 0.0
    %v701 = vadd.f32 %v699, %v700
    %v702 = vsel %vm670, %v478, 0.0
    %v703 = vadd.f32 %v701, %v702
    %v704 = vsel %vm670, %v481, 0.0
    %v705 = vadd.f32 %v703, %v704
    %v706 = vsel %vm670, %v486, 0.0
    %v707 = vadd.f32 %v705, %v706
    %v708 = vsel %vm670, %v489, 0.0
    %v709 = vadd.f32 %v707, %v708
    %v710 = vsel %vm670, %v494, 0.0
    %v711 = vadd.f32 %v709, %v710
    %v712 = vsel %vm670, %v497, 0.0
    %v713 = vadd.f32 %v711, %v712
    %v714 = vsel %vm670, %v502, 0.0
    %v715 = vadd.f32 %v713, %v714
    %v716 = vsel %vm670, %v505, 0.0
    %v717 = vadd.f32 %v715, %v716
    %v718 = vsel %vm670, %v510, 0.0
    %v719 = vadd.f32 %v717, %v718
    %v720 = vsel %vm670, %v513, 0.0
    %v721 = vadd.f32 %v719, %v720
    %v722 = vsel %vm670, %v518, 0.0
    %v723 = vadd.f32 %v721, %v722
    %v724 = vsel %vm670, %v521, 0.0
    %v725 = vadd.f32 %v723, %v724
    %v726 = vsel %vm670, %v526, 0.0
    %v727 = vadd.f32 %v725, %v726
    %v728 = vsel %vm670, %v529, 0.0
    %v729 = vadd.f32 %v727, %v728
    %v730 = vsel %vm670, %v534, 0.0
    %v731 = vadd.f32 %v729, %v730
    %v732 = vsel %vm670, %v537, 0.0
    %v733 = vadd.f32 %v731, %v732
    %v734 = vsel %vm670, %v542, 0.0
    %v735 = vadd.f32 %v733, %v734
    %v736 = vsel %vm670, %v545, 0.0
    %v737 = vadd.f32 %v735, %v736
    %v738 = vsel %vm670, %v550, 0.0
    %v739 = vadd.f32 %v737, %v738
    %v740 = vsel %vm670, %v553, 0.0
    %v741 = vadd.f32 %v739, %v740
    %v742 = vsel %vm670, %v558, 0.0
    %v743 = vadd.f32 %v741, %v742
    %v744 = vsel %vm670, %v561, 0.0
    %v745 = vadd.f32 %v743, %v744
    %v746 = vsel %vm670, %v566, 0.0
    %v747 = vadd.f32 %v745, %v746
    %v748 = vsel %vm670, %v569, 0.0
    %v749 = vadd.f32 %v747, %v748
    %v750 = vsel %vm670, %v574, 0.0
    %v751 = vadd.f32 %v749, %v750
    %v752 = vsel %vm670, %v577, 0.0
    %v753 = vadd.f32 %v751, %v752
    %v754 = vsel %vm670, %v582, 0.0
    %v755 = vadd.f32 %v753, %v754
    %v756 = vsel %vm670, %v585, 0.0
    %v757 = vadd.f32 %v755, %v756
    %v758 = vsel %vm670, %v590, 0.0
    %v759 = vadd.f32 %v757, %v758
    %v760 = vsel %vm670, %v593, 0.0
    %v761 = vadd.f32 %v759, %v760
    %v762 = vsel %vm670, %v598, 0.0
    %v763 = vadd.f32 %v761, %v762
    %v764 = vsel %vm670, %v601, 0.0
    %v765 = vadd.f32 %v763, %v764
    %v766 = vsel %vm670, %v606, 0.0
    %v767 = vadd.f32 %v765, %v766
    %v768 = vsel %vm670, %v609, 0.0
    %v769 = vadd.f32 %v767, %v768
    %v770 = vsel %vm670, %v614, 0.0
    %v771 = vadd.f32 %v769, %v770
    %v772 = vsel %vm670, %v617, 0.0
    %v773 = vadd.f32 %v771, %v772
    %v774 = vsel %vm670, %v622, 0.0
    %v775 = vadd.f32 %v773, %v774
    %v776 = vsel %vm670, %v625, 0.0
    %v777 = vadd.f32 %v775, %v776
    %v778 = vsel %vm670, %v630, 0.0
    %v779 = vadd.f32 %v777, %v778
    %v780 = vsel %vm670, %v633, 0.0
    %v781 = vadd.f32 %v779, %v780
    %v782 = vsel %vm670, %v638, 0.0
    %v783 = vadd.f32 %v781, %v782
    %v784 = vsel %vm670, %v641, 0.0
    %v785 = vadd.f32 %v783, %v784
    %v786 = vsel %vm670, %v646, 0.0
    %v787 = vadd.f32 %v785, %v786
    %v788 = vsel %vm670, %v649, 0.0
    %v789 = vadd.f32 %v787, %v788
    %v790 = vsel %vm670, %v654, 0.0
    %v791 = vadd.f32 %v789, %v790
    %v792 = vsel %vm670, %v657, 0.0
    %v793 = vadd.f32 %v791, %v792
    %v794 = vsel %vm670, %v662, 0.0
    %v795 = vadd.f32 %v793, %v794
    %v796 = vsel %vm670, %v665, 0.0
    %v797 = vadd.f32 %v795, %v796
    %v798 = vrot.slane %v797, 4
    %v799 = vadd.f32 %v797, %v798
    %v800 = vrot.slane %v799, 2
    %v801 = vadd.f32 %v799, %v800
    %v802 = vrot.slane %v801, 1
    %v803 = vadd.f32 %v801, %v802
    %v804 = vrcp.pop 512.0
    %v805 = vmul.f32 %v803, %v804
    %v806 = vmul.f32 %v414, %v414
    %v807 = vmul.f32 %v417, %v417
    %v808 = vmul.f32 %v422, %v422
    %v809 = vmul.f32 %v425, %v425
    %v810 = vmul.f32 %v430, %v430
    %v811 = vmul.f32 %v433, %v433
    %v812 = vmul.f32 %v438, %v438
    %v813 = vmul.f32 %v441, %v441
    %v814 = vmul.f32 %v446, %v446
    %v815 = vmul.f32 %v449, %v449
    %v816 = vmul.f32 %v454, %v454
    %v817 = vmul.f32 %v457, %v457
    %v818 = vmul.f32 %v462, %v462
    %v819 = vmul.f32 %v465, %v465
    %v820 = vmul.f32 %v470, %v470
    %v821 = vmul.f32 %v473, %v473
    %v822 = vmul.f32 %v478, %v478
    %v823 = vmul.f32 %v481, %v481
    %v824 = vmul.f32 %v486, %v486
    %v825 = vmul.f32 %v489, %v489
    %v826 = vmul.f32 %v494, %v494
    %v827 = vmul.f32 %v497, %v497
    %v828 = vmul.f32 %v502, %v502
    %v829 = vmul.f32 %v505, %v505
    %v830 = vmul.f32 %v510, %v510
    %v831 = vmul.f32 %v513, %v513
    %v832 = vmul.f32 %v518, %v518
    %v833 = vmul.f32 %v521, %v521
    %v834 = vmul.f32 %v526, %v526
    %v835 = vmul.f32 %v529, %v529
    %v836 = vmul.f32 %v534, %v534
    %v837 = vmul.f32 %v537, %v537
    %v838 = vmul.f32 %v542, %v542
    %v839 = vmul.f32 %v545, %v545
    %v840 = vmul.f32 %v550, %v550
    %v841 = vmul.f32 %v553, %v553
    %v842 = vmul.f32 %v558, %v558
    %v843 = vmul.f32 %v561, %v561
    %v844 = vmul.f32 %v566, %v566
    %v845 = vmul.f32 %v569, %v569
    %v846 = vmul.f32 %v574, %v574
    %v847 = vmul.f32 %v577, %v577
    %v848 = vmul.f32 %v582, %v582
    %v849 = vmul.f32 %v585, %v585
    %v850 = vmul.f32 %v590, %v590
    %v851 = vmul.f32 %v593, %v593
    %v852 = vmul.f32 %v598, %v598
    %v853 = vmul.f32 %v601, %v601
    %v854 = vmul.f32 %v606, %v606
    %v855 = vmul.f32 %v609, %v609
    %v856 = vmul.f32 %v614, %v614
    %v857 = vmul.f32 %v617, %v617
    %v858 = vmul.f32 %v622, %v622
    %v859 = vmul.f32 %v625, %v625
    %v860 = vmul.f32 %v630, %v630
    %v861 = vmul.f32 %v633, %v633
    %v862 = vmul.f32 %v638, %v638
    %v863 = vmul.f32 %v641, %v641
    %v864 = vmul.f32 %v646, %v646
    %v865 = vmul.f32 %v649, %v649
    %v866 = vmul.f32 %v654, %v654
    %v867 = vmul.f32 %v657, %v657
    %v868 = vmul.f32 %v662, %v662
    %v869 = vmul.f32 %v665, %v665
    %v870 = vsel %vm670, %v806, 0.0
    %v871 = vsel %vm670, %v807, 0.0
    %v872 = vadd.f32 %v870, %v871
    %v873 = vsel %vm670, %v808, 0.0
    %v874 = vadd.f32 %v872, %v873
    %v875 = vsel %vm670, %v809, 0.0
    %v876 = vadd.f32 %v874, %v875
    %v877 = vsel %vm670, %v810, 0.0
    %v878 = vadd.f32 %v876, %v877
    %v879 = vsel %vm670, %v811, 0.0
    %v880 = vadd.f32 %v878, %v879
    %v881 = vsel %vm670, %v812, 0.0
    %v882 = vadd.f32 %v880, %v881
    %v883 = vsel %vm670, %v813, 0.0
    %v884 = vadd.f32 %v882, %v883
    %v885 = vsel %vm670, %v814, 0.0
    %v886 = vadd.f32 %v884, %v885
    %v887 = vsel %vm670, %v815, 0.0
    %v888 = vadd.f32 %v886, %v887
    %v889 = vsel %vm670, %v816, 0.0
    %v890 = vadd.f32 %v888, %v889
    %v891 = vsel %vm670, %v817, 0.0
    %v892 = vadd.f32 %v890, %v891
    %v893 = vsel %vm670, %v818, 0.0
    %v894 = vadd.f32 %v892, %v893
    %v895 = vsel %vm670, %v819, 0.0
    %v896 = vadd.f32 %v894, %v895
    %v897 = vsel %vm670, %v820, 0.0
    %v898 = vadd.f32 %v896, %v897
    %v899 = vsel %vm670, %v821, 0.0
    %v900 = vadd.f32 %v898, %v899
    %v901 = vsel %vm670, %v822, 0.0
    %v902 = vadd.f32 %v900, %v901
    %v903 = vsel %vm670, %v823, 0.0
    %v904 = vadd.f32 %v902, %v903
    %v905 = vsel %vm670, %v824, 0.0
    %v906 = vadd.f32 %v904, %v905
    %v907 = vsel %vm670, %v825, 0.0
    %v908 = vadd.f32 %v906, %v907
    %v909 = vsel %vm670, %v826, 0.0
    %v910 = vadd.f32 %v908, %v909
    %v911 = vsel %vm670, %v827, 0.0
    %v912 = vadd.f32 %v910, %v911
    %v913 = vsel %vm670, %v828, 0.0
    %v914 = vadd.f32 %v912, %v913
    %v915 = vsel %vm670, %v829, 0.0
    %v916 = vadd.f32 %v914, %v915
    %v917 = vsel %vm670, %v830, 0.0
    %v918 = vadd.f32 %v916, %v917
    %v919 = vsel %vm670, %v831, 0.0
    %v920 = vadd.f32 %v918, %v919
    %v921 = vsel %vm670, %v832, 0.0
    %v922 = vadd.f32 %v920, %v921
    %v923 = vsel %vm670, %v833, 0.0
    %v924 = vadd.f32 %v922, %v923
    %v925 = vsel %vm670, %v834, 0.0
    %v926 = vadd.f32 %v924, %v925
    %v927 = vsel %vm670, %v835, 0.0
    %v928 = vadd.f32 %v926, %v927
    %v929 = vsel %vm670, %v836, 0.0
    %v930 = vadd.f32 %v928, %v929
    %v931 = vsel %vm670, %v837, 0.0
    %v932 = vadd.f32 %v930, %v931
    %v933 = vsel %vm670, %v838, 0.0
    %v934 = vadd.f32 %v932, %v933
    %v935 = vsel %vm670, %v839, 0.0
    %v936 = vadd.f32 %v934, %v935
    %v937 = vsel %vm670, %v840, 0.0
    %v938 = vadd.f32 %v936, %v937
    %v939 = vsel %vm670, %v841, 0.0
    %v940 = vadd.f32 %v938, %v939
    %v941 = vsel %vm670, %v842, 0.0
    %v942 = vadd.f32 %v940, %v941
    %v943 = vsel %vm670, %v843, 0.0
    %v944 = vadd.f32 %v942, %v943
    %v945 = vsel %vm670, %v844, 0.0
    %v946 = vadd.f32 %v944, %v945
    %v947 = vsel %vm670, %v845, 0.0
    %v948 = vadd.f32 %v946, %v947
    %v949 = vsel %vm670, %v846, 0.0
    %v950 = vadd.f32 %v948, %v949
    %v951 = vsel %vm670, %v847, 0.0
    %v952 = vadd.f32 %v950, %v951
    %v953 = vsel %vm670, %v848, 0.0
    %v954 = vadd.f32 %v952, %v953
    %v955 = vsel %vm670, %v849, 0.0
    %v956 = vadd.f32 %v954, %v955
    %v957 = vsel %vm670, %v850, 0.0
    %v958 = vadd.f32 %v956, %v957
    %v959 = vsel %vm670, %v851, 0.0
    %v960 = vadd.f32 %v958, %v959
    %v961 = vsel %vm670, %v852, 0.0
    %v962 = vadd.f32 %v960, %v961
    %v963 = vsel %vm670, %v853, 0.0
    %v964 = vadd.f32 %v962, %v963
    %v965 = vsel %vm670, %v854, 0.0
    %v966 = vadd.f32 %v964, %v965
    %v967 = vsel %vm670, %v855, 0.0
    %v968 = vadd.f32 %v966, %v967
    %v969 = vsel %vm670, %v856, 0.0
    %v970 = vadd.f32 %v968, %v969
    %v971 = vsel %vm670, %v857, 0.0
    %v972 = vadd.f32 %v970, %v971
    %v973 = vsel %vm670, %v858, 0.0
    %v974 = vadd.f32 %v972, %v973
    %v975 = vsel %vm670, %v859, 0.0
    %v976 = vadd.f32 %v974, %v975
    %v977 = vsel %vm670, %v860, 0.0
    %v978 = vadd.f32 %v976, %v977
    %v979 = vsel %vm670, %v861, 0.0
    %v980 = vadd.f32 %v978, %v979
    %v981 = vsel %vm670, %v862, 0.0
    %v982 = vadd.f32 %v980, %v981
    %v983 = vsel %vm670, %v863, 0.0
    %v984 = vadd.f32 %v982, %v983
    %v985 = vsel %vm670, %v864, 0.0
    %v986 = vadd.f32 %v984, %v985
    %v987 = vsel %vm670, %v865, 0.0
    %v988 = vadd.f32 %v986, %v987
    %v989 = vsel %vm670, %v866, 0.0
    %v990 = vadd.f32 %v988, %v989
    %v991 = vsel %vm670, %v867, 0.0
    %v992 = vadd.f32 %v990, %v991
    %v993 = vsel %vm670, %v868, 0.0
    %v994 = vadd.f32 %v992, %v993
    %v995 = vsel %vm670, %v869, 0.0
    %v996 = vadd.f32 %v994, %v995
    %v997 = vrot.slane %v996, 4
    %v998 = vadd.f32 %v996, %v997
    %v999 = vrot.slane %v998, 2
    %v1000 = vadd.f32 %v998, %v999
    %v1001 = vrot.slane %v1000, 1
    %v1002 = vadd.f32 %v1000, %v1001
    %v1003 = vmul.f32 %v1002, %v804
    %v1004 = vmul.f32 %v805, %v805
    %v1005 = vsub.f32 %v1003, %v1004
    %v1006 = vmax.f32 %v1005, 0.0
    %v1007 = vadd.f32 %v1006, 1e-05
    %v1008 = vrsqrt.pop %v1007
    %v1009 = vmul.f32 %v668, %v1008
    %v1010 = vmul.f32 %v805, %v1009
    %v1011 = vsub.f32 %v669, %v1010
    %v1013 = vlaneseq
    %v1014 = vshrl.u32 %v1013, 7
    %v1015 = vsub.s32 0, %v1014
    %v1016 = vrot.slane %v1009, %v1015
    %v1018 = vmul.f32 %v414, %v1016
    %v1019 = vmul.f32 %v417, %v1016
    %v1020 = vmul.f32 %v422, %v1016
    %v1021 = vmul.f32 %v425, %v1016
    %v1022 = vmul.f32 %v430, %v1016
    %v1023 = vmul.f32 %v433, %v1016
    %v1024 = vmul.f32 %v438, %v1016
    %v1025 = vmul.f32 %v441, %v1016
    %v1026 = vmul.f32 %v446, %v1016
    %v1027 = vmul.f32 %v449, %v1016
    %v1028 = vmul.f32 %v454, %v1016
    %v1029 = vmul.f32 %v457, %v1016
    %v1030 = vmul.f32 %v462, %v1016
    %v1031 = vmul.f32 %v465, %v1016
    %v1032 = vmul.f32 %v470, %v1016
    %v1033 = vmul.f32 %v473, %v1016
    %v1034 = vmul.f32 %v478, %v1016
    %v1035 = vmul.f32 %v481, %v1016
    %v1036 = vmul.f32 %v486, %v1016
    %v1037 = vmul.f32 %v489, %v1016
    %v1038 = vmul.f32 %v494, %v1016
    %v1039 = vmul.f32 %v497, %v1016
    %v1040 = vmul.f32 %v502, %v1016
    %v1041 = vmul.f32 %v505, %v1016
    %v1042 = vmul.f32 %v510, %v1016
    %v1043 = vmul.f32 %v513, %v1016
    %v1044 = vmul.f32 %v518, %v1016
    %v1045 = vmul.f32 %v521, %v1016
    %v1046 = vmul.f32 %v526, %v1016
    %v1047 = vmul.f32 %v529, %v1016
    %v1048 = vmul.f32 %v534, %v1016
    %v1049 = vmul.f32 %v537, %v1016
    %v1050 = vmul.f32 %v542, %v1016
    %v1051 = vmul.f32 %v545, %v1016
    %v1052 = vmul.f32 %v550, %v1016
    %v1053 = vmul.f32 %v553, %v1016
    %v1054 = vmul.f32 %v558, %v1016
    %v1055 = vmul.f32 %v561, %v1016
    %v1056 = vmul.f32 %v566, %v1016
    %v1057 = vmul.f32 %v569, %v1016
    %v1058 = vmul.f32 %v574, %v1016
    %v1059 = vmul.f32 %v577, %v1016
    %v1060 = vmul.f32 %v582, %v1016
    %v1061 = vmul.f32 %v585, %v1016
    %v1062 = vmul.f32 %v590, %v1016
    %v1063 = vmul.f32 %v593, %v1016
    %v1064 = vmul.f32 %v598, %v1016
    %v1065 = vmul.f32 %v601, %v1016
    %v1066 = vmul.f32 %v606, %v1016
    %v1067 = vmul.f32 %v609, %v1016
    %v1068 = vmul.f32 %v614, %v1016
    %v1069 = vmul.f32 %v617, %v1016
    %v1070 = vmul.f32 %v622, %v1016
    %v1071 = vmul.f32 %v625, %v1016
    %v1072 = vmul.f32 %v630, %v1016
    %v1073 = vmul.f32 %v633, %v1016
    %v1074 = vmul.f32 %v638, %v1016
    %v1075 = vmul.f32 %v641, %v1016
    %v1076 = vmul.f32 %v646, %v1016
    %v1077 = vmul.f32 %v649, %v1016
    %v1078 = vmul.f32 %v654, %v1016
    %v1079 = vmul.f32 %v657, %v1016
    %v1080 = vmul.f32 %v662, %v1016
    %v1081 = vmul.f32 %v665, %v1016
    %v1083 = vlaneseq
    %v1084 = vshrl.u32 %v1083, 7
    %v1085 = vsub.s32 0, %v1084
    %v1086 = vrot.slane %v1011, %v1085
    %v1088 = vadd.f32 %v1018, %v1086
    %v1089 = vadd.f32 %v1019, %v1086
    %v1090 = vadd.f32 %v1020, %v1086
    %v1091 = vadd.f32 %v1021, %v1086
    %v1092 = vadd.f32 %v1022, %v1086
    %v1093 = vadd.f32 %v1023, %v1086
    %v1094 = vadd.f32 %v1024, %v1086
    %v1095 = vadd.f32 %v1025, %v1086
    %v1096 = vadd.f32 %v1026, %v1086
    %v1097 = vadd.f32 %v1027, %v1086
    %v1098 = vadd.f32 %v1028, %v1086
    %v1099 = vadd.f32 %v1029, %v1086
    %v1100 = vadd.f32 %v1030, %v1086
    %v1101 = vadd.f32 %v1031, %v1086
    %v1102 = vadd.f32 %v1032, %v1086
    %v1103 = vadd.f32 %v1033, %v1086
    %v1104 = vadd.f32 %v1034, %v1086
    %v1105 = vadd.f32 %v1035, %v1086
    %v1106 = vadd.f32 %v1036, %v1086
    %v1107 = vadd.f32 %v1037, %v1086
    %v1108 = vadd.f32 %v1038, %v1086
    %v1109 = vadd.f32 %v1039, %v1086
    %v1110 = vadd.f32 %v1040, %v1086
    %v1111 = vadd.f32 %v1041, %v1086
    %v1112 = vadd.f32 %v1042, %v1086
    %v1113 = vadd.f32 %v1043, %v1086
    %v1114 = vadd.f32 %v1044, %v1086
    %v1115 = vadd.f32 %v1045, %v1086
    %v1116 = vadd.f32 %v1046, %v1086
    %v1117 = vadd.f32 %v1047, %v1086
    %v1118 = vadd.f32 %v1048, %v1086
    %v1119 = vadd.f32 %v1049, %v1086
    %v1120 = vadd.f32 %v1050, %v1086
    %v1121 = vadd.f32 %v1051, %v1086
    %v1122 = vadd.f32 %v1052, %v1086
    %v1123 = vadd.f32 %v1053, %v1086
    %v1124 = vadd.f32 %v1054, %v1086
    %v1125 = vadd.f32 %v1055, %v1086
    %v1126 = vadd.f32 %v1056, %v1086
    %v1127 = vadd.f32 %v1057, %v1086
    %v1128 = vadd.f32 %v1058, %v1086
    %v1129 = vadd.f32 %v1059, %v1086
    %v1130 = vadd.f32 %v1060, %v1086
    %v1131 = vadd.f32 %v1061, %v1086
    %v1132 = vadd.f32 %v1062, %v1086
    %v1133 = vadd.f32 %v1063, %v1086
    %v1134 = vadd.f32 %v1064, %v1086
    %v1135 = vadd.f32 %v1065, %v1086
    %v1136 = vadd.f32 %v1066, %v1086
    %v1137 = vadd.f32 %v1067, %v1086
    %v1138 = vadd.f32 %v1068, %v1086
    %v1139 = vadd.f32 %v1069, %v1086
    %v1140 = vadd.f32 %v1070, %v1086
    %v1141 = vadd.f32 %v1071, %v1086
    %v1142 = vadd.f32 %v1072, %v1086
    %v1143 = vadd.f32 %v1073, %v1086
    %v1144 = vadd.f32 %v1074, %v1086
    %v1145 = vadd.f32 %v1075, %v1086
    %v1146 = vadd.f32 %v1076, %v1086
    %v1147 = vadd.f32 %v1077, %v1086
    %v1148 = vadd.f32 %v1078, %v1086
    %v1149 = vadd.f32 %v1079, %v1086
    %v1150 = vadd.f32 %v1080, %v1086
    %v1151 = vadd.f32 %v1081, %v1086
    %v1152 = vmax.f32 %v1088, 0.0
    %v1153 = vmax.f32 %v1089, 0.0
    %v1154 = vmax.f32 %v1090, 0.0
    %v1155 = vmax.f32 %v1091, 0.0
    %v1156 = vmax.f32 %v1092, 0.0
    %v1157 = vmax.f32 %v1093, 0.0
    %v1158 = vmax.f32 %v1094, 0.0
    %v1159 = vmax.f32 %v1095, 0.0
    %v1160 = vmax.f32 %v1096, 0.0
    %v1161 = vmax.f32 %v1097, 0.0
    %v1162 = vmax.f32 %v1098, 0.0
    %v1163 = vmax.f32 %v1099, 0.0
    %v1164 = vmax.f32 %v1100, 0.0
    %v1165 = vmax.f32 %v1101, 0.0
    %v1166 = vmax.f32 %v1102, 0.0
    %v1167 = vmax.f32 %v1103, 0.0
    %v1168 = vmax.f32 %v1104, 0.0
    %v1169 = vmax.f32 %v1105, 0.0
    %v1170 = vmax.f32 %v1106, 0.0
    %v1171 = vmax.f32 %v1107, 0.0
    %v1172 = vmax.f32 %v1108, 0.0
    %v1173 = vmax.f32 %v1109, 0.0
    %v1174 = vmax.f32 %v1110, 0.0
    %v1175 = vmax.f32 %v1111, 0.0
    %v1176 = vmax.f32 %v1112, 0.0
    %v1177 = vmax.f32 %v1113, 0.0
    %v1178 = vmax.f32 %v1114, 0.0
    %v1179 = vmax.f32 %v1115, 0.0
    %v1180 = vmax.f32 %v1116, 0.0
    %v1181 = vmax.f32 %v1117, 0.0
    %v1182 = vmax.f32 %v1118, 0.0
    %v1183 = vmax.f32 %v1119, 0.0
    %v1184 = vmax.f32 %v1120, 0.0
    %v1185 = vmax.f32 %v1121, 0.0
    %v1186 = vmax.f32 %v1122, 0.0
    %v1187 = vmax.f32 %v1123, 0.0
    %v1188 = vmax.f32 %v1124, 0.0
    %v1189 = vmax.f32 %v1125, 0.0
    %v1190 = vmax.f32 %v1126, 0.0
    %v1191 = vmax.f32 %v1127, 0.0
    %v1192 = vmax.f32 %v1128, 0.0
    %v1193 = vmax.f32 %v1129, 0.0
    %v1194 = vmax.f32 %v1130, 0.0
    %v1195 = vmax.f32 %v1131, 0.0
    %v1196 = vmax.f32 %v1132, 0.0
    %v1197 = vmax.f32 %v1133, 0.0
    %v1198 = vmax.f32 %v1134, 0.0
    %v1199 = vmax.f32 %v1135, 0.0
    %v1200 = vmax.f32 %v1136, 0.0
    %v1201 = vmax.f32 %v1137, 0.0
    %v1202 = vmax.f32 %v1138, 0.0
    %v1203 = vmax.f32 %v1139, 0.0
    %v1204 = vmax.f32 %v1140, 0.0
    %v1205 = vmax.f32 %v1141, 0.0
    %v1206 = vmax.f32 %v1142, 0.0
    %v1207 = vmax.f32 %v1143, 0.0
    %v1208 = vmax.f32 %v1144, 0.0
    %v1209 = vmax.f32 %v1145, 0.0
    %v1210 = vmax.f32 %v1146, 0.0
    %v1211 = vmax.f32 %v1147, 0.0
    %v1212 = vmax.f32 %v1148, 0.0
    %v1213 = vmax.f32 %v1149, 0.0
    %v1214 = vmax.f32 %v1150, 0.0
    %v1215 = vmax.f32 %v1151, 0.0
    %v1216 = vmax.f32 %v1152, %v1168
    %v1217 = vmax.f32 %v1153, %v1169
    %v1218 = vmax.f32 %v1154, %v1170
    %v1219 = vmax.f32 %v1155, %v1171
    %v1220 = vmax.f32 %v1156, %v1172
    %v1221 = vmax.f32 %v1157, %v1173
    %v1222 = vmax.f32 %v1158, %v1174
    %v1223 = vmax.f32 %v1159, %v1175
    %v1224 = vmax.f32 %v1160, %v1176
    %v1225 = vmax.f32 %v1161, %v1177
    %v1226 = vmax.f32 %v1162, %v1178
    %v1227 = vmax.f32 %v1163, %v1179
    %v1228 = vmax.f32 %v1164, %v1180
    %v1229 = vmax.f32 %v1165, %v1181
    %v1230 = vmax.f32 %v1166, %v1182
    %v1231 = vmax.f32 %v1167, %v1183
    %v1232 = vmax.f32 %v1184, %v1200
    %v1233 = vmax.f32 %v1185, %v1201
    %v1234 = vmax.f32 %v1186, %v1202
    %v1235 = vmax.f32 %v1187, %v1203
    %v1236 = vmax.f32 %v1188, %v1204
    %v1237 = vmax.f32 %v1189, %v1205
    %v1238 = vmax.f32 %v1190, %v1206
    %v1239 = vmax.f32 %v1191, %v1207
    %v1240 = vmax.f32 %v1192, %v1208
    %v1241 = vmax.f32 %v1193, %v1209
    %v1242 = vmax.f32 %v1194, %v1210
    %v1243 = vmax.f32 %v1195, %v1211
    %v1244 = vmax.f32 %v1196, %v1212
    %v1245 = vmax.f32 %v1197, %v1213
    %v1246 = vmax.f32 %v1198, %v1214
    %v1247 = vmax.f32 %v1199, %v1215
    %v1248 = vmax.f32 %v1216, %v1232
    %v1249 = vmax.f32 %v1217, %v1233
    %v1250 = vmax.f32 %v1218, %v1234
    %v1251 = vmax.f32 %v1219, %v1235
    %v1252 = vmax.f32 %v1220, %v1236
    %v1253 = vmax.f32 %v1221, %v1237
    %v1254 = vmax.f32 %v1222, %v1238
    %v1255 = vmax.f32 %v1223, %v1239
    %v1256 = vmax.f32 %v1224, %v1240
    %v1257 = vmax.f32 %v1225, %v1241
    %v1258 = vmax.f32 %v1226, %v1242
    %v1259 = vmax.f32 %v1227, %v1243
    %v1260 = vmax.f32 %v1228, %v1244
    %v1261 = vmax.f32 %v1229, %v1245
    %v1262 = vmax.f32 %v1230, %v1246
    %v1263 = vmax.f32 %v1231, %v1247
    %v1264 = vlaneseq
    %v1265 = vshrl.u32 %v1264, 7
    %v1266 = vadd.s32 %v1265, 8
    %v1267 = vadd.s32 %v1265, 16
    %v1268 = vadd.s32 %v1265, 24
    %v1269 = vadd.s32 %v1265, 32
    %v1270 = vadd.s32 %v1265, 40
    %v1271 = vadd.s32 %v1265, 48
    %v1272 = vadd.s32 %v1265, 56
    %v1273 = vadd.s32 %v1265, 64
    %v1274 = vadd.s32 %v1265, 72
    %v1275 = vadd.s32 %v1265, 80
    %v1276 = vadd.s32 %v1265, 88
    %v1277 = vadd.s32 %v1265, 96
    %v1278 = vadd.s32 %v1265, 104
    %v1279 = vadd.s32 %v1265, 112
    %v1280 = vadd.s32 %v1265, 120
    %v1281 = vand.u32 %v1265, 7
    %v1282 = vand.u32 %v1266, 7
    %v1283 = vand.u32 %v1267, 7
    %v1284 = vand.u32 %v1268, 7
    %v1285 = vand.u32 %v1269, 7
    %v1286 = vand.u32 %v1270, 7
    %v1287 = vand.u32 %v1271, 7
    %v1288 = vand.u32 %v1272, 7
    %v1289 = vand.u32 %v1273, 7
    %v1290 = vand.u32 %v1274, 7
    %v1291 = vand.u32 %v1275, 7
    %v1292 = vand.u32 %v1276, 7
    %v1293 = vand.u32 %v1277, 7
    %v1294 = vand.u32 %v1278, 7
    %v1295 = vand.u32 %v1279, 7
    %v1296 = vand.u32 %v1280, 7
    %v1297 = vshra.s32 %v1265, 3
    %v1298 = vshra.s32 %v1266, 3
    %v1299 = vshra.s32 %v1267, 3
    %v1300 = vshra.s32 %v1268, 3
    %v1301 = vshra.s32 %v1269, 3
    %v1302 = vshra.s32 %v1270, 3
    %v1303 = vshra.s32 %v1271, 3
    %v1304 = vshra.s32 %v1272, 3
    %v1305 = vshra.s32 %v1273, 3
    %v1306 = vshra.s32 %v1274, 3
    %v1307 = vshra.s32 %v1275, 3
    %v1308 = vshra.s32 %v1276, 3
    %v1309 = vshra.s32 %v1277, 3
    %v1310 = vshra.s32 %v1278, 3
    %v1311 = vshra.s32 %v1279, 3
    %v1312 = vshra.s32 %v1280, 3
    %v1313 = vand.u32 %v1297, 7
    %v1314 = vand.u32 %v1298, 7
    %v1315 = vand.u32 %v1299, 7
    %v1316 = vand.u32 %v1300, 7
    %v1317 = vand.u32 %v1301, 7
    %v1318 = vand.u32 %v1302, 7
    %v1319 = vand.u32 %v1303, 7
    %v1320 = vand.u32 %v1304, 7
    %v1321 = vand.u32 %v1305, 7
    %v1322 = vand.u32 %v1306, 7
    %v1323 = vand.u32 %v1307, 7
    %v1324 = vand.u32 %v1308, 7
    %v1325 = vand.u32 %v1309, 7
    %v1326 = vand.u32 %v1310, 7
    %v1327 = vand.u32 %v1311, 7
    %v1328 = vand.u32 %v1312, 7
    %v1329 = vrot.slane %v1248, 7
    %v1330 = vrot.slane %v1249, 7
    %v1331 = vrot.slane %v1250, 7
    %v1332 = vrot.slane %v1251, 7
    %v1333 = vrot.slane %v1252, 7
    %v1334 = vrot.slane %v1253, 7
    %v1335 = vrot.slane %v1254, 7
    %v1336 = vrot.slane %v1255, 7
    %v1337 = vrot.slane %v1256, 7
    %v1338 = vrot.slane %v1257, 7
    %v1339 = vrot.slane %v1258, 7
    %v1340 = vrot.slane %v1259, 7
    %v1341 = vrot.slane %v1260, 7
    %v1342 = vrot.slane %v1261, 7
    %v1343 = vrot.slane %v1262, 7
    %v1344 = vrot.slane %v1263, 7
    %vm1345 = vcmp.lt.s32.totalorder %v1265, 1
    %v1346 = vsel %vm1345, %v1343, %v1344
    %v1347 = vsel %vm1345, %v1342, %v1343
    %v1348 = vsel %vm1345, %v1341, %v1342
    %v1349 = vsel %vm1345, %v1340, %v1341
    %v1350 = vsel %vm1345, %v1339, %v1340
    %v1351 = vsel %vm1345, %v1338, %v1339
    %v1352 = vsel %vm1345, %v1337, %v1338
    %v1353 = vsel %vm1345, %v1336, %v1337
    %v1354 = vsel %vm1345, %v1335, %v1336
    %v1355 = vsel %vm1345, %v1334, %v1335
    %v1356 = vsel %vm1345, %v1333, %v1334
    %v1357 = vsel %vm1345, %v1332, %v1333
    %v1358 = vsel %vm1345, %v1331, %v1332
    %v1359 = vsel %vm1345, %v1330, %v1331
    %v1360 = vsel %vm1345, %v1329, %v1330
    %v1361 = vsel %vm1345, %v1344, %v1329
    %v1362 = vadd.s32 %v1313, 4294967295
    %v1363 = vadd.s32 %v1314, 4294967295
    %v1364 = vadd.s32 %v1315, 4294967295
    %v1365 = vadd.s32 %v1316, 4294967295
    %v1366 = vadd.s32 %v1317, 4294967295
    %v1367 = vadd.s32 %v1318, 4294967295
    %v1368 = vadd.s32 %v1319, 4294967295
    %v1369 = vadd.s32 %v1320, 4294967295
    %v1370 = vadd.s32 %v1321, 4294967295
    %v1371 = vadd.s32 %v1322, 4294967295
    %v1372 = vadd.s32 %v1323, 4294967295
    %v1373 = vadd.s32 %v1324, 4294967295
    %v1374 = vadd.s32 %v1325, 4294967295
    %v1375 = vadd.s32 %v1326, 4294967295
    %v1376 = vadd.s32 %v1327, 4294967295
    %v1377 = vadd.s32 %v1328, 4294967295
    %vm1378 = vcmp.ge.s32.totalorder %v1362, 0
    %vm1379 = vcmp.ge.s32.totalorder %v1363, 0
    %vm1380 = vcmp.ge.s32.totalorder %v1364, 0
    %vm1381 = vcmp.ge.s32.totalorder %v1365, 0
    %vm1382 = vcmp.ge.s32.totalorder %v1366, 0
    %vm1383 = vcmp.ge.s32.totalorder %v1367, 0
    %vm1384 = vcmp.ge.s32.totalorder %v1368, 0
    %vm1385 = vcmp.ge.s32.totalorder %v1369, 0
    %vm1386 = vcmp.ge.s32.totalorder %v1370, 0
    %vm1387 = vcmp.ge.s32.totalorder %v1371, 0
    %vm1388 = vcmp.ge.s32.totalorder %v1372, 0
    %vm1389 = vcmp.ge.s32.totalorder %v1373, 0
    %vm1390 = vcmp.ge.s32.totalorder %v1374, 0
    %vm1391 = vcmp.ge.s32.totalorder %v1375, 0
    %vm1392 = vcmp.ge.s32.totalorder %v1376, 0
    %vm1393 = vcmp.ge.s32.totalorder %v1377, 0
    %vm1394 = vcmp.le.s32.totalorder %v1362, 7
    %vm1395 = vcmp.le.s32.totalorder %v1363, 7
    %vm1396 = vcmp.le.s32.totalorder %v1364, 7
    %vm1397 = vcmp.le.s32.totalorder %v1365, 7
    %vm1398 = vcmp.le.s32.totalorder %v1366, 7
    %vm1399 = vcmp.le.s32.totalorder %v1367, 7
    %vm1400 = vcmp.le.s32.totalorder %v1368, 7
    %vm1401 = vcmp.le.s32.totalorder %v1369, 7
    %vm1402 = vcmp.le.s32.totalorder %v1370, 7
    %vm1403 = vcmp.le.s32.totalorder %v1371, 7
    %vm1404 = vcmp.le.s32.totalorder %v1372, 7
    %vm1405 = vcmp.le.s32.totalorder %v1373, 7
    %vm1406 = vcmp.le.s32.totalorder %v1374, 7
    %vm1407 = vcmp.le.s32.totalorder %v1375, 7
    %vm1408 = vcmp.le.s32.totalorder %v1376, 7
    %vm1409 = vcmp.le.s32.totalorder %v1377, 7
    %vm1410 = vmand %vm1378, %vm1394
    %vm1411 = vmand %vm1379, %vm1395
    %vm1412 = vmand %vm1380, %vm1396
    %vm1413 = vmand %vm1381, %vm1397
    %vm1414 = vmand %vm1382, %vm1398
    %vm1415 = vmand %vm1383, %vm1399
    %vm1416 = vmand %vm1384, %vm1400
    %vm1417 = vmand %vm1385, %vm1401
    %vm1418 = vmand %vm1386, %vm1402
    %vm1419 = vmand %vm1387, %vm1403
    %vm1420 = vmand %vm1388, %vm1404
    %vm1421 = vmand %vm1389, %vm1405
    %vm1422 = vmand %vm1390, %vm1406
    %vm1423 = vmand %vm1391, %vm1407
    %vm1424 = vmand %vm1392, %vm1408
    %vm1425 = vmand %vm1393, %vm1409
    %v1426 = vadd.s32 %v1281, 4294967295
    %v1427 = vadd.s32 %v1282, 4294967295
    %v1428 = vadd.s32 %v1283, 4294967295
    %v1429 = vadd.s32 %v1284, 4294967295
    %v1430 = vadd.s32 %v1285, 4294967295
    %v1431 = vadd.s32 %v1286, 4294967295
    %v1432 = vadd.s32 %v1287, 4294967295
    %v1433 = vadd.s32 %v1288, 4294967295
    %v1434 = vadd.s32 %v1289, 4294967295
    %v1435 = vadd.s32 %v1290, 4294967295
    %v1436 = vadd.s32 %v1291, 4294967295
    %v1437 = vadd.s32 %v1292, 4294967295
    %v1438 = vadd.s32 %v1293, 4294967295
    %v1439 = vadd.s32 %v1294, 4294967295
    %v1440 = vadd.s32 %v1295, 4294967295
    %v1441 = vadd.s32 %v1296, 4294967295
    %vm1442 = vcmp.ge.s32.totalorder %v1426, 0
    %vm1443 = vcmp.ge.s32.totalorder %v1427, 0
    %vm1444 = vcmp.ge.s32.totalorder %v1428, 0
    %vm1445 = vcmp.ge.s32.totalorder %v1429, 0
    %vm1446 = vcmp.ge.s32.totalorder %v1430, 0
    %vm1447 = vcmp.ge.s32.totalorder %v1431, 0
    %vm1448 = vcmp.ge.s32.totalorder %v1432, 0
    %vm1449 = vcmp.ge.s32.totalorder %v1433, 0
    %vm1450 = vcmp.ge.s32.totalorder %v1434, 0
    %vm1451 = vcmp.ge.s32.totalorder %v1435, 0
    %vm1452 = vcmp.ge.s32.totalorder %v1436, 0
    %vm1453 = vcmp.ge.s32.totalorder %v1437, 0
    %vm1454 = vcmp.ge.s32.totalorder %v1438, 0
    %vm1455 = vcmp.ge.s32.totalorder %v1439, 0
    %vm1456 = vcmp.ge.s32.totalorder %v1440, 0
    %vm1457 = vcmp.ge.s32.totalorder %v1441, 0
    %vm1458 = vmand %vm1410, %vm1442
    %vm1459 = vmand %vm1411, %vm1443
    %vm1460 = vmand %vm1412, %vm1444
    %vm1461 = vmand %vm1413, %vm1445
    %vm1462 = vmand %vm1414, %vm1446
    %vm1463 = vmand %vm1415, %vm1447
    %vm1464 = vmand %vm1416, %vm1448
    %vm1465 = vmand %vm1417, %vm1449
    %vm1466 = vmand %vm1418, %vm1450
    %vm1467 = vmand %vm1419, %vm1451
    %vm1468 = vmand %vm1420, %vm1452
    %vm1469 = vmand %vm1421, %vm1453
    %vm1470 = vmand %vm1422, %vm1454
    %vm1471 = vmand %vm1423, %vm1455
    %vm1472 = vmand %vm1424, %vm1456
    %vm1473 = vmand %vm1425, %vm1457
    %vm1474 = vcmp.le.s32.totalorder %v1426, 7
    %vm1475 = vcmp.le.s32.totalorder %v1427, 7
    %vm1476 = vcmp.le.s32.totalorder %v1428, 7
    %vm1477 = vcmp.le.s32.totalorder %v1429, 7
    %vm1478 = vcmp.le.s32.totalorder %v1430, 7
    %vm1479 = vcmp.le.s32.totalorder %v1431, 7
    %vm1480 = vcmp.le.s32.totalorder %v1432, 7
    %vm1481 = vcmp.le.s32.totalorder %v1433, 7
    %vm1482 = vcmp.le.s32.totalorder %v1434, 7
    %vm1483 = vcmp.le.s32.totalorder %v1435, 7
    %vm1484 = vcmp.le.s32.totalorder %v1436, 7
    %vm1485 = vcmp.le.s32.totalorder %v1437, 7
    %vm1486 = vcmp.le.s32.totalorder %v1438, 7
    %vm1487 = vcmp.le.s32.totalorder %v1439, 7
    %vm1488 = vcmp.le.s32.totalorder %v1440, 7
    %vm1489 = vcmp.le.s32.totalorder %v1441, 7
    %vm1490 = vmand %vm1458, %vm1474
    %vm1491 = vmand %vm1459, %vm1475
    %vm1492 = vmand %vm1460, %vm1476
    %vm1493 = vmand %vm1461, %vm1477
    %vm1494 = vmand %vm1462, %vm1478
    %vm1495 = vmand %vm1463, %vm1479
    %vm1496 = vmand %vm1464, %vm1480
    %vm1497 = vmand %vm1465, %vm1481
    %vm1498 = vmand %vm1466, %vm1482
    %vm1499 = vmand %vm1467, %vm1483
    %vm1500 = vmand %vm1468, %vm1484
    %vm1501 = vmand %vm1469, %vm1485
    %vm1502 = vmand %vm1470, %vm1486
    %vm1503 = vmand %vm1471, %vm1487
    %vm1504 = vmand %vm1472, %vm1488
    %vm1505 = vmand %vm1473, %vm1489
    %v1506 = vsel %vm1490, %v1346, 0.0
    %v1507 = vsel %vm1491, %v1361, 0.0
    %v1508 = vsel %vm1492, %v1360, 0.0
    %v1509 = vsel %vm1493, %v1359, 0.0
    %v1510 = vsel %vm1494, %v1358, 0.0
    %v1511 = vsel %vm1495, %v1357, 0.0
    %v1512 = vsel %vm1496, %v1356, 0.0
    %v1513 = vsel %vm1497, %v1355, 0.0
    %v1514 = vsel %vm1498, %v1354, 0.0
    %v1515 = vsel %vm1499, %v1353, 0.0
    %v1516 = vsel %vm1500, %v1352, 0.0
    %v1517 = vsel %vm1501, %v1351, 0.0
    %v1518 = vsel %vm1502, %v1350, 0.0
    %v1519 = vsel %vm1503, %v1349, 0.0
    %v1520 = vsel %vm1504, %v1348, 0.0
    %v1521 = vsel %vm1505, %v1347, 0.0
    %v1522 = vpack.c.bf16 %v1507, %v1506
    %v1523 = vpack.c.bf16 %v1509, %v1508
    %v1524 = vpack.c.bf16 %v1511, %v1510
    %v1525 = vpack.c.bf16 %v1513, %v1512
    %v1526 = vpack.c.bf16 %v1515, %v1514
    %v1527 = vpack.c.bf16 %v1517, %v1516
    %v1528 = vpack.c.bf16 %v1519, %v1518
    %v1529 = vpack.c.bf16 %v1521, %v1520
    %v1530 = vld [vmem:[%s4] sm:$0xf]
    %vm1531 = vcmp.ge.s32.totalorder %v1281, 0
    %vm1532 = vcmp.ge.s32.totalorder %v1282, 0
    %vm1533 = vcmp.ge.s32.totalorder %v1283, 0
    %vm1534 = vcmp.ge.s32.totalorder %v1284, 0
    %vm1535 = vcmp.ge.s32.totalorder %v1285, 0
    %vm1536 = vcmp.ge.s32.totalorder %v1286, 0
    %vm1537 = vcmp.ge.s32.totalorder %v1287, 0
    %vm1538 = vcmp.ge.s32.totalorder %v1288, 0
    %vm1539 = vcmp.ge.s32.totalorder %v1289, 0
    %vm1540 = vcmp.ge.s32.totalorder %v1290, 0
    %vm1541 = vcmp.ge.s32.totalorder %v1291, 0
    %vm1542 = vcmp.ge.s32.totalorder %v1292, 0
    %vm1543 = vcmp.ge.s32.totalorder %v1293, 0
    %vm1544 = vcmp.ge.s32.totalorder %v1294, 0
    %vm1545 = vcmp.ge.s32.totalorder %v1295, 0
    %vm1546 = vcmp.ge.s32.totalorder %v1296, 0
    %vm1547 = vmand %vm1410, %vm1531
    %vm1548 = vmand %vm1411, %vm1532
    %vm1549 = vmand %vm1412, %vm1533
    %vm1550 = vmand %vm1413, %vm1534
    %vm1551 = vmand %vm1414, %vm1535
    %vm1552 = vmand %vm1415, %vm1536
    %vm1553 = vmand %vm1416, %vm1537
    %vm1554 = vmand %vm1417, %vm1538
    %vm1555 = vmand %vm1418, %vm1539
    %vm1556 = vmand %vm1419, %vm1540
    %vm1557 = vmand %vm1420, %vm1541
    %vm1558 = vmand %vm1421, %vm1542
    %vm1559 = vmand %vm1422, %vm1543
    %vm1560 = vmand %vm1423, %vm1544
    %vm1561 = vmand %vm1424, %vm1545
    %vm1562 = vmand %vm1425, %vm1546
    %vm1563 = vcmp.le.s32.totalorder %v1281, 7
    %vm1564 = vcmp.le.s32.totalorder %v1282, 7
    %vm1565 = vcmp.le.s32.totalorder %v1283, 7
    %vm1566 = vcmp.le.s32.totalorder %v1284, 7
    %vm1567 = vcmp.le.s32.totalorder %v1285, 7
    %vm1568 = vcmp.le.s32.totalorder %v1286, 7
    %vm1569 = vcmp.le.s32.totalorder %v1287, 7
    %vm1570 = vcmp.le.s32.totalorder %v1288, 7
    %vm1571 = vcmp.le.s32.totalorder %v1289, 7
    %vm1572 = vcmp.le.s32.totalorder %v1290, 7
    %vm1573 = vcmp.le.s32.totalorder %v1291, 7
    %vm1574 = vcmp.le.s32.totalorder %v1292, 7
    %vm1575 = vcmp.le.s32.totalorder %v1293, 7
    %vm1576 = vcmp.le.s32.totalorder %v1294, 7
    %vm1577 = vcmp.le.s32.totalorder %v1295, 7
    %vm1578 = vcmp.le.s32.totalorder %v1296, 7
    %vm1579 = vmand %vm1547, %vm1563
    %vm1580 = vmand %vm1548, %vm1564
    %vm1581 = vmand %vm1549, %vm1565
    %vm1582 = vmand %vm1550, %vm1566
    %vm1583 = vmand %vm1551, %vm1567
    %vm1584 = vmand %vm1552, %vm1568
    %vm1585 = vmand %vm1553, %vm1569
    %vm1586 = vmand %vm1554, %vm1570
    %vm1587 = vmand %vm1555, %vm1571
    %vm1588 = vmand %vm1556, %vm1572
    %vm1589 = vmand %vm1557, %vm1573
    %vm1590 = vmand %vm1558, %vm1574
    %vm1591 = vmand %vm1559, %vm1575
    %vm1592 = vmand %vm1560, %vm1576
    %vm1593 = vmand %vm1561, %vm1577
    %vm1594 = vmand %vm1562, %vm1578
    %v1595 = vsel %vm1579, %v1263, 0.0
    %v1596 = vsel %vm1580, %v1248, 0.0
    %v1597 = vsel %vm1581, %v1249, 0.0
    %v1598 = vsel %vm1582, %v1250, 0.0
    %v1599 = vsel %vm1583, %v1251, 0.0
    %v1600 = vsel %vm1584, %v1252, 0.0
    %v1601 = vsel %vm1585, %v1253, 0.0
    %v1602 = vsel %vm1586, %v1254, 0.0
    %v1603 = vsel %vm1587, %v1255, 0.0
    %v1604 = vsel %vm1588, %v1256, 0.0
    %v1605 = vsel %vm1589, %v1257, 0.0
    %v1606 = vsel %vm1590, %v1258, 0.0
    %v1607 = vsel %vm1591, %v1259, 0.0
    %v1608 = vsel %vm1592, %v1260, 0.0
    %v1609 = vsel %vm1593, %v1261, 0.0
    %v1610 = vsel %vm1594, %v1262, 0.0
    %v1611 = vpack.c.bf16 %v1596, %v1595
    %v1612 = vpack.c.bf16 %v1598, %v1597
    %v1613 = vpack.c.bf16 %v1600, %v1599
    %v1614 = vpack.c.bf16 %v1602, %v1601
    %v1615 = vpack.c.bf16 %v1604, %v1603
    %v1616 = vpack.c.bf16 %v1606, %v1605
    %v1617 = vpack.c.bf16 %v1608, %v1607
    %v1618 = vpack.c.bf16 %v1610, %v1609
    %s1619 = scalar_lea.vmem %s4, 4
    %v1620 = vld [vmem:[%s1619] sm:$0xf]
    %v1622 = vsel %vm670, %v1611, 0
    %v1625 = vsel %vm670, %v1612, 0
    %v1628 = vsel %vm670, %v1613, 0
    %v1631 = vsel %vm670, %v1614, 0
    %v1634 = vsel %vm670, %v1615, 0
    %v1637 = vsel %vm670, %v1616, 0
    %v1640 = vsel %vm670, %v1617, 0
    %v1643 = vsel %vm670, %v1618, 0
    %vm1645 = vcmask 1043456
    %v1647 = vsel %vm1645, %v1620, 0
    %1649 = vmatprep.subr.bf16.mxu0 0
    %1650 = vmatpush1.bf16.msra.mxu0 %v1647
    %1651 = vmatprep.subr.bf16.mxu0 0
    %1652 = vmatpush1.bf16.msra.mxu0 0
    %1653 = vmatprep.subr.bf16.mxu0 0
    %1654 = vmatpush1.bf16.msra.mxu0 0
    %1655 = vmatprep.subr.bf16.mxu0 0
    %1656 = vmatpush1.bf16.msra.mxu0 0
    %1657 = vmatprep.subr.bf16.mxu0 0
    %1658 = vmatpush1.bf16.msra.mxu0 0
    %1659 = vmatprep.subr.bf16.mxu0 0
    %1660 = vmatpush1.bf16.msra.mxu0 0
    %1661 = vmatprep.subr.bf16.mxu0 0
    %1662 = vmatpush1.bf16.msra.mxu0 0
    %1663 = vmatprep.subr.bf16.mxu0 0
    %1664 = vmatpush1.bf16.msra.mxu0 0
    %1665 = vmatprep.subr.bf16.mxu0 0
    %1666 = vmatpush1.bf16.msra.mxu0 0
    %1667 = vmatprep.subr.bf16.mxu0 0
    %1668 = vmatpush1.bf16.msra.mxu0 0
    %1669 = vmatprep.subr.bf16.mxu0 0
    %1670 = vmatpush1.bf16.msra.mxu0 0
    %1671 = vmatprep.subr.bf16.mxu0 0
    %1672 = vmatpush1.bf16.msra.mxu0 0
    %1673 = vmatprep.subr.bf16.mxu0 0
    %1674 = vmatpush1.bf16.msra.mxu0 0
    %1675 = vmatprep.subr.bf16.mxu0 0
    %1676 = vmatpush1.bf16.msra.mxu0 0
    %1677 = vmatprep.subr.bf16.mxu0 0
    %1678 = vmatpush1.bf16.msra.mxu0 0
    %1679 = vmatprep.subr.bf16.mxu0 0
    %1680 = vmatpush1.bf16.msra.mxu0 0
    %1681 = vmatprep.mubr.bf16.mxu0 0
    %1682 = vmatmul.mubr.bf16.gmra.mrb[0].mxu0 %v1622
    %v1683 = vpop.f32.mrb[0].mxu0
    %v1684 = vadd.f32 0.0, %v1683
    %v1685 = vpop.f32.mrb[0].mxu0
    %v1686 = vpop.f32.mrb[0].mxu0
    %v1687 = vadd.f32 0.0, %v1686
    %v1688 = vpop.f32.mrb[0].mxu0
    %1689 = vmatprep.mubr.bf16.mxu0 0
    %1690 = vmatmul.mubr.bf16.gmra.mrb[0].mxu0 %v1625
    %v1691 = vpop.f32.mrb[0].mxu0
    %v1692 = vadd.f32 0.0, %v1691
    %v1693 = vpop.f32.mrb[0].mxu0
    %v1694 = vpop.f32.mrb[0].mxu0
    %v1695 = vadd.f32 0.0, %v1694
    %v1696 = vpop.f32.mrb[0].mxu0
    %1697 = vmatprep.mubr.bf16.mxu0 0
    %1698 = vmatmul.mubr.bf16.gmra.mrb[0].mxu0 %v1628
    %v1699 = vpop.f32.mrb[0].mxu0
    %v1700 = vadd.f32 0.0, %v1699
    %v1701 = vpop.f32.mrb[0].mxu0
    %v1702 = vpop.f32.mrb[0].mxu0
    %v1703 = vadd.f32 0.0, %v1702
    %v1704 = vpop.f32.mrb[0].mxu0
    %1705 = vmatprep.mubr.bf16.mxu0 0
    %1706 = vmatmul.mubr.bf16.gmra.mrb[0].mxu0 %v1631
    %v1707 = vpop.f32.mrb[0].mxu0
    %v1708 = vadd.f32 0.0, %v1707
    %v1709 = vpop.f32.mrb[0].mxu0
    %v1710 = vpop.f32.mrb[0].mxu0
    %v1711 = vadd.f32 0.0, %v1710
    %v1712 = vpop.f32.mrb[0].mxu0
    %1713 = vmatprep.mubr.bf16.mxu0 0
    %1714 = vmatmul.mubr.bf16.gmra.mrb[0].mxu0 %v1634
    %v1715 = vpop.f32.mrb[0].mxu0
    %v1716 = vadd.f32 0.0, %v1715
    %v1717 = vpop.f32.mrb[0].mxu0
    %v1718 = vpop.f32.mrb[0].mxu0
    %v1719 = vadd.f32 0.0, %v1718
    %v1720 = vpop.f32.mrb[0].mxu0
    %1721 = vmatprep.mubr.bf16.mxu0 0
    %1722 = vmatmul.mubr.bf16.gmra.mrb[0].mxu0 %v1637
    %v1723 = vpop.f32.mrb[0].mxu0
    %v1724 = vadd.f32 0.0, %v1723
    %v1725 = vpop.f32.mrb[0].mxu0
    %v1726 = vpop.f32.mrb[0].mxu0
    %v1727 = vadd.f32 0.0, %v1726
    %v1728 = vpop.f32.mrb[0].mxu0
    %1729 = vmatprep.mubr.bf16.mxu0 0
    %1730 = vmatmul.mubr.bf16.gmra.mrb[0].mxu0 %v1640
    %v1731 = vpop.f32.mrb[0].mxu0
    %v1732 = vadd.f32 0.0, %v1731
    %v1733 = vpop.f32.mrb[0].mxu0
    %v1734 = vpop.f32.mrb[0].mxu0
    %v1735 = vadd.f32 0.0, %v1734
    %v1736 = vpop.f32.mrb[0].mxu0
    %1737 = vmatprep.mubr.bf16.mxu0 0
    %1738 = vmatmul.mubr.bf16.gmra.mrb[0].mxu0 %v1643
    %v1739 = vpop.f32.mrb[0].mxu0
    %v1740 = vadd.f32 0.0, %v1739
    %v1741 = vpop.f32.mrb[0].mxu0
    %v1742 = vpop.f32.mrb[0].mxu0
    %v1743 = vadd.f32 0.0, %v1742
    %v1744 = vpop.f32.mrb[0].mxu0
    %1745 = vdwg.mxu0
    %v1747 = vsel %vm670, %v1522, 0
    %v1750 = vsel %vm670, %v1523, 0
    %v1753 = vsel %vm670, %v1524, 0
    %v1756 = vsel %vm670, %v1525, 0
    %v1759 = vsel %vm670, %v1526, 0
    %v1762 = vsel %vm670, %v1527, 0
    %v1765 = vsel %vm670, %v1528, 0
    %v1768 = vsel %vm670, %v1529, 0
    %v1771 = vsel %vm1645, %v1530, 0
    %1773 = vmatprep.subr.bf16.mxu0 0
    %1774 = vmatpush1.bf16.msra.mxu0 %v1771
    %1775 = vmatprep.subr.bf16.mxu0 0
    %1776 = vmatpush1.bf16.msra.mxu0 0
    %1777 = vmatprep.subr.bf16.mxu0 0
    %1778 = vmatpush1.bf16.msra.mxu0 0
    %1779 = vmatprep.subr.bf16.mxu0 0
    %1780 = vmatpush1.bf16.msra.mxu0 0
    %1781 = vmatprep.subr.bf16.mxu0 0
    %1782 = vmatpush1.bf16.msra.mxu0 0
    %1783 = vmatprep.subr.bf16.mxu0 0
    %1784 = vmatpush1.bf16.msra.mxu0 0
    %1785 = vmatprep.subr.bf16.mxu0 0
    %1786 = vmatpush1.bf16.msra.mxu0 0
    %1787 = vmatprep.subr.bf16.mxu0 0
    %1788 = vmatpush1.bf16.msra.mxu0 0
    %1789 = vmatprep.subr.bf16.mxu0 0
    %1790 = vmatpush1.bf16.msra.mxu0 0
    %1791 = vmatprep.subr.bf16.mxu0 0
    %1792 = vmatpush1.bf16.msra.mxu0 0
    %1793 = vmatprep.subr.bf16.mxu0 0
    %1794 = vmatpush1.bf16.msra.mxu0 0
    %1795 = vmatprep.subr.bf16.mxu0 0
    %1796 = vmatpush1.bf16.msra.mxu0 0
    %1797 = vmatprep.subr.bf16.mxu0 0
    %1798 = vmatpush1.bf16.msra.mxu0 0
    %1799 = vmatprep.subr.bf16.mxu0 0
    %1800 = vmatpush1.bf16.msra.mxu0 0
    %1801 = vmatprep.subr.bf16.mxu0 0
    %1802 = vmatpush1.bf16.msra.mxu0 0
    %1803 = vmatprep.subr.bf16.mxu0 0
    %1804 = vmatpush1.bf16.msra.mxu0 0
    %1805 = vmatprep.mubr.bf16.mxu0 0
    %1806 = vmatmul.mubr.bf16.gmra.mrb[0].mxu0 %v1747
    %v1807 = vpop.f32.mrb[0].mxu0
    %v1808 = vadd.f32 %v1684, %v1807
    %v1809 = vpop.f32.mrb[0].mxu0
    %v1810 = vpop.f32.mrb[0].mxu0
    %v1811 = vadd.f32 %v1687, %v1810
    %v1812 = vpop.f32.mrb[0].mxu0
    %1813 = vmatprep.mubr.bf16.mxu0 0
    %1814 = vmatmul.mubr.bf16.gmra.mrb[0].mxu0 %v1750
    %v1815 = vpop.f32.mrb[0].mxu0
    %v1816 = vadd.f32 %v1692, %v1815
    %v1817 = vpop.f32.mrb[0].mxu0
    %v1818 = vpop.f32.mrb[0].mxu0
    %v1819 = vadd.f32 %v1695, %v1818
    %v1820 = vpop.f32.mrb[0].mxu0
    %1821 = vmatprep.mubr.bf16.mxu0 0
    %1822 = vmatmul.mubr.bf16.gmra.mrb[0].mxu0 %v1753
    %v1823 = vpop.f32.mrb[0].mxu0
    %v1824 = vadd.f32 %v1700, %v1823
    %v1825 = vpop.f32.mrb[0].mxu0
    %v1826 = vpop.f32.mrb[0].mxu0
    %v1827 = vadd.f32 %v1703, %v1826
    %v1828 = vpop.f32.mrb[0].mxu0
    %1829 = vmatprep.mubr.bf16.mxu0 0
    %1830 = vmatmul.mubr.bf16.gmra.mrb[0].mxu0 %v1756
    %v1831 = vpop.f32.mrb[0].mxu0
    %v1832 = vadd.f32 %v1708, %v1831
    %v1833 = vpop.f32.mrb[0].mxu0
    %v1834 = vpop.f32.mrb[0].mxu0
    %v1835 = vadd.f32 %v1711, %v1834
    %v1836 = vpop.f32.mrb[0].mxu0
    %1837 = vmatprep.mubr.bf16.mxu0 0
    %1838 = vmatmul.mubr.bf16.gmra.mrb[0].mxu0 %v1759
    %v1839 = vpop.f32.mrb[0].mxu0
    %v1840 = vadd.f32 %v1716, %v1839
    %v1841 = vpop.f32.mrb[0].mxu0
    %v1842 = vpop.f32.mrb[0].mxu0
    %v1843 = vadd.f32 %v1719, %v1842
    %v1844 = vpop.f32.mrb[0].mxu0
    %1845 = vmatprep.mubr.bf16.mxu0 0
    %1846 = vmatmul.mubr.bf16.gmra.mrb[0].mxu0 %v1762
    %v1847 = vpop.f32.mrb[0].mxu0
    %v1848 = vadd.f32 %v1724, %v1847
    %v1849 = vpop.f32.mrb[0].mxu0
    %v1850 = vpop.f32.mrb[0].mxu0
    %v1851 = vadd.f32 %v1727, %v1850
    %v1852 = vpop.f32.mrb[0].mxu0
    %1853 = vmatprep.mubr.bf16.mxu0 0
    %1854 = vmatmul.mubr.bf16.gmra.mrb[0].mxu0 %v1765
    %v1855 = vpop.f32.mrb[0].mxu0
    %v1856 = vadd.f32 %v1732, %v1855
    %v1857 = vpop.f32.mrb[0].mxu0
    %v1858 = vpop.f32.mrb[0].mxu0
    %v1859 = vadd.f32 %v1735, %v1858
    %v1860 = vpop.f32.mrb[0].mxu0
    %1861 = vmatprep.mubr.bf16.mxu0 0
    %1862 = vmatmul.mubr.bf16.gmra.mrb[0].mxu0 %v1768
    %v1863 = vpop.f32.mrb[0].mxu0
    %v1864 = vadd.f32 %v1740, %v1863
    %v1865 = vpop.f32.mrb[0].mxu0
    %v1866 = vpop.f32.mrb[0].mxu0
    %v1867 = vadd.f32 %v1743, %v1866
    %v1868 = vpop.f32.mrb[0].mxu0
    %1869 = vdwg.mxu0
    %v1870 = vrot.slane %v1248, 1
    %v1871 = vrot.slane %v1249, 1
    %v1872 = vrot.slane %v1250, 1
    %v1873 = vrot.slane %v1251, 1
    %v1874 = vrot.slane %v1252, 1
    %v1875 = vrot.slane %v1253, 1
    %v1876 = vrot.slane %v1254, 1
    %v1877 = vrot.slane %v1255, 1
    %v1878 = vrot.slane %v1256, 1
    %v1879 = vrot.slane %v1257, 1
    %v1880 = vrot.slane %v1258, 1
    %v1881 = vrot.slane %v1259, 1
    %v1882 = vrot.slane %v1260, 1
    %v1883 = vrot.slane %v1261, 1
    %v1884 = vrot.slane %v1262, 1
    %v1885 = vrot.slane %v1263, 1
    %vm1886 = vcmp.lt.s32.totalorder %v1265, 7
    %v1887 = vsel %vm1886, %v1884, %v1885
    %v1888 = vsel %vm1886, %v1883, %v1884
    %v1889 = vsel %vm1886, %v1882, %v1883
    %v1890 = vsel %vm1886, %v1881, %v1882
    %v1891 = vsel %vm1886, %v1880, %v1881
    %v1892 = vsel %vm1886, %v1879, %v1880
    %v1893 = vsel %vm1886, %v1878, %v1879
    %v1894 = vsel %vm1886, %v1877, %v1878
    %v1895 = vsel %vm1886, %v1876, %v1877
    %v1896 = vsel %vm1886, %v1875, %v1876
    %v1897 = vsel %vm1886, %v1874, %v1875
    %v1898 = vsel %vm1886, %v1873, %v1874
    %v1899 = vsel %vm1886, %v1872, %v1873
    %v1900 = vsel %vm1886, %v1871, %v1872
    %v1901 = vsel %vm1886, %v1870, %v1871
    %v1902 = vsel %vm1886, %v1885, %v1870
    %v1903 = vadd.s32 %v1281, 1
    %v1904 = vadd.s32 %v1282, 1
    %v1905 = vadd.s32 %v1283, 1
    %v1906 = vadd.s32 %v1284, 1
    %v1907 = vadd.s32 %v1285, 1
    %v1908 = vadd.s32 %v1286, 1
    %v1909 = vadd.s32 %v1287, 1
    %v1910 = vadd.s32 %v1288, 1
    %v1911 = vadd.s32 %v1289, 1
    %v1912 = vadd.s32 %v1290, 1
    %v1913 = vadd.s32 %v1291, 1
    %v1914 = vadd.s32 %v1292, 1
    %v1915 = vadd.s32 %v1293, 1
    %v1916 = vadd.s32 %v1294, 1
    %v1917 = vadd.s32 %v1295, 1
    %v1918 = vadd.s32 %v1296, 1
    %vm1919 = vcmp.ge.s32.totalorder %v1903, 0
    %vm1920 = vcmp.ge.s32.totalorder %v1904, 0
    %vm1921 = vcmp.ge.s32.totalorder %v1905, 0
    %vm1922 = vcmp.ge.s32.totalorder %v1906, 0
    %vm1923 = vcmp.ge.s32.totalorder %v1907, 0
    %vm1924 = vcmp.ge.s32.totalorder %v1908, 0
    %vm1925 = vcmp.ge.s32.totalorder %v1909, 0
    %vm1926 = vcmp.ge.s32.totalorder %v1910, 0
    %vm1927 = vcmp.ge.s32.totalorder %v1911, 0
    %vm1928 = vcmp.ge.s32.totalorder %v1912, 0
    %vm1929 = vcmp.ge.s32.totalorder %v1913, 0
    %vm1930 = vcmp.ge.s32.totalorder %v1914, 0
    %vm1931 = vcmp.ge.s32.totalorder %v1915, 0
    %vm1932 = vcmp.ge.s32.totalorder %v1916, 0
    %vm1933 = vcmp.ge.s32.totalorder %v1917, 0
    %vm1934 = vcmp.ge.s32.totalorder %v1918, 0
    %vm1935 = vmand %vm1410, %vm1919
    %vm1936 = vmand %vm1411, %vm1920
    %vm1937 = vmand %vm1412, %vm1921
    %vm1938 = vmand %vm1413, %vm1922
    %vm1939 = vmand %vm1414, %vm1923
    %vm1940 = vmand %vm1415, %vm1924
    %vm1941 = vmand %vm1416, %vm1925
    %vm1942 = vmand %vm1417, %vm1926
    %vm1943 = vmand %vm1418, %vm1927
    %vm1944 = vmand %vm1419, %vm1928
    %vm1945 = vmand %vm1420, %vm1929
    %vm1946 = vmand %vm1421, %vm1930
    %vm1947 = vmand %vm1422, %vm1931
    %vm1948 = vmand %vm1423, %vm1932
    %vm1949 = vmand %vm1424, %vm1933
    %vm1950 = vmand %vm1425, %vm1934
    %vm1951 = vcmp.le.s32.totalorder %v1903, 7
    %vm1952 = vcmp.le.s32.totalorder %v1904, 7
    %vm1953 = vcmp.le.s32.totalorder %v1905, 7
    %vm1954 = vcmp.le.s32.totalorder %v1906, 7
    %vm1955 = vcmp.le.s32.totalorder %v1907, 7
    %vm1956 = vcmp.le.s32.totalorder %v1908, 7
    %vm1957 = vcmp.le.s32.totalorder %v1909, 7
    %vm1958 = vcmp.le.s32.totalorder %v1910, 7
    %vm1959 = vcmp.le.s32.totalorder %v1911, 7
    %vm1960 = vcmp.le.s32.totalorder %v1912, 7
    %vm1961 = vcmp.le.s32.totalorder %v1913, 7
    %vm1962 = vcmp.le.s32.totalorder %v1914, 7
    %vm1963 = vcmp.le.s32.totalorder %v1915, 7
    %vm1964 = vcmp.le.s32.totalorder %v1916, 7
    %vm1965 = vcmp.le.s32.totalorder %v1917, 7
    %vm1966 = vcmp.le.s32.totalorder %v1918, 7
    %vm1967 = vmand %vm1935, %vm1951
    %vm1968 = vmand %vm1936, %vm1952
    %vm1969 = vmand %vm1937, %vm1953
    %vm1970 = vmand %vm1938, %vm1954
    %vm1971 = vmand %vm1939, %vm1955
    %vm1972 = vmand %vm1940, %vm1956
    %vm1973 = vmand %vm1941, %vm1957
    %vm1974 = vmand %vm1942, %vm1958
    %vm1975 = vmand %vm1943, %vm1959
    %vm1976 = vmand %vm1944, %vm1960
    %vm1977 = vmand %vm1945, %vm1961
    %vm1978 = vmand %vm1946, %vm1962
    %vm1979 = vmand %vm1947, %vm1963
    %vm1980 = vmand %vm1948, %vm1964
    %vm1981 = vmand %vm1949, %vm1965
    %vm1982 = vmand %vm1950, %vm1966
    %v1983 = vsel %vm1967, %v1902, 0.0
    %v1984 = vsel %vm1968, %v1901, 0.0
    %v1985 = vsel %vm1969, %v1900, 0.0
    %v1986 = vsel %vm1970, %v1899, 0.0
    %v1987 = vsel %vm1971, %v1898, 0.0
    %v1988 = vsel %vm1972, %v1897, 0.0
    %v1989 = vsel %vm1973, %v1896, 0.0
    %v1990 = vsel %vm1974, %v1895, 0.0
    %v1991 = vsel %vm1975, %v1894, 0.0
    %v1992 = vsel %vm1976, %v1893, 0.0
    %v1993 = vsel %vm1977, %v1892, 0.0
    %v1994 = vsel %vm1978, %v1891, 0.0
    %v1995 = vsel %vm1979, %v1890, 0.0
    %v1996 = vsel %vm1980, %v1889, 0.0
    %v1997 = vsel %vm1981, %v1888, 0.0
    %v1998 = vsel %vm1982, %v1887, 0.0
    %v1999 = vpack.c.bf16 %v1984, %v1983
    %v2000 = vpack.c.bf16 %v1986, %v1985
    %v2001 = vpack.c.bf16 %v1988, %v1987
    %v2002 = vpack.c.bf16 %v1990, %v1989
    %v2003 = vpack.c.bf16 %v1992, %v1991
    %v2004 = vpack.c.bf16 %v1994, %v1993
    %v2005 = vpack.c.bf16 %v1996, %v1995
    %v2006 = vpack.c.bf16 %v1998, %v1997
    %s2007 = scalar_lea.vmem %s4, 8
    %v2008 = vld [vmem:[%s2007] sm:$0xf]
    %v2010 = vsel %vm670, %v1999, 0
    %v2013 = vsel %vm670, %v2000, 0
    %v2016 = vsel %vm670, %v2001, 0
    %v2019 = vsel %vm670, %v2002, 0
    %v2022 = vsel %vm670, %v2003, 0
    %v2025 = vsel %vm670, %v2004, 0
    %v2028 = vsel %vm670, %v2005, 0
    %v2031 = vsel %vm670, %v2006, 0
    %v2034 = vsel %vm1645, %v2008, 0
    %2036 = vmatprep.subr.bf16.mxu0 0
    %2037 = vmatpush1.bf16.msra.mxu0 %v2034
    %2038 = vmatprep.subr.bf16.mxu0 0
    %2039 = vmatpush1.bf16.msra.mxu0 0
    %2040 = vmatprep.subr.bf16.mxu0 0
    %2041 = vmatpush1.bf16.msra.mxu0 0
    %2042 = vmatprep.subr.bf16.mxu0 0
    %2043 = vmatpush1.bf16.msra.mxu0 0
    %2044 = vmatprep.subr.bf16.mxu0 0
    %2045 = vmatpush1.bf16.msra.mxu0 0
    %2046 = vmatprep.subr.bf16.mxu0 0
    %2047 = vmatpush1.bf16.msra.mxu0 0
    %2048 = vmatprep.subr.bf16.mxu0 0
    %2049 = vmatpush1.bf16.msra.mxu0 0
    %2050 = vmatprep.subr.bf16.mxu0 0
    %2051 = vmatpush1.bf16.msra.mxu0 0
    %2052 = vmatprep.subr.bf16.mxu0 0
    %2053 = vmatpush1.bf16.msra.mxu0 0
    %2054 = vmatprep.subr.bf16.mxu0 0
    %2055 = vmatpush1.bf16.msra.mxu0 0
    %2056 = vmatprep.subr.bf16.mxu0 0
    %2057 = vmatpush1.bf16.msra.mxu0 0
    %2058 = vmatprep.subr.bf16.mxu0 0
    %2059 = vmatpush1.bf16.msra.mxu0 0
    %2060 = vmatprep.subr.bf16.mxu0 0
    %2061 = vmatpush1.bf16.msra.mxu0 0
    %2062 = vmatprep.subr.bf16.mxu0 0
    %2063 = vmatpush1.bf16.msra.mxu0 0
    %2064 = vmatprep.subr.bf16.mxu0 0
    %2065 = vmatpush1.bf16.msra.mxu0 0
    %2066 = vmatprep.subr.bf16.mxu0 0
    %2067 = vmatpush1.bf16.msra.mxu0 0
    %2068 = vmatprep.mubr.bf16.mxu0 0
    %2069 = vmatmul.mubr.bf16.gmra.mrb[0].mxu0 %v2010
    %v2070 = vpop.f32.mrb[0].mxu0
    %v2071 = vadd.f32 0.0, %v2070
    %v2072 = vpop.f32.mrb[0].mxu0
    %v2073 = vpop.f32.mrb[0].mxu0
    %v2074 = vadd.f32 0.0, %v2073
    %v2075 = vpop.f32.mrb[0].mxu0
    %2076 = vmatprep.mubr.bf16.mxu0 0
    %2077 = vmatmul.mubr.bf16.gmra.mrb[0].mxu0 %v2013
    %v2078 = vpop.f32.mrb[0].mxu0
    %v2079 = vadd.f32 0.0, %v2078
    %v2080 = vpop.f32.mrb[0].mxu0
    %v2081 = vpop.f32.mrb[0].mxu0
    %v2082 = vadd.f32 0.0, %v2081
    %v2083 = vpop.f32.mrb[0].mxu0
    %2084 = vmatprep.mubr.bf16.mxu0 0
    %2085 = vmatmul.mubr.bf16.gmra.mrb[0].mxu0 %v2016
    %v2086 = vpop.f32.mrb[0].mxu0
    %v2087 = vadd.f32 0.0, %v2086
    %v2088 = vpop.f32.mrb[0].mxu0
    %v2089 = vpop.f32.mrb[0].mxu0
    %v2090 = vadd.f32 0.0, %v2089
    %v2091 = vpop.f32.mrb[0].mxu0
    %2092 = vmatprep.mubr.bf16.mxu0 0
    %2093 = vmatmul.mubr.bf16.gmra.mrb[0].mxu0 %v2019
    %v2094 = vpop.f32.mrb[0].mxu0
    %v2095 = vadd.f32 0.0, %v2094
    %v2096 = vpop.f32.mrb[0].mxu0
    %v2097 = vpop.f32.mrb[0].mxu0
    %v2098 = vadd.f32 0.0, %v2097
    %v2099 = vpop.f32.mrb[0].mxu0
    %2100 = vmatprep.mubr.bf16.mxu0 0
    %2101 = vmatmul.mubr.bf16.gmra.mrb[0].mxu0 %v2022
    %v2102 = vpop.f32.mrb[0].mxu0
    %v2103 = vadd.f32 0.0, %v2102
    %v2104 = vpop.f32.mrb[0].mxu0
    %v2105 = vpop.f32.mrb[0].mxu0
    %v2106 = vadd.f32 0.0, %v2105
    %v2107 = vpop.f32.mrb[0].mxu0
    %2108 = vmatprep.mubr.bf16.mxu0 0
    %2109 = vmatmul.mubr.bf16.gmra.mrb[0].mxu0 %v2025
    %v2110 = vpop.f32.mrb[0].mxu0
    %v2111 = vadd.f32 0.0, %v2110
    %v2112 = vpop.f32.mrb[0].mxu0
    %v2113 = vpop.f32.mrb[0].mxu0
    %v2114 = vadd.f32 0.0, %v2113
    %v2115 = vpop.f32.mrb[0].mxu0
    %2116 = vmatprep.mubr.bf16.mxu0 0
    %2117 = vmatmul.mubr.bf16.gmra.mrb[0].mxu0 %v2028
    %v2118 = vpop.f32.mrb[0].mxu0
    %v2119 = vadd.f32 0.0, %v2118
    %v2120 = vpop.f32.mrb[0].mxu0
    %v2121 = vpop.f32.mrb[0].mxu0
    %v2122 = vadd.f32 0.0, %v2121
    %v2123 = vpop.f32.mrb[0].mxu0
    %2124 = vmatprep.mubr.bf16.mxu0 0
    %2125 = vmatmul.mubr.bf16.gmra.mrb[0].mxu0 %v2031
    %v2126 = vpop.f32.mrb[0].mxu0
    %v2127 = vadd.f32 0.0, %v2126
    %v2128 = vpop.f32.mrb[0].mxu0
    %v2129 = vpop.f32.mrb[0].mxu0
    %v2130 = vadd.f32 0.0, %v2129
    %v2131 = vpop.f32.mrb[0].mxu0
    %2132 = vdwg.mxu0
    %v2133 = vadd.f32 %v1808, %v2071
    %v2134 = vadd.f32 %v1811, %v2074
    %v2135 = vadd.f32 %v1816, %v2079
    %v2136 = vadd.f32 %v1819, %v2082
    %v2137 = vadd.f32 %v1824, %v2087
    %v2138 = vadd.f32 %v1827, %v2090
    %v2139 = vadd.f32 %v1832, %v2095
    %v2140 = vadd.f32 %v1835, %v2098
    %v2141 = vadd.f32 %v1840, %v2103
    %v2142 = vadd.f32 %v1843, %v2106
    %v2143 = vadd.f32 %v1848, %v2111
    %v2144 = vadd.f32 %v1851, %v2114
    %v2145 = vadd.f32 %v1856, %v2119
    %v2146 = vadd.f32 %v1859, %v2122
    %v2147 = vadd.f32 %v1864, %v2127
    %v2148 = vadd.f32 %v1867, %v2130
    %vm2149 = vcmp.ge.s32.totalorder %v1313, 0
    %vm2150 = vcmp.ge.s32.totalorder %v1314, 0
    %vm2151 = vcmp.ge.s32.totalorder %v1315, 0
    %vm2152 = vcmp.ge.s32.totalorder %v1316, 0
    %vm2153 = vcmp.ge.s32.totalorder %v1317, 0
    %vm2154 = vcmp.ge.s32.totalorder %v1318, 0
    %vm2155 = vcmp.ge.s32.totalorder %v1319, 0
    %vm2156 = vcmp.ge.s32.totalorder %v1320, 0
    %vm2157 = vcmp.ge.s32.totalorder %v1321, 0
    %vm2158 = vcmp.ge.s32.totalorder %v1322, 0
    %vm2159 = vcmp.ge.s32.totalorder %v1323, 0
    %vm2160 = vcmp.ge.s32.totalorder %v1324, 0
    %vm2161 = vcmp.ge.s32.totalorder %v1325, 0
    %vm2162 = vcmp.ge.s32.totalorder %v1326, 0
    %vm2163 = vcmp.ge.s32.totalorder %v1327, 0
    %vm2164 = vcmp.ge.s32.totalorder %v1328, 0
    %vm2165 = vcmp.le.s32.totalorder %v1313, 7
    %vm2166 = vcmp.le.s32.totalorder %v1314, 7
    %vm2167 = vcmp.le.s32.totalorder %v1315, 7
    %vm2168 = vcmp.le.s32.totalorder %v1316, 7
    %vm2169 = vcmp.le.s32.totalorder %v1317, 7
    %vm2170 = vcmp.le.s32.totalorder %v1318, 7
    %vm2171 = vcmp.le.s32.totalorder %v1319, 7
    %vm2172 = vcmp.le.s32.totalorder %v1320, 7
    %vm2173 = vcmp.le.s32.totalorder %v1321, 7
    %vm2174 = vcmp.le.s32.totalorder %v1322, 7
    %vm2175 = vcmp.le.s32.totalorder %v1323, 7
    %vm2176 = vcmp.le.s32.totalorder %v1324, 7
    %vm2177 = vcmp.le.s32.totalorder %v1325, 7
    %vm2178 = vcmp.le.s32.totalorder %v1326, 7
    %vm2179 = vcmp.le.s32.totalorder %v1327, 7
    %vm2180 = vcmp.le.s32.totalorder %v1328, 7
    %vm2181 = vmand %vm2149, %vm2165
    %vm2182 = vmand %vm2150, %vm2166
    %vm2183 = vmand %vm2151, %vm2167
    %vm2184 = vmand %vm2152, %vm2168
    %vm2185 = vmand %vm2153, %vm2169
    %vm2186 = vmand %vm2154, %vm2170
    %vm2187 = vmand %vm2155, %vm2171
    %vm2188 = vmand %vm2156, %vm2172
    %vm2189 = vmand %vm2157, %vm2173
    %vm2190 = vmand %vm2158, %vm2174
    %vm2191 = vmand %vm2159, %vm2175
    %vm2192 = vmand %vm2160, %vm2176
    %vm2193 = vmand %vm2161, %vm2177
    %vm2194 = vmand %vm2162, %vm2178
    %vm2195 = vmand %vm2163, %vm2179
    %vm2196 = vmand %vm2164, %vm2180
    %vm2197 = vmand %vm2181, %vm1442
    %vm2198 = vmand %vm2182, %vm1443
    %vm2199 = vmand %vm2183, %vm1444
    %vm2200 = vmand %vm2184, %vm1445
    %vm2201 = vmand %vm2185, %vm1446
    %vm2202 = vmand %vm2186, %vm1447
    %vm2203 = vmand %vm2187, %vm1448
    %vm2204 = vmand %vm2188, %vm1449
    %vm2205 = vmand %vm2189, %vm1450
    %vm2206 = vmand %vm2190, %vm1451
    %vm2207 = vmand %vm2191, %vm1452
    %vm2208 = vmand %vm2192, %vm1453
    %vm2209 = vmand %vm2193, %vm1454
    %vm2210 = vmand %vm2194, %vm1455
    %vm2211 = vmand %vm2195, %vm1456
    %vm2212 = vmand %vm2196, %vm1457
    %vm2213 = vmand %vm2197, %vm1474
    %vm2214 = vmand %vm2198, %vm1475
    %vm2215 = vmand %vm2199, %vm1476
    %vm2216 = vmand %vm2200, %vm1477
    %vm2217 = vmand %vm2201, %vm1478
    %vm2218 = vmand %vm2202, %vm1479
    %vm2219 = vmand %vm2203, %vm1480
    %vm2220 = vmand %vm2204, %vm1481
    %vm2221 = vmand %vm2205, %vm1482
    %vm2222 = vmand %vm2206, %vm1483
    %vm2223 = vmand %vm2207, %vm1484
    %vm2224 = vmand %vm2208, %vm1485
    %vm2225 = vmand %vm2209, %vm1486
    %vm2226 = vmand %vm2210, %vm1487
    %vm2227 = vmand %vm2211, %vm1488
    %vm2228 = vmand %vm2212, %vm1489
    %v2229 = vsel %vm2213, %v1361, 0.0
    %v2230 = vsel %vm2214, %v1360, 0.0
    %v2231 = vsel %vm2215, %v1359, 0.0
    %v2232 = vsel %vm2216, %v1358, 0.0
    %v2233 = vsel %vm2217, %v1357, 0.0
    %v2234 = vsel %vm2218, %v1356, 0.0
    %v2235 = vsel %vm2219, %v1355, 0.0
    %v2236 = vsel %vm2220, %v1354, 0.0
    %v2237 = vsel %vm2221, %v1353, 0.0
    %v2238 = vsel %vm2222, %v1352, 0.0
    %v2239 = vsel %vm2223, %v1351, 0.0
    %v2240 = vsel %vm2224, %v1350, 0.0
    %v2241 = vsel %vm2225, %v1349, 0.0
    %v2242 = vsel %vm2226, %v1348, 0.0
    %v2243 = vsel %vm2227, %v1347, 0.0
    %v2244 = vsel %vm2228, %v1346, 0.0
    %v2245 = vpack.c.bf16 %v2230, %v2229
    %v2246 = vpack.c.bf16 %v2232, %v2231
    %v2247 = vpack.c.bf16 %v2234, %v2233
    %v2248 = vpack.c.bf16 %v2236, %v2235
    %v2249 = vpack.c.bf16 %v2238, %v2237
    %v2250 = vpack.c.bf16 %v2240, %v2239
    %v2251 = vpack.c.bf16 %v2242, %v2241
    %v2252 = vpack.c.bf16 %v2244, %v2243
    %s2253 = scalar_lea.vmem %s4, 12
    %v2254 = vld [vmem:[%s2253] sm:$0xf]
    %v2256 = vsel %vm670, %v2245, 0
    %v2259 = vsel %vm670, %v2246, 0
    %v2262 = vsel %vm670, %v2247, 0
    %v2265 = vsel %vm670, %v2248, 0
    %v2268 = vsel %vm670, %v2249, 0
    %v2271 = vsel %vm670, %v2250, 0
    %v2274 = vsel %vm670, %v2251, 0
    %v2277 = vsel %vm670, %v2252, 0
    %v2280 = vsel %vm1645, %v2254, 0
    %2282 = vmatprep.subr.bf16.mxu0 0
    %2283 = vmatpush1.bf16.msra.mxu0 %v2280
    %2284 = vmatprep.subr.bf16.mxu0 0
    %2285 = vmatpush1.bf16.msra.mxu0 0
    %2286 = vmatprep.subr.bf16.mxu0 0
    %2287 = vmatpush1.bf16.msra.mxu0 0
    %2288 = vmatprep.subr.bf16.mxu0 0
    %2289 = vmatpush1.bf16.msra.mxu0 0
    %2290 = vmatprep.subr.bf16.mxu0 0
    %2291 = vmatpush1.bf16.msra.mxu0 0
    %2292 = vmatprep.subr.bf16.mxu0 0
    %2293 = vmatpush1.bf16.msra.mxu0 0
    %2294 = vmatprep.subr.bf16.mxu0 0
    %2295 = vmatpush1.bf16.msra.mxu0 0
    %2296 = vmatprep.subr.bf16.mxu0 0
    %2297 = vmatpush1.bf16.msra.mxu0 0
    %2298 = vmatprep.subr.bf16.mxu0 0
    %2299 = vmatpush1.bf16.msra.mxu0 0
    %2300 = vmatprep.subr.bf16.mxu0 0
    %2301 = vmatpush1.bf16.msra.mxu0 0
    %2302 = vmatprep.subr.bf16.mxu0 0
    %2303 = vmatpush1.bf16.msra.mxu0 0
    %2304 = vmatprep.subr.bf16.mxu0 0
    %2305 = vmatpush1.bf16.msra.mxu0 0
    %2306 = vmatprep.subr.bf16.mxu0 0
    %2307 = vmatpush1.bf16.msra.mxu0 0
    %2308 = vmatprep.subr.bf16.mxu0 0
    %2309 = vmatpush1.bf16.msra.mxu0 0
    %2310 = vmatprep.subr.bf16.mxu0 0
    %2311 = vmatpush1.bf16.msra.mxu0 0
    %2312 = vmatprep.subr.bf16.mxu0 0
    %2313 = vmatpush1.bf16.msra.mxu0 0
    %2314 = vmatprep.mubr.bf16.mxu0 0
    %2315 = vmatmul.mubr.bf16.gmra.mrb[0].mxu0 %v2256
    %v2316 = vpop.f32.mrb[0].mxu0
    %v2317 = vadd.f32 0.0, %v2316
    %v2318 = vpop.f32.mrb[0].mxu0
    %v2319 = vpop.f32.mrb[0].mxu0
    %v2320 = vadd.f32 0.0, %v2319
    %v2321 = vpop.f32.mrb[0].mxu0
    %2322 = vmatprep.mubr.bf16.mxu0 0
    %2323 = vmatmul.mubr.bf16.gmra.mrb[0].mxu0 %v2259
    %v2324 = vpop.f32.mrb[0].mxu0
    %v2325 = vadd.f32 0.0, %v2324
    %v2326 = vpop.f32.mrb[0].mxu0
    %v2327 = vpop.f32.mrb[0].mxu0
    %v2328 = vadd.f32 0.0, %v2327
    %v2329 = vpop.f32.mrb[0].mxu0
    %2330 = vmatprep.mubr.bf16.mxu0 0
    %2331 = vmatmul.mubr.bf16.gmra.mrb[0].mxu0 %v2262
    %v2332 = vpop.f32.mrb[0].mxu0
    %v2333 = vadd.f32 0.0, %v2332
    %v2334 = vpop.f32.mrb[0].mxu0
    %v2335 = vpop.f32.mrb[0].mxu0
    %v2336 = vadd.f32 0.0, %v2335
    %v2337 = vpop.f32.mrb[0].mxu0
    %2338 = vmatprep.mubr.bf16.mxu0 0
    %2339 = vmatmul.mubr.bf16.gmra.mrb[0].mxu0 %v2265
    %v2340 = vpop.f32.mrb[0].mxu0
    %v2341 = vadd.f32 0.0, %v2340
    %v2342 = vpop.f32.mrb[0].mxu0
    %v2343 = vpop.f32.mrb[0].mxu0
    %v2344 = vadd.f32 0.0, %v2343
    %v2345 = vpop.f32.mrb[0].mxu0
    %2346 = vmatprep.mubr.bf16.mxu0 0
    %2347 = vmatmul.mubr.bf16.gmra.mrb[0].mxu0 %v2268
    %v2348 = vpop.f32.mrb[0].mxu0
    %v2349 = vadd.f32 0.0, %v2348
    %v2350 = vpop.f32.mrb[0].mxu0
    %v2351 = vpop.f32.mrb[0].mxu0
    %v2352 = vadd.f32 0.0, %v2351
    %v2353 = vpop.f32.mrb[0].mxu0
    %2354 = vmatprep.mubr.bf16.mxu0 0
    %2355 = vmatmul.mubr.bf16.gmra.mrb[0].mxu0 %v2271
    %v2356 = vpop.f32.mrb[0].mxu0
    %v2357 = vadd.f32 0.0, %v2356
    %v2358 = vpop.f32.mrb[0].mxu0
    %v2359 = vpop.f32.mrb[0].mxu0
    %v2360 = vadd.f32 0.0, %v2359
    %v2361 = vpop.f32.mrb[0].mxu0
    %2362 = vmatprep.mubr.bf16.mxu0 0
    %2363 = vmatmul.mubr.bf16.gmra.mrb[0].mxu0 %v2274
    %v2364 = vpop.f32.mrb[0].mxu0
    %v2365 = vadd.f32 0.0, %v2364
    %v2366 = vpop.f32.mrb[0].mxu0
    %v2367 = vpop.f32.mrb[0].mxu0
    %v2368 = vadd.f32 0.0, %v2367
    %v2369 = vpop.f32.mrb[0].mxu0
    %2370 = vmatprep.mubr.bf16.mxu0 0
    %2371 = vmatmul.mubr.bf16.gmra.mrb[0].mxu0 %v2277
    %v2372 = vpop.f32.mrb[0].mxu0
    %v2373 = vadd.f32 0.0, %v2372
    %v2374 = vpop.f32.mrb[0].mxu0
    %v2375 = vpop.f32.mrb[0].mxu0
    %v2376 = vadd.f32 0.0, %v2375
    %v2377 = vpop.f32.mrb[0].mxu0
    %2378 = vdwg.mxu0
    %v2379 = vadd.f32 %v2133, %v2317
    %v2380 = vadd.f32 %v2134, %v2320
    %v2381 = vadd.f32 %v2135, %v2325
    %v2382 = vadd.f32 %v2136, %v2328
    %v2383 = vadd.f32 %v2137, %v2333
    %v2384 = vadd.f32 %v2138, %v2336
    %v2385 = vadd.f32 %v2139, %v2341
    %v2386 = vadd.f32 %v2140, %v2344
    %v2387 = vadd.f32 %v2141, %v2349
    %v2388 = vadd.f32 %v2142, %v2352
    %v2389 = vadd.f32 %v2143, %v2357
    %v2390 = vadd.f32 %v2144, %v2360
    %v2391 = vadd.f32 %v2145, %v2365
    %v2392 = vadd.f32 %v2146, %v2368
    %v2393 = vadd.f32 %v2147, %v2373
    %v2394 = vadd.f32 %v2148, %v2376
    %v2395 = vpack.c.bf16 %v1249, %v1248
    %v2396 = vpack.c.bf16 %v1251, %v1250
    %v2397 = vpack.c.bf16 %v1253, %v1252
    %v2398 = vpack.c.bf16 %v1255, %v1254
    %v2399 = vpack.c.bf16 %v1257, %v1256
    %v2400 = vpack.c.bf16 %v1259, %v1258
    %v2401 = vpack.c.bf16 %v1261, %v1260
    %v2402 = vpack.c.bf16 %v1263, %v1262
    %s2403 = scalar_lea.vmem %s4, 16
    %v2404 = vld [vmem:[%s2403] sm:$0xf]
    %v2406 = vsel %vm670, %v2395, 0
    %v2409 = vsel %vm670, %v2396, 0
    %v2412 = vsel %vm670, %v2397, 0
    %v2415 = vsel %vm670, %v2398, 0
    %v2418 = vsel %vm670, %v2399, 0
    %v2421 = vsel %vm670, %v2400, 0
    %v2424 = vsel %vm670, %v2401, 0
    %v2427 = vsel %vm670, %v2402, 0
    %v2430 = vsel %vm1645, %v2404, 0
    %2432 = vmatprep.subr.bf16.mxu0 0
    %2433 = vmatpush1.bf16.msra.mxu0 %v2430
    %2434 = vmatprep.subr.bf16.mxu0 0
    %2435 = vmatpush1.bf16.msra.mxu0 0
    %2436 = vmatprep.subr.bf16.mxu0 0
    %2437 = vmatpush1.bf16.msra.mxu0 0
    %2438 = vmatprep.subr.bf16.mxu0 0
    %2439 = vmatpush1.bf16.msra.mxu0 0
    %2440 = vmatprep.subr.bf16.mxu0 0
    %2441 = vmatpush1.bf16.msra.mxu0 0
    %2442 = vmatprep.subr.bf16.mxu0 0
    %2443 = vmatpush1.bf16.msra.mxu0 0
    %2444 = vmatprep.subr.bf16.mxu0 0
    %2445 = vmatpush1.bf16.msra.mxu0 0
    %2446 = vmatprep.subr.bf16.mxu0 0
    %2447 = vmatpush1.bf16.msra.mxu0 0
    %2448 = vmatprep.subr.bf16.mxu0 0
    %2449 = vmatpush1.bf16.msra.mxu0 0
    %2450 = vmatprep.subr.bf16.mxu0 0
    %2451 = vmatpush1.bf16.msra.mxu0 0
    %2452 = vmatprep.subr.bf16.mxu0 0
    %2453 = vmatpush1.bf16.msra.mxu0 0
    %2454 = vmatprep.subr.bf16.mxu0 0
    %2455 = vmatpush1.bf16.msra.mxu0 0
    %2456 = vmatprep.subr.bf16.mxu0 0
    %2457 = vmatpush1.bf16.msra.mxu0 0
    %2458 = vmatprep.subr.bf16.mxu0 0
    %2459 = vmatpush1.bf16.msra.mxu0 0
    %2460 = vmatprep.subr.bf16.mxu0 0
    %2461 = vmatpush1.bf16.msra.mxu0 0
    %2462 = vmatprep.subr.bf16.mxu0 0
    %2463 = vmatpush1.bf16.msra.mxu0 0
    %2464 = vmatprep.mubr.bf16.mxu0 0
    %2465 = vmatmul.mubr.bf16.gmra.mrb[0].mxu0 %v2406
    %v2466 = vpop.f32.mrb[0].mxu0
    %v2467 = vadd.f32 0.0, %v2466
    %v2468 = vpop.f32.mrb[0].mxu0
    %v2469 = vpop.f32.mrb[0].mxu0
    %v2470 = vadd.f32 0.0, %v2469
    %v2471 = vpop.f32.mrb[0].mxu0
    %2472 = vmatprep.mubr.bf16.mxu0 0
    %2473 = vmatmul.mubr.bf16.gmra.mrb[0].mxu0 %v2409
    %v2474 = vpop.f32.mrb[0].mxu0
    %v2475 = vadd.f32 0.0, %v2474
    %v2476 = vpop.f32.mrb[0].mxu0
    %v2477 = vpop.f32.mrb[0].mxu0
    %v2478 = vadd.f32 0.0, %v2477
    %v2479 = vpop.f32.mrb[0].mxu0
    %2480 = vmatprep.mubr.bf16.mxu0 0
    %2481 = vmatmul.mubr.bf16.gmra.mrb[0].mxu0 %v2412
    %v2482 = vpop.f32.mrb[0].mxu0
    %v2483 = vadd.f32 0.0, %v2482
    %v2484 = vpop.f32.mrb[0].mxu0
    %v2485 = vpop.f32.mrb[0].mxu0
    %v2486 = vadd.f32 0.0, %v2485
    %v2487 = vpop.f32.mrb[0].mxu0
    %2488 = vmatprep.mubr.bf16.mxu0 0
    %2489 = vmatmul.mubr.bf16.gmra.mrb[0].mxu0 %v2415
    %v2490 = vpop.f32.mrb[0].mxu0
    %v2491 = vadd.f32 0.0, %v2490
    %v2492 = vpop.f32.mrb[0].mxu0
    %v2493 = vpop.f32.mrb[0].mxu0
    %v2494 = vadd.f32 0.0, %v2493
    %v2495 = vpop.f32.mrb[0].mxu0
    %2496 = vmatprep.mubr.bf16.mxu0 0
    %2497 = vmatmul.mubr.bf16.gmra.mrb[0].mxu0 %v2418
    %v2498 = vpop.f32.mrb[0].mxu0
    %v2499 = vadd.f32 0.0, %v2498
    %v2500 = vpop.f32.mrb[0].mxu0
    %v2501 = vpop.f32.mrb[0].mxu0
    %v2502 = vadd.f32 0.0, %v2501
    %v2503 = vpop.f32.mrb[0].mxu0
    %2504 = vmatprep.mubr.bf16.mxu0 0
    %2505 = vmatmul.mubr.bf16.gmra.mrb[0].mxu0 %v2421
    %v2506 = vpop.f32.mrb[0].mxu0
    %v2507 = vadd.f32 0.0, %v2506
    %v2508 = vpop.f32.mrb[0].mxu0
    %v2509 = vpop.f32.mrb[0].mxu0
    %v2510 = vadd.f32 0.0, %v2509
    %v2511 = vpop.f32.mrb[0].mxu0
    %2512 = vmatprep.mubr.bf16.mxu0 0
    %2513 = vmatmul.mubr.bf16.gmra.mrb[0].mxu0 %v2424
    %v2514 = vpop.f32.mrb[0].mxu0
    %v2515 = vadd.f32 0.0, %v2514
    %v2516 = vpop.f32.mrb[0].mxu0
    %v2517 = vpop.f32.mrb[0].mxu0
    %v2518 = vadd.f32 0.0, %v2517
    %v2519 = vpop.f32.mrb[0].mxu0
    %2520 = vmatprep.mubr.bf16.mxu0 0
    %2521 = vmatmul.mubr.bf16.gmra.mrb[0].mxu0 %v2427
    %v2522 = vpop.f32.mrb[0].mxu0
    %v2523 = vadd.f32 0.0, %v2522
    %v2524 = vpop.f32.mrb[0].mxu0
    %v2525 = vpop.f32.mrb[0].mxu0
    %v2526 = vadd.f32 0.0, %v2525
    %v2527 = vpop.f32.mrb[0].mxu0
    %2528 = vdwg.mxu0
    %v2529 = vadd.f32 %v2379, %v2467
    %v2530 = vadd.f32 %v2380, %v2470
    %v2531 = vadd.f32 %v2381, %v2475
    %v2532 = vadd.f32 %v2382, %v2478
    %v2533 = vadd.f32 %v2383, %v2483
    %v2534 = vadd.f32 %v2384, %v2486
    %v2535 = vadd.f32 %v2385, %v2491
    %v2536 = vadd.f32 %v2386, %v2494
    %v2537 = vadd.f32 %v2387, %v2499
    %v2538 = vadd.f32 %v2388, %v2502
    %v2539 = vadd.f32 %v2389, %v2507
    %v2540 = vadd.f32 %v2390, %v2510
    %v2541 = vadd.f32 %v2391, %v2515
    %v2542 = vadd.f32 %v2392, %v2518
    %v2543 = vadd.f32 %v2393, %v2523
    %v2544 = vadd.f32 %v2394, %v2526
    %vm2545 = vmand %vm2181, %vm1919
    %vm2546 = vmand %vm2182, %vm1920
    %vm2547 = vmand %vm2183, %vm1921
    %vm2548 = vmand %vm2184, %vm1922
    %vm2549 = vmand %vm2185, %vm1923
    %vm2550 = vmand %vm2186, %vm1924
    %vm2551 = vmand %vm2187, %vm1925
    %vm2552 = vmand %vm2188, %vm1926
    %vm2553 = vmand %vm2189, %vm1927
    %vm2554 = vmand %vm2190, %vm1928
    %vm2555 = vmand %vm2191, %vm1929
    %vm2556 = vmand %vm2192, %vm1930
    %vm2557 = vmand %vm2193, %vm1931
    %vm2558 = vmand %vm2194, %vm1932
    %vm2559 = vmand %vm2195, %vm1933
    %vm2560 = vmand %vm2196, %vm1934
    %vm2561 = vmand %vm2545, %vm1951
    %vm2562 = vmand %vm2546, %vm1952
    %vm2563 = vmand %vm2547, %vm1953
    %vm2564 = vmand %vm2548, %vm1954
    %vm2565 = vmand %vm2549, %vm1955
    %vm2566 = vmand %vm2550, %vm1956
    %vm2567 = vmand %vm2551, %vm1957
    %vm2568 = vmand %vm2552, %vm1958
    %vm2569 = vmand %vm2553, %vm1959
    %vm2570 = vmand %vm2554, %vm1960
    %vm2571 = vmand %vm2555, %vm1961
    %vm2572 = vmand %vm2556, %vm1962
    %vm2573 = vmand %vm2557, %vm1963
    %vm2574 = vmand %vm2558, %vm1964
    %vm2575 = vmand %vm2559, %vm1965
    %vm2576 = vmand %vm2560, %vm1966
    %v2577 = vsel %vm2561, %v1901, 0.0
    %v2578 = vsel %vm2562, %v1900, 0.0
    %v2579 = vsel %vm2563, %v1899, 0.0
    %v2580 = vsel %vm2564, %v1898, 0.0
    %v2581 = vsel %vm2565, %v1897, 0.0
    %v2582 = vsel %vm2566, %v1896, 0.0
    %v2583 = vsel %vm2567, %v1895, 0.0
    %v2584 = vsel %vm2568, %v1894, 0.0
    %v2585 = vsel %vm2569, %v1893, 0.0
    %v2586 = vsel %vm2570, %v1892, 0.0
    %v2587 = vsel %vm2571, %v1891, 0.0
    %v2588 = vsel %vm2572, %v1890, 0.0
    %v2589 = vsel %vm2573, %v1889, 0.0
    %v2590 = vsel %vm2574, %v1888, 0.0
    %v2591 = vsel %vm2575, %v1887, 0.0
    %v2592 = vsel %vm2576, %v1902, 0.0
    %v2593 = vpack.c.bf16 %v2578, %v2577
    %v2594 = vpack.c.bf16 %v2580, %v2579
    %v2595 = vpack.c.bf16 %v2582, %v2581
    %v2596 = vpack.c.bf16 %v2584, %v2583
    %v2597 = vpack.c.bf16 %v2586, %v2585
    %v2598 = vpack.c.bf16 %v2588, %v2587
    %v2599 = vpack.c.bf16 %v2590, %v2589
    %v2600 = vpack.c.bf16 %v2592, %v2591
    %s2601 = scalar_lea.vmem %s4, 20
    %v2602 = vld [vmem:[%s2601] sm:$0xf]
    %v2604 = vsel %vm670, %v2593, 0
    %v2607 = vsel %vm670, %v2594, 0
    %v2610 = vsel %vm670, %v2595, 0
    %v2613 = vsel %vm670, %v2596, 0
    %v2616 = vsel %vm670, %v2597, 0
    %v2619 = vsel %vm670, %v2598, 0
    %v2622 = vsel %vm670, %v2599, 0
    %v2625 = vsel %vm670, %v2600, 0
    %v2628 = vsel %vm1645, %v2602, 0
    %2630 = vmatprep.subr.bf16.mxu0 0
    %2631 = vmatpush1.bf16.msra.mxu0 %v2628
    %2632 = vmatprep.subr.bf16.mxu0 0
    %2633 = vmatpush1.bf16.msra.mxu0 0
    %2634 = vmatprep.subr.bf16.mxu0 0
    %2635 = vmatpush1.bf16.msra.mxu0 0
    %2636 = vmatprep.subr.bf16.mxu0 0
    %2637 = vmatpush1.bf16.msra.mxu0 0
    %2638 = vmatprep.subr.bf16.mxu0 0
    %2639 = vmatpush1.bf16.msra.mxu0 0
    %2640 = vmatprep.subr.bf16.mxu0 0
    %2641 = vmatpush1.bf16.msra.mxu0 0
    %2642 = vmatprep.subr.bf16.mxu0 0
    %2643 = vmatpush1.bf16.msra.mxu0 0
    %2644 = vmatprep.subr.bf16.mxu0 0
    %2645 = vmatpush1.bf16.msra.mxu0 0
    %2646 = vmatprep.subr.bf16.mxu0 0
    %2647 = vmatpush1.bf16.msra.mxu0 0
    %2648 = vmatprep.subr.bf16.mxu0 0
    %2649 = vmatpush1.bf16.msra.mxu0 0
    %2650 = vmatprep.subr.bf16.mxu0 0
    %2651 = vmatpush1.bf16.msra.mxu0 0
    %2652 = vmatprep.subr.bf16.mxu0 0
    %2653 = vmatpush1.bf16.msra.mxu0 0
    %2654 = vmatprep.subr.bf16.mxu0 0
    %2655 = vmatpush1.bf16.msra.mxu0 0
    %2656 = vmatprep.subr.bf16.mxu0 0
    %2657 = vmatpush1.bf16.msra.mxu0 0
    %2658 = vmatprep.subr.bf16.mxu0 0
    %2659 = vmatpush1.bf16.msra.mxu0 0
    %2660 = vmatprep.subr.bf16.mxu0 0
    %2661 = vmatpush1.bf16.msra.mxu0 0
    %2662 = vmatprep.mubr.bf16.mxu0 0
    %2663 = vmatmul.mubr.bf16.gmra.mrb[0].mxu0 %v2604
    %v2664 = vpop.f32.mrb[0].mxu0
    %v2665 = vadd.f32 0.0, %v2664
    %v2666 = vpop.f32.mrb[0].mxu0
    %v2667 = vpop.f32.mrb[0].mxu0
    %v2668 = vadd.f32 0.0, %v2667
    %v2669 = vpop.f32.mrb[0].mxu0
    %2670 = vmatprep.mubr.bf16.mxu0 0
    %2671 = vmatmul.mubr.bf16.gmra.mrb[0].mxu0 %v2607
    %v2672 = vpop.f32.mrb[0].mxu0
    %v2673 = vadd.f32 0.0, %v2672
    %v2674 = vpop.f32.mrb[0].mxu0
    %v2675 = vpop.f32.mrb[0].mxu0
    %v2676 = vadd.f32 0.0, %v2675
    %v2677 = vpop.f32.mrb[0].mxu0
    %2678 = vmatprep.mubr.bf16.mxu0 0
    %2679 = vmatmul.mubr.bf16.gmra.mrb[0].mxu0 %v2610
    %v2680 = vpop.f32.mrb[0].mxu0
    %v2681 = vadd.f32 0.0, %v2680
    %v2682 = vpop.f32.mrb[0].mxu0
    %v2683 = vpop.f32.mrb[0].mxu0
    %v2684 = vadd.f32 0.0, %v2683
    %v2685 = vpop.f32.mrb[0].mxu0
    %2686 = vmatprep.mubr.bf16.mxu0 0
    %2687 = vmatmul.mubr.bf16.gmra.mrb[0].mxu0 %v2613
    %v2688 = vpop.f32.mrb[0].mxu0
    %v2689 = vadd.f32 0.0, %v2688
    %v2690 = vpop.f32.mrb[0].mxu0
    %v2691 = vpop.f32.mrb[0].mxu0
    %v2692 = vadd.f32 0.0, %v2691
    %v2693 = vpop.f32.mrb[0].mxu0
    %2694 = vmatprep.mubr.bf16.mxu0 0
    %2695 = vmatmul.mubr.bf16.gmra.mrb[0].mxu0 %v2616
    %v2696 = vpop.f32.mrb[0].mxu0
    %v2697 = vadd.f32 0.0, %v2696
    %v2698 = vpop.f32.mrb[0].mxu0
    %v2699 = vpop.f32.mrb[0].mxu0
    %v2700 = vadd.f32 0.0, %v2699
    %v2701 = vpop.f32.mrb[0].mxu0
    %2702 = vmatprep.mubr.bf16.mxu0 0
    %2703 = vmatmul.mubr.bf16.gmra.mrb[0].mxu0 %v2619
    %v2704 = vpop.f32.mrb[0].mxu0
    %v2705 = vadd.f32 0.0, %v2704
    %v2706 = vpop.f32.mrb[0].mxu0
    %v2707 = vpop.f32.mrb[0].mxu0
    %v2708 = vadd.f32 0.0, %v2707
    %v2709 = vpop.f32.mrb[0].mxu0
    %2710 = vmatprep.mubr.bf16.mxu0 0
    %2711 = vmatmul.mubr.bf16.gmra.mrb[0].mxu0 %v2622
    %v2712 = vpop.f32.mrb[0].mxu0
    %v2713 = vadd.f32 0.0, %v2712
    %v2714 = vpop.f32.mrb[0].mxu0
    %v2715 = vpop.f32.mrb[0].mxu0
    %v2716 = vadd.f32 0.0, %v2715
    %v2717 = vpop.f32.mrb[0].mxu0
    %2718 = vmatprep.mubr.bf16.mxu0 0
    %2719 = vmatmul.mubr.bf16.gmra.mrb[0].mxu0 %v2625
    %v2720 = vpop.f32.mrb[0].mxu0
    %v2721 = vadd.f32 0.0, %v2720
    %v2722 = vpop.f32.mrb[0].mxu0
    %v2723 = vpop.f32.mrb[0].mxu0
    %v2724 = vadd.f32 0.0, %v2723
    %v2725 = vpop.f32.mrb[0].mxu0
    %2726 = vdwg.mxu0
    %v2727 = vadd.f32 %v2529, %v2665
    %v2728 = vadd.f32 %v2530, %v2668
    %v2729 = vadd.f32 %v2531, %v2673
    %v2730 = vadd.f32 %v2532, %v2676
    %v2731 = vadd.f32 %v2533, %v2681
    %v2732 = vadd.f32 %v2534, %v2684
    %v2733 = vadd.f32 %v2535, %v2689
    %v2734 = vadd.f32 %v2536, %v2692
    %v2735 = vadd.f32 %v2537, %v2697
    %v2736 = vadd.f32 %v2538, %v2700
    %v2737 = vadd.f32 %v2539, %v2705
    %v2738 = vadd.f32 %v2540, %v2708
    %v2739 = vadd.f32 %v2541, %v2713
    %v2740 = vadd.f32 %v2542, %v2716
    %v2741 = vadd.f32 %v2543, %v2721
    %v2742 = vadd.f32 %v2544, %v2724
    %v2743 = vadd.s32 %v1313, 1
    %v2744 = vadd.s32 %v1314, 1
    %v2745 = vadd.s32 %v1315, 1
    %v2746 = vadd.s32 %v1316, 1
    %v2747 = vadd.s32 %v1317, 1
    %v2748 = vadd.s32 %v1318, 1
    %v2749 = vadd.s32 %v1319, 1
    %v2750 = vadd.s32 %v1320, 1
    %v2751 = vadd.s32 %v1321, 1
    %v2752 = vadd.s32 %v1322, 1
    %v2753 = vadd.s32 %v1323, 1
    %v2754 = vadd.s32 %v1324, 1
    %v2755 = vadd.s32 %v1325, 1
    %v2756 = vadd.s32 %v1326, 1
    %v2757 = vadd.s32 %v1327, 1
    %v2758 = vadd.s32 %v1328, 1
    %vm2759 = vcmp.ge.s32.totalorder %v2743, 0
    %vm2760 = vcmp.ge.s32.totalorder %v2744, 0
    %vm2761 = vcmp.ge.s32.totalorder %v2745, 0
    %vm2762 = vcmp.ge.s32.totalorder %v2746, 0
    %vm2763 = vcmp.ge.s32.totalorder %v2747, 0
    %vm2764 = vcmp.ge.s32.totalorder %v2748, 0
    %vm2765 = vcmp.ge.s32.totalorder %v2749, 0
    %vm2766 = vcmp.ge.s32.totalorder %v2750, 0
    %vm2767 = vcmp.ge.s32.totalorder %v2751, 0
    %vm2768 = vcmp.ge.s32.totalorder %v2752, 0
    %vm2769 = vcmp.ge.s32.totalorder %v2753, 0
    %vm2770 = vcmp.ge.s32.totalorder %v2754, 0
    %vm2771 = vcmp.ge.s32.totalorder %v2755, 0
    %vm2772 = vcmp.ge.s32.totalorder %v2756, 0
    %vm2773 = vcmp.ge.s32.totalorder %v2757, 0
    %vm2774 = vcmp.ge.s32.totalorder %v2758, 0
    %vm2775 = vcmp.le.s32.totalorder %v2743, 7
    %vm2776 = vcmp.le.s32.totalorder %v2744, 7
    %vm2777 = vcmp.le.s32.totalorder %v2745, 7
    %vm2778 = vcmp.le.s32.totalorder %v2746, 7
    %vm2779 = vcmp.le.s32.totalorder %v2747, 7
    %vm2780 = vcmp.le.s32.totalorder %v2748, 7
    %vm2781 = vcmp.le.s32.totalorder %v2749, 7
    %vm2782 = vcmp.le.s32.totalorder %v2750, 7
    %vm2783 = vcmp.le.s32.totalorder %v2751, 7
    %vm2784 = vcmp.le.s32.totalorder %v2752, 7
    %vm2785 = vcmp.le.s32.totalorder %v2753, 7
    %vm2786 = vcmp.le.s32.totalorder %v2754, 7
    %vm2787 = vcmp.le.s32.totalorder %v2755, 7
    %vm2788 = vcmp.le.s32.totalorder %v2756, 7
    %vm2789 = vcmp.le.s32.totalorder %v2757, 7
    %vm2790 = vcmp.le.s32.totalorder %v2758, 7
    %vm2791 = vmand %vm2759, %vm2775
    %vm2792 = vmand %vm2760, %vm2776
    %vm2793 = vmand %vm2761, %vm2777
    %vm2794 = vmand %vm2762, %vm2778
    %vm2795 = vmand %vm2763, %vm2779
    %vm2796 = vmand %vm2764, %vm2780
    %vm2797 = vmand %vm2765, %vm2781
    %vm2798 = vmand %vm2766, %vm2782
    %vm2799 = vmand %vm2767, %vm2783
    %vm2800 = vmand %vm2768, %vm2784
    %vm2801 = vmand %vm2769, %vm2785
    %vm2802 = vmand %vm2770, %vm2786
    %vm2803 = vmand %vm2771, %vm2787
    %vm2804 = vmand %vm2772, %vm2788
    %vm2805 = vmand %vm2773, %vm2789
    %vm2806 = vmand %vm2774, %vm2790
    %vm2807 = vmand %vm2791, %vm1442
    %vm2808 = vmand %vm2792, %vm1443
    %vm2809 = vmand %vm2793, %vm1444
    %vm2810 = vmand %vm2794, %vm1445
    %vm2811 = vmand %vm2795, %vm1446
    %vm2812 = vmand %vm2796, %vm1447
    %vm2813 = vmand %vm2797, %vm1448
    %vm2814 = vmand %vm2798, %vm1449
    %vm2815 = vmand %vm2799, %vm1450
    %vm2816 = vmand %vm2800, %vm1451
    %vm2817 = vmand %vm2801, %vm1452
    %vm2818 = vmand %vm2802, %vm1453
    %vm2819 = vmand %vm2803, %vm1454
    %vm2820 = vmand %vm2804, %vm1455
    %vm2821 = vmand %vm2805, %vm1456
    %vm2822 = vmand %vm2806, %vm1457
    %vm2823 = vmand %vm2807, %vm1474
    %vm2824 = vmand %vm2808, %vm1475
    %vm2825 = vmand %vm2809, %vm1476
    %vm2826 = vmand %vm2810, %vm1477
    %vm2827 = vmand %vm2811, %vm1478
    %vm2828 = vmand %vm2812, %vm1479
    %vm2829 = vmand %vm2813, %vm1480
    %vm2830 = vmand %vm2814, %vm1481
    %vm2831 = vmand %vm2815, %vm1482
    %vm2832 = vmand %vm2816, %vm1483
    %vm2833 = vmand %vm2817, %vm1484
    %vm2834 = vmand %vm2818, %vm1485
    %vm2835 = vmand %vm2819, %vm1486
    %vm2836 = vmand %vm2820, %vm1487
    %vm2837 = vmand %vm2821, %vm1488
    %vm2838 = vmand %vm2822, %vm1489
    %v2839 = vsel %vm2823, %v1360, 0.0
    %v2840 = vsel %vm2824, %v1359, 0.0
    %v2841 = vsel %vm2825, %v1358, 0.0
    %v2842 = vsel %vm2826, %v1357, 0.0
    %v2843 = vsel %vm2827, %v1356, 0.0
    %v2844 = vsel %vm2828, %v1355, 0.0
    %v2845 = vsel %vm2829, %v1354, 0.0
    %v2846 = vsel %vm2830, %v1353, 0.0
    %v2847 = vsel %vm2831, %v1352, 0.0
    %v2848 = vsel %vm2832, %v1351, 0.0
    %v2849 = vsel %vm2833, %v1350, 0.0
    %v2850 = vsel %vm2834, %v1349, 0.0
    %v2851 = vsel %vm2835, %v1348, 0.0
    %v2852 = vsel %vm2836, %v1347, 0.0
    %v2853 = vsel %vm2837, %v1346, 0.0
    %v2854 = vsel %vm2838, %v1361, 0.0
    %v2855 = vpack.c.bf16 %v2840, %v2839
    %v2856 = vpack.c.bf16 %v2842, %v2841
    %v2857 = vpack.c.bf16 %v2844, %v2843
    %v2858 = vpack.c.bf16 %v2846, %v2845
    %v2859 = vpack.c.bf16 %v2848, %v2847
    %v2860 = vpack.c.bf16 %v2850, %v2849
    %v2861 = vpack.c.bf16 %v2852, %v2851
    %v2862 = vpack.c.bf16 %v2854, %v2853
    %s2863 = scalar_lea.vmem %s4, 24
    %v2864 = vld [vmem:[%s2863] sm:$0xf]
    %v2866 = vsel %vm670, %v2855, 0
    %v2869 = vsel %vm670, %v2856, 0
    %v2872 = vsel %vm670, %v2857, 0
    %v2875 = vsel %vm670, %v2858, 0
    %v2878 = vsel %vm670, %v2859, 0
    %v2881 = vsel %vm670, %v2860, 0
    %v2884 = vsel %vm670, %v2861, 0
    %v2887 = vsel %vm670, %v2862, 0
    %v2890 = vsel %vm1645, %v2864, 0
    %2892 = vmatprep.subr.bf16.mxu0 0
    %2893 = vmatpush1.bf16.msra.mxu0 %v2890
    %2894 = vmatprep.subr.bf16.mxu0 0
    %2895 = vmatpush1.bf16.msra.mxu0 0
    %2896 = vmatprep.subr.bf16.mxu0 0
    %2897 = vmatpush1.bf16.msra.mxu0 0
    %2898 = vmatprep.subr.bf16.mxu0 0
    %2899 = vmatpush1.bf16.msra.mxu0 0
    %2900 = vmatprep.subr.bf16.mxu0 0
    %2901 = vmatpush1.bf16.msra.mxu0 0
    %2902 = vmatprep.subr.bf16.mxu0 0
    %2903 = vmatpush1.bf16.msra.mxu0 0
    %2904 = vmatprep.subr.bf16.mxu0 0
    %2905 = vmatpush1.bf16.msra.mxu0 0
    %2906 = vmatprep.subr.bf16.mxu0 0
    %2907 = vmatpush1.bf16.msra.mxu0 0
    %2908 = vmatprep.subr.bf16.mxu0 0
    %2909 = vmatpush1.bf16.msra.mxu0 0
    %2910 = vmatprep.subr.bf16.mxu0 0
    %2911 = vmatpush1.bf16.msra.mxu0 0
    %2912 = vmatprep.subr.bf16.mxu0 0
    %2913 = vmatpush1.bf16.msra.mxu0 0
    %2914 = vmatprep.subr.bf16.mxu0 0
    %2915 = vmatpush1.bf16.msra.mxu0 0
    %2916 = vmatprep.subr.bf16.mxu0 0
    %2917 = vmatpush1.bf16.msra.mxu0 0
    %2918 = vmatprep.subr.bf16.mxu0 0
    %2919 = vmatpush1.bf16.msra.mxu0 0
    %2920 = vmatprep.subr.bf16.mxu0 0
    %2921 = vmatpush1.bf16.msra.mxu0 0
    %2922 = vmatprep.subr.bf16.mxu0 0
    %2923 = vmatpush1.bf16.msra.mxu0 0
    %2924 = vmatprep.mubr.bf16.mxu0 0
    %2925 = vmatmul.mubr.bf16.gmra.mrb[0].mxu0 %v2866
    %v2926 = vpop.f32.mrb[0].mxu0
    %v2927 = vadd.f32 0.0, %v2926
    %v2928 = vpop.f32.mrb[0].mxu0
    %v2929 = vpop.f32.mrb[0].mxu0
    %v2930 = vadd.f32 0.0, %v2929
    %v2931 = vpop.f32.mrb[0].mxu0
    %2932 = vmatprep.mubr.bf16.mxu0 0
    %2933 = vmatmul.mubr.bf16.gmra.mrb[0].mxu0 %v2869
    %v2934 = vpop.f32.mrb[0].mxu0
    %v2935 = vadd.f32 0.0, %v2934
    %v2936 = vpop.f32.mrb[0].mxu0
    %v2937 = vpop.f32.mrb[0].mxu0
    %v2938 = vadd.f32 0.0, %v2937
    %v2939 = vpop.f32.mrb[0].mxu0
    %2940 = vmatprep.mubr.bf16.mxu0 0
    %2941 = vmatmul.mubr.bf16.gmra.mrb[0].mxu0 %v2872
    %v2942 = vpop.f32.mrb[0].mxu0
    %v2943 = vadd.f32 0.0, %v2942
    %v2944 = vpop.f32.mrb[0].mxu0
    %v2945 = vpop.f32.mrb[0].mxu0
    %v2946 = vadd.f32 0.0, %v2945
    %v2947 = vpop.f32.mrb[0].mxu0
    %2948 = vmatprep.mubr.bf16.mxu0 0
    %2949 = vmatmul.mubr.bf16.gmra.mrb[0].mxu0 %v2875
    %v2950 = vpop.f32.mrb[0].mxu0
    %v2951 = vadd.f32 0.0, %v2950
    %v2952 = vpop.f32.mrb[0].mxu0
    %v2953 = vpop.f32.mrb[0].mxu0
    %v2954 = vadd.f32 0.0, %v2953
    %v2955 = vpop.f32.mrb[0].mxu0
    %2956 = vmatprep.mubr.bf16.mxu0 0
    %2957 = vmatmul.mubr.bf16.gmra.mrb[0].mxu0 %v2878
    %v2958 = vpop.f32.mrb[0].mxu0
    %v2959 = vadd.f32 0.0, %v2958
    %v2960 = vpop.f32.mrb[0].mxu0
    %v2961 = vpop.f32.mrb[0].mxu0
    %v2962 = vadd.f32 0.0, %v2961
    %v2963 = vpop.f32.mrb[0].mxu0
    %2964 = vmatprep.mubr.bf16.mxu0 0
    %2965 = vmatmul.mubr.bf16.gmra.mrb[0].mxu0 %v2881
    %v2966 = vpop.f32.mrb[0].mxu0
    %v2967 = vadd.f32 0.0, %v2966
    %v2968 = vpop.f32.mrb[0].mxu0
    %v2969 = vpop.f32.mrb[0].mxu0
    %v2970 = vadd.f32 0.0, %v2969
    %v2971 = vpop.f32.mrb[0].mxu0
    %2972 = vmatprep.mubr.bf16.mxu0 0
    %2973 = vmatmul.mubr.bf16.gmra.mrb[0].mxu0 %v2884
    %v2974 = vpop.f32.mrb[0].mxu0
    %v2975 = vadd.f32 0.0, %v2974
    %v2976 = vpop.f32.mrb[0].mxu0
    %v2977 = vpop.f32.mrb[0].mxu0
    %v2978 = vadd.f32 0.0, %v2977
    %v2979 = vpop.f32.mrb[0].mxu0
    %2980 = vmatprep.mubr.bf16.mxu0 0
    %2981 = vmatmul.mubr.bf16.gmra.mrb[0].mxu0 %v2887
    %v2982 = vpop.f32.mrb[0].mxu0
    %v2983 = vadd.f32 0.0, %v2982
    %v2984 = vpop.f32.mrb[0].mxu0
    %v2985 = vpop.f32.mrb[0].mxu0
    %v2986 = vadd.f32 0.0, %v2985
    %v2987 = vpop.f32.mrb[0].mxu0
    %2988 = vdwg.mxu0
    %v2989 = vadd.f32 %v2727, %v2927
    %v2990 = vadd.f32 %v2728, %v2930
    %v2991 = vadd.f32 %v2729, %v2935
    %v2992 = vadd.f32 %v2730, %v2938
    %v2993 = vadd.f32 %v2731, %v2943
    %v2994 = vadd.f32 %v2732, %v2946
    %v2995 = vadd.f32 %v2733, %v2951
    %v2996 = vadd.f32 %v2734, %v2954
    %v2997 = vadd.f32 %v2735, %v2959
    %v2998 = vadd.f32 %v2736, %v2962
    %v2999 = vadd.f32 %v2737, %v2967
    %v3000 = vadd.f32 %v2738, %v2970
    %v3001 = vadd.f32 %v2739, %v2975
    %v3002 = vadd.f32 %v2740, %v2978
    %v3003 = vadd.f32 %v2741, %v2983
    %v3004 = vadd.f32 %v2742, %v2986
    %vm3005 = vmand %vm2791, %vm1531
    %vm3006 = vmand %vm2792, %vm1532
    %vm3007 = vmand %vm2793, %vm1533
    %vm3008 = vmand %vm2794, %vm1534
    %vm3009 = vmand %vm2795, %vm1535
    %vm3010 = vmand %vm2796, %vm1536
    %vm3011 = vmand %vm2797, %vm1537
    %vm3012 = vmand %vm2798, %vm1538
    %vm3013 = vmand %vm2799, %vm1539
    %vm3014 = vmand %vm2800, %vm1540
    %vm3015 = vmand %vm2801, %vm1541
    %vm3016 = vmand %vm2802, %vm1542
    %vm3017 = vmand %vm2803, %vm1543
    %vm3018 = vmand %vm2804, %vm1544
    %vm3019 = vmand %vm2805, %vm1545
    %vm3020 = vmand %vm2806, %vm1546
    %vm3021 = vmand %vm3005, %vm1563
    %vm3022 = vmand %vm3006, %vm1564
    %vm3023 = vmand %vm3007, %vm1565
    %vm3024 = vmand %vm3008, %vm1566
    %vm3025 = vmand %vm3009, %vm1567
    %vm3026 = vmand %vm3010, %vm1568
    %vm3027 = vmand %vm3011, %vm1569
    %vm3028 = vmand %vm3012, %vm1570
    %vm3029 = vmand %vm3013, %vm1571
    %vm3030 = vmand %vm3014, %vm1572
    %vm3031 = vmand %vm3015, %vm1573
    %vm3032 = vmand %vm3016, %vm1574
    %vm3033 = vmand %vm3017, %vm1575
    %vm3034 = vmand %vm3018, %vm1576
    %vm3035 = vmand %vm3019, %vm1577
    %vm3036 = vmand %vm3020, %vm1578
    %v3037 = vsel %vm3021, %v1249, 0.0
    %v3038 = vsel %vm3022, %v1250, 0.0
    %v3039 = vsel %vm3023, %v1251, 0.0
    %v3040 = vsel %vm3024, %v1252, 0.0
    %v3041 = vsel %vm3025, %v1253, 0.0
    %v3042 = vsel %vm3026, %v1254, 0.0
    %v3043 = vsel %vm3027, %v1255, 0.0
    %v3044 = vsel %vm3028, %v1256, 0.0
    %v3045 = vsel %vm3029, %v1257, 0.0
    %v3046 = vsel %vm3030, %v1258, 0.0
    %v3047 = vsel %vm3031, %v1259, 0.0
    %v3048 = vsel %vm3032, %v1260, 0.0
    %v3049 = vsel %vm3033, %v1261, 0.0
    %v3050 = vsel %vm3034, %v1262, 0.0
    %v3051 = vsel %vm3035, %v1263, 0.0
    %v3052 = vsel %vm3036, %v1248, 0.0
    %v3053 = vpack.c.bf16 %v3038, %v3037
    %v3054 = vpack.c.bf16 %v3040, %v3039
    %v3055 = vpack.c.bf16 %v3042, %v3041
    %v3056 = vpack.c.bf16 %v3044, %v3043
    %v3057 = vpack.c.bf16 %v3046, %v3045
    %v3058 = vpack.c.bf16 %v3048, %v3047
    %v3059 = vpack.c.bf16 %v3050, %v3049
    %v3060 = vpack.c.bf16 %v3052, %v3051
    %s3061 = scalar_lea.vmem %s4, 28
    %v3062 = vld [vmem:[%s3061] sm:$0xf]
    %v3064 = vsel %vm670, %v3053, 0
    %v3067 = vsel %vm670, %v3054, 0
    %v3070 = vsel %vm670, %v3055, 0
    %v3073 = vsel %vm670, %v3056, 0
    %v3076 = vsel %vm670, %v3057, 0
    %v3079 = vsel %vm670, %v3058, 0
    %v3082 = vsel %vm670, %v3059, 0
    %v3085 = vsel %vm670, %v3060, 0
    %v3088 = vsel %vm1645, %v3062, 0
    %3090 = vmatprep.subr.bf16.mxu0 0
    %3091 = vmatpush1.bf16.msra.mxu0 %v3088
    %3092 = vmatprep.subr.bf16.mxu0 0
    %3093 = vmatpush1.bf16.msra.mxu0 0
    %3094 = vmatprep.subr.bf16.mxu0 0
    %3095 = vmatpush1.bf16.msra.mxu0 0
    %3096 = vmatprep.subr.bf16.mxu0 0
    %3097 = vmatpush1.bf16.msra.mxu0 0
    %3098 = vmatprep.subr.bf16.mxu0 0
    %3099 = vmatpush1.bf16.msra.mxu0 0
    %3100 = vmatprep.subr.bf16.mxu0 0
    %3101 = vmatpush1.bf16.msra.mxu0 0
    %3102 = vmatprep.subr.bf16.mxu0 0
    %3103 = vmatpush1.bf16.msra.mxu0 0
    %3104 = vmatprep.subr.bf16.mxu0 0
    %3105 = vmatpush1.bf16.msra.mxu0 0
    %3106 = vmatprep.subr.bf16.mxu0 0
    %3107 = vmatpush1.bf16.msra.mxu0 0
    %3108 = vmatprep.subr.bf16.mxu0 0
    %3109 = vmatpush1.bf16.msra.mxu0 0
    %3110 = vmatprep.subr.bf16.mxu0 0
    %3111 = vmatpush1.bf16.msra.mxu0 0
    %3112 = vmatprep.subr.bf16.mxu0 0
    %3113 = vmatpush1.bf16.msra.mxu0 0
    %3114 = vmatprep.subr.bf16.mxu0 0
    %3115 = vmatpush1.bf16.msra.mxu0 0
    %3116 = vmatprep.subr.bf16.mxu0 0
    %3117 = vmatpush1.bf16.msra.mxu0 0
    %3118 = vmatprep.subr.bf16.mxu0 0
    %3119 = vmatpush1.bf16.msra.mxu0 0
    %3120 = vmatprep.subr.bf16.mxu0 0
    %3121 = vmatpush1.bf16.msra.mxu0 0
    %3122 = vmatprep.mubr.bf16.mxu0 0
    %3123 = vmatmul.mubr.bf16.gmra.mrb[0].mxu0 %v3064
    %v3124 = vpop.f32.mrb[0].mxu0
    %v3125 = vadd.f32 0.0, %v3124
    %v3126 = vpop.f32.mrb[0].mxu0
    %v3127 = vpop.f32.mrb[0].mxu0
    %v3128 = vadd.f32 0.0, %v3127
    %v3129 = vpop.f32.mrb[0].mxu0
    %3130 = vmatprep.mubr.bf16.mxu0 0
    %3131 = vmatmul.mubr.bf16.gmra.mrb[0].mxu0 %v3067
    %v3132 = vpop.f32.mrb[0].mxu0
    %v3133 = vadd.f32 0.0, %v3132
    %v3134 = vpop.f32.mrb[0].mxu0
    %v3135 = vpop.f32.mrb[0].mxu0
    %v3136 = vadd.f32 0.0, %v3135
    %v3137 = vpop.f32.mrb[0].mxu0
    %3138 = vmatprep.mubr.bf16.mxu0 0
    %3139 = vmatmul.mubr.bf16.gmra.mrb[0].mxu0 %v3070
    %v3140 = vpop.f32.mrb[0].mxu0
    %v3141 = vadd.f32 0.0, %v3140
    %v3142 = vpop.f32.mrb[0].mxu0
    %v3143 = vpop.f32.mrb[0].mxu0
    %v3144 = vadd.f32 0.0, %v3143
    %v3145 = vpop.f32.mrb[0].mxu0
    %3146 = vmatprep.mubr.bf16.mxu0 0
    %3147 = vmatmul.mubr.bf16.gmra.mrb[0].mxu0 %v3073
    %v3148 = vpop.f32.mrb[0].mxu0
    %v3149 = vadd.f32 0.0, %v3148
    %v3150 = vpop.f32.mrb[0].mxu0
    %v3151 = vpop.f32.mrb[0].mxu0
    %v3152 = vadd.f32 0.0, %v3151
    %v3153 = vpop.f32.mrb[0].mxu0
    %3154 = vmatprep.mubr.bf16.mxu0 0
    %3155 = vmatmul.mubr.bf16.gmra.mrb[0].mxu0 %v3076
    %v3156 = vpop.f32.mrb[0].mxu0
    %v3157 = vadd.f32 0.0, %v3156
    %v3158 = vpop.f32.mrb[0].mxu0
    %v3159 = vpop.f32.mrb[0].mxu0
    %v3160 = vadd.f32 0.0, %v3159
    %v3161 = vpop.f32.mrb[0].mxu0
    %3162 = vmatprep.mubr.bf16.mxu0 0
    %3163 = vmatmul.mubr.bf16.gmra.mrb[0].mxu0 %v3079
    %v3164 = vpop.f32.mrb[0].mxu0
    %v3165 = vadd.f32 0.0, %v3164
    %v3166 = vpop.f32.mrb[0].mxu0
    %v3167 = vpop.f32.mrb[0].mxu0
    %v3168 = vadd.f32 0.0, %v3167
    %v3169 = vpop.f32.mrb[0].mxu0
    %3170 = vmatprep.mubr.bf16.mxu0 0
    %3171 = vmatmul.mubr.bf16.gmra.mrb[0].mxu0 %v3082
    %v3172 = vpop.f32.mrb[0].mxu0
    %v3173 = vadd.f32 0.0, %v3172
    %v3174 = vpop.f32.mrb[0].mxu0
    %v3175 = vpop.f32.mrb[0].mxu0
    %v3176 = vadd.f32 0.0, %v3175
    %v3177 = vpop.f32.mrb[0].mxu0
    %3178 = vmatprep.mubr.bf16.mxu0 0
    %3179 = vmatmul.mubr.bf16.gmra.mrb[0].mxu0 %v3085
    %v3180 = vpop.f32.mrb[0].mxu0
    %v3181 = vadd.f32 0.0, %v3180
    %v3182 = vpop.f32.mrb[0].mxu0
    %v3183 = vpop.f32.mrb[0].mxu0
    %v3184 = vadd.f32 0.0, %v3183
    %v3185 = vpop.f32.mrb[0].mxu0
    %3186 = vdwg.mxu0
    %v3187 = vadd.f32 %v2989, %v3125
    %v3188 = vadd.f32 %v2990, %v3128
    %v3189 = vadd.f32 %v2991, %v3133
    %v3190 = vadd.f32 %v2992, %v3136
    %v3191 = vadd.f32 %v2993, %v3141
    %v3192 = vadd.f32 %v2994, %v3144
    %v3193 = vadd.f32 %v2995, %v3149
    %v3194 = vadd.f32 %v2996, %v3152
    %v3195 = vadd.f32 %v2997, %v3157
    %v3196 = vadd.f32 %v2998, %v3160
    %v3197 = vadd.f32 %v2999, %v3165
    %v3198 = vadd.f32 %v3000, %v3168
    %v3199 = vadd.f32 %v3001, %v3173
    %v3200 = vadd.f32 %v3002, %v3176
    %v3201 = vadd.f32 %v3003, %v3181
    %v3202 = vadd.f32 %v3004, %v3184
    %vm3203 = vmand %vm2791, %vm1919
    %vm3204 = vmand %vm2792, %vm1920
    %vm3205 = vmand %vm2793, %vm1921
    %vm3206 = vmand %vm2794, %vm1922
    %vm3207 = vmand %vm2795, %vm1923
    %vm3208 = vmand %vm2796, %vm1924
    %vm3209 = vmand %vm2797, %vm1925
    %vm3210 = vmand %vm2798, %vm1926
    %vm3211 = vmand %vm2799, %vm1927
    %vm3212 = vmand %vm2800, %vm1928
    %vm3213 = vmand %vm2801, %vm1929
    %vm3214 = vmand %vm2802, %vm1930
    %vm3215 = vmand %vm2803, %vm1931
    %vm3216 = vmand %vm2804, %vm1932
    %vm3217 = vmand %vm2805, %vm1933
    %vm3218 = vmand %vm2806, %vm1934
    %vm3219 = vmand %vm3203, %vm1951
    %vm3220 = vmand %vm3204, %vm1952
    %vm3221 = vmand %vm3205, %vm1953
    %vm3222 = vmand %vm3206, %vm1954
    %vm3223 = vmand %vm3207, %vm1955
    %vm3224 = vmand %vm3208, %vm1956
    %vm3225 = vmand %vm3209, %vm1957
    %vm3226 = vmand %vm3210, %vm1958
    %vm3227 = vmand %vm3211, %vm1959
    %vm3228 = vmand %vm3212, %vm1960
    %vm3229 = vmand %vm3213, %vm1961
    %vm3230 = vmand %vm3214, %vm1962
    %vm3231 = vmand %vm3215, %vm1963
    %vm3232 = vmand %vm3216, %vm1964
    %vm3233 = vmand %vm3217, %vm1965
    %vm3234 = vmand %vm3218, %vm1966
    %v3235 = vsel %vm3219, %v1900, 0.0
    %v3236 = vsel %vm3220, %v1899, 0.0
    %v3237 = vsel %vm3221, %v1898, 0.0
    %v3238 = vsel %vm3222, %v1897, 0.0
    %v3239 = vsel %vm3223, %v1896, 0.0
    %v3240 = vsel %vm3224, %v1895, 0.0
    %v3241 = vsel %vm3225, %v1894, 0.0
    %v3242 = vsel %vm3226, %v1893, 0.0
    %v3243 = vsel %vm3227, %v1892, 0.0
    %v3244 = vsel %vm3228, %v1891, 0.0
    %v3245 = vsel %vm3229, %v1890, 0.0
    %v3246 = vsel %vm3230, %v1889, 0.0
    %v3247 = vsel %vm3231, %v1888, 0.0
    %v3248 = vsel %vm3232, %v1887, 0.0
    %v3249 = vsel %vm3233, %v1902, 0.0
    %v3250 = vsel %vm3234, %v1901, 0.0
    %v3251 = vpack.c.bf16 %v3236, %v3235
    %v3252 = vpack.c.bf16 %v3238, %v3237
    %v3253 = vpack.c.bf16 %v3240, %v3239
    %v3254 = vpack.c.bf16 %v3242, %v3241
    %v3255 = vpack.c.bf16 %v3244, %v3243
    %v3256 = vpack.c.bf16 %v3246, %v3245
    %v3257 = vpack.c.bf16 %v3248, %v3247
    %v3258 = vpack.c.bf16 %v3250, %v3249
    %s3259 = scalar_lea.vmem %s4, 32
    %v3260 = vld [vmem:[%s3259] sm:$0xf]
    %v3262 = vsel %vm670, %v3251, 0
    %v3265 = vsel %vm670, %v3252, 0
    %v3268 = vsel %vm670, %v3253, 0
    %v3271 = vsel %vm670, %v3254, 0
    %v3274 = vsel %vm670, %v3255, 0
    %v3277 = vsel %vm670, %v3256, 0
    %v3280 = vsel %vm670, %v3257, 0
    %v3283 = vsel %vm670, %v3258, 0
    %v3286 = vsel %vm1645, %v3260, 0
    %3288 = vmatprep.subr.bf16.mxu0 0
    %3289 = vmatpush1.bf16.msra.mxu0 %v3286
    %3290 = vmatprep.subr.bf16.mxu0 0
    %3291 = vmatpush1.bf16.msra.mxu0 0
    %3292 = vmatprep.subr.bf16.mxu0 0
    %3293 = vmatpush1.bf16.msra.mxu0 0
    %3294 = vmatprep.subr.bf16.mxu0 0
    %3295 = vmatpush1.bf16.msra.mxu0 0
    %3296 = vmatprep.subr.bf16.mxu0 0
    %3297 = vmatpush1.bf16.msra.mxu0 0
    %3298 = vmatprep.subr.bf16.mxu0 0
    %3299 = vmatpush1.bf16.msra.mxu0 0
    %3300 = vmatprep.subr.bf16.mxu0 0
    %3301 = vmatpush1.bf16.msra.mxu0 0
    %3302 = vmatprep.subr.bf16.mxu0 0
    %3303 = vmatpush1.bf16.msra.mxu0 0
    %3304 = vmatprep.subr.bf16.mxu0 0
    %3305 = vmatpush1.bf16.msra.mxu0 0
    %3306 = vmatprep.subr.bf16.mxu0 0
    %3307 = vmatpush1.bf16.msra.mxu0 0
    %3308 = vmatprep.subr.bf16.mxu0 0
    %3309 = vmatpush1.bf16.msra.mxu0 0
    %3310 = vmatprep.subr.bf16.mxu0 0
    %3311 = vmatpush1.bf16.msra.mxu0 0
    %3312 = vmatprep.subr.bf16.mxu0 0
    %3313 = vmatpush1.bf16.msra.mxu0 0
    %3314 = vmatprep.subr.bf16.mxu0 0
    %3315 = vmatpush1.bf16.msra.mxu0 0
    %3316 = vmatprep.subr.bf16.mxu0 0
    %3317 = vmatpush1.bf16.msra.mxu0 0
    %3318 = vmatprep.subr.bf16.mxu0 0
    %3319 = vmatpush1.bf16.msra.mxu0 0
    %3320 = vmatprep.mubr.bf16.mxu0 0
    %3321 = vmatmul.mubr.bf16.gmra.mrb[0].mxu0 %v3262
    %v3322 = vpop.f32.mrb[0].mxu0
    %v3323 = vadd.f32 0.0, %v3322
    %v3324 = vpop.f32.mrb[0].mxu0
    %v3325 = vpop.f32.mrb[0].mxu0
    %v3326 = vadd.f32 0.0, %v3325
    %v3327 = vpop.f32.mrb[0].mxu0
    %3328 = vmatprep.mubr.bf16.mxu0 0
    %3329 = vmatmul.mubr.bf16.gmra.mrb[0].mxu0 %v3265
    %v3330 = vpop.f32.mrb[0].mxu0
    %v3331 = vadd.f32 0.0, %v3330
    %v3332 = vpop.f32.mrb[0].mxu0
    %v3333 = vpop.f32.mrb[0].mxu0
    %v3334 = vadd.f32 0.0, %v3333
    %v3335 = vpop.f32.mrb[0].mxu0
    %3336 = vmatprep.mubr.bf16.mxu0 0
    %3337 = vmatmul.mubr.bf16.gmra.mrb[0].mxu0 %v3268
    %v3338 = vpop.f32.mrb[0].mxu0
    %v3339 = vadd.f32 0.0, %v3338
    %v3340 = vpop.f32.mrb[0].mxu0
    %v3341 = vpop.f32.mrb[0].mxu0
    %v3342 = vadd.f32 0.0, %v3341
    %v3343 = vpop.f32.mrb[0].mxu0
    %3344 = vmatprep.mubr.bf16.mxu0 0
    %3345 = vmatmul.mubr.bf16.gmra.mrb[0].mxu0 %v3271
    %v3346 = vpop.f32.mrb[0].mxu0
    %v3347 = vadd.f32 0.0, %v3346
    %v3348 = vpop.f32.mrb[0].mxu0
    %v3349 = vpop.f32.mrb[0].mxu0
    %v3350 = vadd.f32 0.0, %v3349
    %v3351 = vpop.f32.mrb[0].mxu0
    %3352 = vmatprep.mubr.bf16.mxu0 0
    %3353 = vmatmul.mubr.bf16.gmra.mrb[0].mxu0 %v3274
    %v3354 = vpop.f32.mrb[0].mxu0
    %v3355 = vadd.f32 0.0, %v3354
    %v3356 = vpop.f32.mrb[0].mxu0
    %v3357 = vpop.f32.mrb[0].mxu0
    %v3358 = vadd.f32 0.0, %v3357
    %v3359 = vpop.f32.mrb[0].mxu0
    %3360 = vmatprep.mubr.bf16.mxu0 0
    %3361 = vmatmul.mubr.bf16.gmra.mrb[0].mxu0 %v3277
    %v3362 = vpop.f32.mrb[0].mxu0
    %v3363 = vadd.f32 0.0, %v3362
    %v3364 = vpop.f32.mrb[0].mxu0
    %v3365 = vpop.f32.mrb[0].mxu0
    %v3366 = vadd.f32 0.0, %v3365
    %v3367 = vpop.f32.mrb[0].mxu0
    %3368 = vmatprep.mubr.bf16.mxu0 0
    %3369 = vmatmul.mubr.bf16.gmra.mrb[0].mxu0 %v3280
    %v3370 = vpop.f32.mrb[0].mxu0
    %v3371 = vadd.f32 0.0, %v3370
    %v3372 = vpop.f32.mrb[0].mxu0
    %v3373 = vpop.f32.mrb[0].mxu0
    %v3374 = vadd.f32 0.0, %v3373
    %v3375 = vpop.f32.mrb[0].mxu0
    %3376 = vmatprep.mubr.bf16.mxu0 0
    %3377 = vmatmul.mubr.bf16.gmra.mrb[0].mxu0 %v3283
    %v3378 = vpop.f32.mrb[0].mxu0
    %v3379 = vadd.f32 0.0, %v3378
    %v3380 = vpop.f32.mrb[0].mxu0
    %v3381 = vpop.f32.mrb[0].mxu0
    %v3382 = vadd.f32 0.0, %v3381
    %v3383 = vpop.f32.mrb[0].mxu0
    %3384 = vdwg.mxu0
    %v3385 = vadd.f32 %v3187, %v3323
    %v3386 = vadd.f32 %v3188, %v3326
    %v3387 = vadd.f32 %v3189, %v3331
    %v3388 = vadd.f32 %v3190, %v3334
    %v3389 = vadd.f32 %v3191, %v3339
    %v3390 = vadd.f32 %v3192, %v3342
    %v3391 = vadd.f32 %v3193, %v3347
    %v3392 = vadd.f32 %v3194, %v3350
    %v3393 = vadd.f32 %v3195, %v3355
    %v3394 = vadd.f32 %v3196, %v3358
    %v3395 = vadd.f32 %v3197, %v3363
    %v3396 = vadd.f32 %v3198, %v3366
    %v3397 = vadd.f32 %v3199, %v3371
    %v3398 = vadd.f32 %v3200, %v3374
    %v3399 = vadd.f32 %v3201, %v3379
    %v3400 = vadd.f32 %v3202, %v3382
    %v3401 = vld [vmem:[%s5] sm:$0x1]
    %v3402 = vld [vmem:[%s6] sm:$0x1]
    %vm3403 = vcmask 130048
    %v3404 = vsel %vm3403, %v3385, 0.0
    %v3405 = vsel %vm3403, %v3386, 0.0
    %v3406 = vadd.f32 %v3404, %v3405
    %v3407 = vsel %vm3403, %v3387, 0.0
    %v3408 = vadd.f32 %v3406, %v3407
    %v3409 = vsel %vm3403, %v3388, 0.0
    %v3410 = vadd.f32 %v3408, %v3409
    %v3411 = vsel %vm3403, %v3389, 0.0
    %v3412 = vadd.f32 %v3410, %v3411
    %v3413 = vsel %vm3403, %v3390, 0.0
    %v3414 = vadd.f32 %v3412, %v3413
    %v3415 = vsel %vm3403, %v3391, 0.0
    %v3416 = vadd.f32 %v3414, %v3415
    %v3417 = vsel %vm3403, %v3392, 0.0
    %v3418 = vadd.f32 %v3416, %v3417
    %v3419 = vsel %vm3403, %v3393, 0.0
    %v3420 = vadd.f32 %v3418, %v3419
    %v3421 = vsel %vm3403, %v3394, 0.0
    %v3422 = vadd.f32 %v3420, %v3421
    %v3423 = vsel %vm3403, %v3395, 0.0
    %v3424 = vadd.f32 %v3422, %v3423
    %v3425 = vsel %vm3403, %v3396, 0.0
    %v3426 = vadd.f32 %v3424, %v3425
    %v3427 = vsel %vm3403, %v3397, 0.0
    %v3428 = vadd.f32 %v3426, %v3427
    %v3429 = vsel %vm3403, %v3398, 0.0
    %v3430 = vadd.f32 %v3428, %v3429
    %v3431 = vsel %vm3403, %v3399, 0.0
    %v3432 = vadd.f32 %v3430, %v3431
    %v3433 = vsel %vm3403, %v3400, 0.0
    %v3434 = vadd.f32 %v3432, %v3433
    %v3435 = vrot.slane %v3434, 4
    %v3436 = vadd.f32 %v3434, %v3435
    %v3437 = vrot.slane %v3436, 2
    %v3438 = vadd.f32 %v3436, %v3437
    %v3439 = vrot.slane %v3438, 1
    %v3440 = vadd.f32 %v3438, %v3439
    %v3441 = vrcp.pop 128.0
    %v3442 = vmul.f32 %v3440, %v3441
    %v3443 = vmul.f32 %v3385, %v3385
    %v3444 = vmul.f32 %v3386, %v3386
    %v3445 = vmul.f32 %v3387, %v3387
    %v3446 = vmul.f32 %v3388, %v3388
    %v3447 = vmul.f32 %v3389, %v3389
    %v3448 = vmul.f32 %v3390, %v3390
    %v3449 = vmul.f32 %v3391, %v3391
    %v3450 = vmul.f32 %v3392, %v3392
    %v3451 = vmul.f32 %v3393, %v3393
    %v3452 = vmul.f32 %v3394, %v3394
    %v3453 = vmul.f32 %v3395, %v3395
    %v3454 = vmul.f32 %v3396, %v3396
    %v3455 = vmul.f32 %v3397, %v3397
    %v3456 = vmul.f32 %v3398, %v3398
    %v3457 = vmul.f32 %v3399, %v3399
    %v3458 = vmul.f32 %v3400, %v3400
    %v3459 = vsel %vm3403, %v3443, 0.0
    %v3460 = vsel %vm3403, %v3444, 0.0
    %v3461 = vadd.f32 %v3459, %v3460
    %v3462 = vsel %vm3403, %v3445, 0.0
    %v3463 = vadd.f32 %v3461, %v3462
    %v3464 = vsel %vm3403, %v3446, 0.0
    %v3465 = vadd.f32 %v3463, %v3464
    %v3466 = vsel %vm3403, %v3447, 0.0
    %v3467 = vadd.f32 %v3465, %v3466
    %v3468 = vsel %vm3403, %v3448, 0.0
    %v3469 = vadd.f32 %v3467, %v3468
    %v3470 = vsel %vm3403, %v3449, 0.0
    %v3471 = vadd.f32 %v3469, %v3470
    %v3472 = vsel %vm3403, %v3450, 0.0
    %v3473 = vadd.f32 %v3471, %v3472
    %v3474 = vsel %vm3403, %v3451, 0.0
    %v3475 = vadd.f32 %v3473, %v3474
    %v3476 = vsel %vm3403, %v3452, 0.0
    %v3477 = vadd.f32 %v3475, %v3476
    %v3478 = vsel %vm3403, %v3453, 0.0
    %v3479 = vadd.f32 %v3477, %v3478
    %v3480 = vsel %vm3403, %v3454, 0.0
    %v3481 = vadd.f32 %v3479, %v3480
    %v3482 = vsel %vm3403, %v3455, 0.0
    %v3483 = vadd.f32 %v3481, %v3482
    %v3484 = vsel %vm3403, %v3456, 0.0
    %v3485 = vadd.f32 %v3483, %v3484
    %v3486 = vsel %vm3403, %v3457, 0.0
    %v3487 = vadd.f32 %v3485, %v3486
    %v3488 = vsel %vm3403, %v3458, 0.0
    %v3489 = vadd.f32 %v3487, %v3488
    %v3490 = vrot.slane %v3489, 4
    %v3491 = vadd.f32 %v3489, %v3490
    %v3492 = vrot.slane %v3491, 2
    %v3493 = vadd.f32 %v3491, %v3492
    %v3494 = vrot.slane %v3493, 1
    %v3495 = vadd.f32 %v3493, %v3494
    %v3496 = vmul.f32 %v3495, %v3441
    %v3497 = vmul.f32 %v3442, %v3442
    %v3498 = vsub.f32 %v3496, %v3497
    %v3499 = vmax.f32 %v3498, 0.0
    %v3500 = vadd.f32 %v3499, 1e-05
    %v3501 = vrsqrt.pop %v3500
    %v3502 = vmul.f32 %v3401, %v3501
    %v3503 = vmul.f32 %v3442, %v3502
    %v3504 = vsub.f32 %v3402, %v3503
    %v3506 = vlaneseq
    %v3507 = vshrl.u32 %v3506, 7
    %v3508 = vsub.s32 0, %v3507
    %v3509 = vrot.slane %v3502, %v3508
    %v3511 = vmul.f32 %v3385, %v3509
    %v3512 = vmul.f32 %v3386, %v3509
    %v3513 = vmul.f32 %v3387, %v3509
    %v3514 = vmul.f32 %v3388, %v3509
    %v3515 = vmul.f32 %v3389, %v3509
    %v3516 = vmul.f32 %v3390, %v3509
    %v3517 = vmul.f32 %v3391, %v3509
    %v3518 = vmul.f32 %v3392, %v3509
    %v3519 = vmul.f32 %v3393, %v3509
    %v3520 = vmul.f32 %v3394, %v3509
    %v3521 = vmul.f32 %v3395, %v3509
    %v3522 = vmul.f32 %v3396, %v3509
    %v3523 = vmul.f32 %v3397, %v3509
    %v3524 = vmul.f32 %v3398, %v3509
    %v3525 = vmul.f32 %v3399, %v3509
    %v3526 = vmul.f32 %v3400, %v3509
    %v3528 = vlaneseq
    %v3529 = vshrl.u32 %v3528, 7
    %v3530 = vsub.s32 0, %v3529
    %v3531 = vrot.slane %v3504, %v3530
    %v3533 = vadd.f32 %v3511, %v3531
    %v3534 = vadd.f32 %v3512, %v3531
    %v3535 = vadd.f32 %v3513, %v3531
    %v3536 = vadd.f32 %v3514, %v3531
    %v3537 = vadd.f32 %v3515, %v3531
    %v3538 = vadd.f32 %v3516, %v3531
    %v3539 = vadd.f32 %v3517, %v3531
    %v3540 = vadd.f32 %v3518, %v3531
    %v3541 = vadd.f32 %v3519, %v3531
    %v3542 = vadd.f32 %v3520, %v3531
    %v3543 = vadd.f32 %v3521, %v3531
    %v3544 = vadd.f32 %v3522, %v3531
    %v3545 = vadd.f32 %v3523, %v3531
    %v3546 = vadd.f32 %v3524, %v3531
    %v3547 = vadd.f32 %v3525, %v3531
    %v3548 = vadd.f32 %v3526, %v3531
    %v3549 = vmax.f32 %v3533, 0.0
    %v3550 = vmax.f32 %v3534, 0.0
    %v3551 = vmax.f32 %v3535, 0.0
    %v3552 = vmax.f32 %v3536, 0.0
    %v3553 = vmax.f32 %v3537, 0.0
    %v3554 = vmax.f32 %v3538, 0.0
    %v3555 = vmax.f32 %v3539, 0.0
    %v3556 = vmax.f32 %v3540, 0.0
    %v3557 = vmax.f32 %v3541, 0.0
    %v3558 = vmax.f32 %v3542, 0.0
    %v3559 = vmax.f32 %v3543, 0.0
    %v3560 = vmax.f32 %v3544, 0.0
    %v3561 = vmax.f32 %v3545, 0.0
    %v3562 = vmax.f32 %v3546, 0.0
    %v3563 = vmax.f32 %v3547, 0.0
    %v3564 = vmax.f32 %v3548, 0.0
    %3565 = vst.msk [vmem:[#allocation2] sm:$0xff] %vm3403, %v3549
    %3566 = vst.msk [vmem:[#allocation2 + $0x8] sm:$0xff] %vm3403, %v3550
    %3567 = vst.msk [vmem:[#allocation2 + $0x10] sm:$0xff] %vm3403, %v3551
    %3568 = vst.msk [vmem:[#allocation2 + $0x18] sm:$0xff] %vm3403, %v3552
    %3569 = vst.msk [vmem:[#allocation2 + $0x20] sm:$0xff] %vm3403, %v3553
    %3570 = vst.msk [vmem:[#allocation2 + $0x28] sm:$0xff] %vm3403, %v3554
    %3571 = vst.msk [vmem:[#allocation2 + $0x30] sm:$0xff] %vm3403, %v3555
    %3572 = vst.msk [vmem:[#allocation2 + $0x38] sm:$0xff] %vm3403, %v3556
    %3573 = vst.msk [vmem:[#allocation2 + $0x40] sm:$0xff] %vm3403, %v3557
    %3574 = vst.msk [vmem:[#allocation2 + $0x48] sm:$0xff] %vm3403, %v3558
    %3575 = vst.msk [vmem:[#allocation2 + $0x50] sm:$0xff] %vm3403, %v3559
    %3576 = vst.msk [vmem:[#allocation2 + $0x58] sm:$0xff] %vm3403, %v3560
    %3577 = vst.msk [vmem:[#allocation2 + $0x60] sm:$0xff] %vm3403, %v3561
    %3578 = vst.msk [vmem:[#allocation2 + $0x68] sm:$0xff] %vm3403, %v3562
    %3579 = vst.msk [vmem:[#allocation2 + $0x70] sm:$0xff] %vm3403, %v3563
    %3580 = vst.msk [vmem:[#allocation2 + $0x78] sm:$0xff] %vm3403, %v3564
    %v3581 = vld [vmem:[#allocation2] sm:$0x1]
    %v3582 = vld [vmem:[#allocation2 + $0x40] sm:$0x1]
    %v3583 = vld [vmem:[#allocation2 + $0x1] sm:$0x1]
    %v3584 = vld [vmem:[#allocation2 + $0x41] sm:$0x1]
    %v3585 = vmax.f32 %v3581, %v3583
    %v3586 = vmax.f32 %v3582, %v3584
    %s3587 = scalar_lea.vmem [#allocation2], 8
    %v3588 = vld [vmem:[%s3587] sm:$0x1]
    %v3589 = vld [vmem:[%s3587 + $0x40] sm:$0x1]
    %v3590 = vld [vmem:[%s3587 + $0x1] sm:$0x1]
    %v3591 = vld [vmem:[%s3587 + $0x41] sm:$0x1]
    %v3592 = vmax.f32 %v3588, %v3590
    %v3593 = vmax.f32 %v3589, %v3591
    %v3594 = vmax.f32 %v3585, %v3592
    %v3595 = vmax.f32 %v3586, %v3593
    %v3596 = vpack.c.bf16 %v3594, %v3594
    %v3597 = vpack.c.bf16 %v3595, %v3595
    %v3598 = vld [vmem:[%s7] sm:$0xf]
    %v3599 = vld [vmem:[%s7 + $0x4] sm:$0xf]
    %v3600 = vld [vmem:[#allocation2 + $0x2] sm:$0x1]
    %v3601 = vld [vmem:[#allocation2 + $0x42] sm:$0x1]
    %v3602 = vld [vmem:[#allocation2 + $0x3] sm:$0x1]
    %v3603 = vld [vmem:[#allocation2 + $0x43] sm:$0x1]
    %v3604 = vmax.f32 %v3600, %v3602
    %v3605 = vmax.f32 %v3601, %v3603
    %v3606 = vld [vmem:[%s3587 + $0x2] sm:$0x1]
    %v3607 = vld [vmem:[%s3587 + $0x42] sm:$0x1]
    %v3608 = vld [vmem:[%s3587 + $0x3] sm:$0x1]
    %v3609 = vld [vmem:[%s3587 + $0x43] sm:$0x1]
    %v3610 = vmax.f32 %v3606, %v3608
    %v3611 = vmax.f32 %v3607, %v3609
    %v3612 = vmax.f32 %v3604, %v3610
    %v3613 = vmax.f32 %v3605, %v3611
    %v3614 = vpack.c.bf16 %v3612, %v3612
    %v3615 = vpack.c.bf16 %v3613, %v3613
    %s3616 = scalar_lea.vmem %s7, 8
    %v3617 = vld [vmem:[%s3616] sm:$0xf]
    %v3618 = vld [vmem:[%s3616 + $0x4] sm:$0xf]
    %v3621 = vunpack.c.l.b16 %v3614
    %v3622 = vunpack.c.l.b16 %v3615
    %v3623 = vrot.slane %v3622, 7
    %vm3624 = vcmask 1041409
    %v3625 = vsel %vm3624, %v3623, %v3621
    %v3626 = vpack.c.b16 %v3625, %v3625
    %v3629 = vunpack.c.l.b16 %v3617
    %v3630 = vunpack.c.l.b16 %v3618
    %v3631 = vpack.c.b16 %v3630, %v3629
    %v3634 = vsel %vm3403, %v3626, 0
    %3636 = vmatprep.subr.bf16.mxu0 0
    %3637 = vmatpush1.bf16.msra.mxu0 %v3631
    %3638 = vmatprep.subr.bf16.mxu0 0
    %3639 = vmatpush1.bf16.msra.mxu0 0
    %3640 = vmatprep.subr.bf16.mxu0 0
    %3641 = vmatpush1.bf16.msra.mxu0 0
    %3642 = vmatprep.subr.bf16.mxu0 0
    %3643 = vmatpush1.bf16.msra.mxu0 0
    %3644 = vmatprep.subr.bf16.mxu0 0
    %3645 = vmatpush1.bf16.msra.mxu0 0
    %3646 = vmatprep.subr.bf16.mxu0 0
    %3647 = vmatpush1.bf16.msra.mxu0 0
    %3648 = vmatprep.subr.bf16.mxu0 0
    %3649 = vmatpush1.bf16.msra.mxu0 0
    %3650 = vmatprep.subr.bf16.mxu0 0
    %3651 = vmatpush1.bf16.msra.mxu0 0
    %3652 = vmatprep.subr.bf16.mxu0 0
    %3653 = vmatpush1.bf16.msra.mxu0 0
    %3654 = vmatprep.subr.bf16.mxu0 0
    %3655 = vmatpush1.bf16.msra.mxu0 0
    %3656 = vmatprep.subr.bf16.mxu0 0
    %3657 = vmatpush1.bf16.msra.mxu0 0
    %3658 = vmatprep.subr.bf16.mxu0 0
    %3659 = vmatpush1.bf16.msra.mxu0 0
    %3660 = vmatprep.subr.bf16.mxu0 0
    %3661 = vmatpush1.bf16.msra.mxu0 0
    %3662 = vmatprep.subr.bf16.mxu0 0
    %3663 = vmatpush1.bf16.msra.mxu0 0
    %3664 = vmatprep.subr.bf16.mxu0 0
    %3665 = vmatpush1.bf16.msra.mxu0 0
    %3666 = vmatprep.subr.bf16.mxu0 0
    %3667 = vmatpush1.bf16.msra.mxu0 0
    %3668 = vmatprep.mubr.bf16.mxu0 0
    %3669 = vmatmul.mubr.bf16.gmra.mrb[0].mxu0 %v3634
    %v3670 = vpop.f32.mrb[0].mxu0
    %v3671 = vadd.f32 0.0, %v3670
    %v3672 = vpop.f32.mrb[0].mxu0
    %v3673 = vpop.f32.mrb[0].mxu0
    %v3674 = vpop.f32.mrb[0].mxu0
    %3675 = vdwg.mxu0
    %v3678 = vunpack.c.l.b16 %v3596
    %v3679 = vunpack.c.l.b16 %v3597
    %v3680 = vrot.slane %v3679, 7
    %v3681 = vsel %vm3624, %v3680, %v3678
    %v3682 = vpack.c.b16 %v3681, %v3681
    %v3685 = vunpack.c.l.b16 %v3598
    %v3686 = vunpack.c.l.b16 %v3599
    %v3687 = vpack.c.b16 %v3686, %v3685
    %v3690 = vsel %vm3403, %v3682, 0
    %3692 = vmatprep.subr.bf16.mxu0 0
    %3693 = vmatpush1.bf16.msra.mxu0 %v3687
    %3694 = vmatprep.subr.bf16.mxu0 0
    %3695 = vmatpush1.bf16.msra.mxu0 0
    %3696 = vmatprep.subr.bf16.mxu0 0
    %3697 = vmatpush1.bf16.msra.mxu0 0
    %3698 = vmatprep.subr.bf16.mxu0 0
    %3699 = vmatpush1.bf16.msra.mxu0 0
    %3700 = vmatprep.subr.bf16.mxu0 0
    %3701 = vmatpush1.bf16.msra.mxu0 0
    %3702 = vmatprep.subr.bf16.mxu0 0
    %3703 = vmatpush1.bf16.msra.mxu0 0
    %3704 = vmatprep.subr.bf16.mxu0 0
    %3705 = vmatpush1.bf16.msra.mxu0 0
    %3706 = vmatprep.subr.bf16.mxu0 0
    %3707 = vmatpush1.bf16.msra.mxu0 0
    %3708 = vmatprep.subr.bf16.mxu0 0
    %3709 = vmatpush1.bf16.msra.mxu0 0
    %3710 = vmatprep.subr.bf16.mxu0 0
    %3711 = vmatpush1.bf16.msra.mxu0 0
    %3712 = vmatprep.subr.bf16.mxu0 0
    %3713 = vmatpush1.bf16.msra.mxu0 0
    %3714 = vmatprep.subr.bf16.mxu0 0
    %3715 = vmatpush1.bf16.msra.mxu0 0
    %3716 = vmatprep.subr.bf16.mxu0 0
    %3717 = vmatpush1.bf16.msra.mxu0 0
    %3718 = vmatprep.subr.bf16.mxu0 0
    %3719 = vmatpush1.bf16.msra.mxu0 0
    %3720 = vmatprep.subr.bf16.mxu0 0
    %3721 = vmatpush1.bf16.msra.mxu0 0
    %3722 = vmatprep.subr.bf16.mxu0 0
    %3723 = vmatpush1.bf16.msra.mxu0 0
    %3724 = vmatprep.mubr.bf16.mxu0 0
    %3725 = vmatmul.mubr.bf16.gmra.mrb[0].mxu0 %v3690
    %v3726 = vpop.f32.mrb[0].mxu0
    %v3727 = vadd.f32 %v3671, %v3726
    %v3728 = vpop.f32.mrb[0].mxu0
    %v3729 = vpop.f32.mrb[0].mxu0
    %v3730 = vpop.f32.mrb[0].mxu0
    %3731 = vdwg.mxu0
    %v3732 = vld [vmem:[#allocation2 + $0x4] sm:$0x1]
    %v3733 = vld [vmem:[#allocation2 + $0x44] sm:$0x1]
    %v3734 = vld [vmem:[#allocation2 + $0x5] sm:$0x1]
    %v3735 = vld [vmem:[#allocation2 + $0x45] sm:$0x1]
    %v3736 = vmax.f32 %v3732, %v3734
    %v3737 = vmax.f32 %v3733, %v3735
    %v3738 = vld [vmem:[%s3587 + $0x4] sm:$0x1]
    %v3739 = vld [vmem:[%s3587 + $0x44] sm:$0x1]
    %v3740 = vld [vmem:[%s3587 + $0x5] sm:$0x1]
    %v3741 = vld [vmem:[%s3587 + $0x45] sm:$0x1]
    %v3742 = vmax.f32 %v3738, %v3740
    %v3743 = vmax.f32 %v3739, %v3741
    %v3744 = vmax.f32 %v3736, %v3742
    %v3745 = vmax.f32 %v3737, %v3743
    %v3746 = vpack.c.bf16 %v3744, %v3744
    %v3747 = vpack.c.bf16 %v3745, %v3745
    %s3748 = scalar_lea.vmem %s7, 16
    %v3749 = vld [vmem:[%s3748] sm:$0xf]
    %v3750 = vld [vmem:[%s3748 + $0x4] sm:$0xf]
    %v3753 = vunpack.c.l.b16 %v3746
    %v3754 = vunpack.c.l.b16 %v3747
    %v3755 = vrot.slane %v3754, 7
    %v3756 = vsel %vm3624, %v3755, %v3753
    %v3757 = vpack.c.b16 %v3756, %v3756
    %v3760 = vunpack.c.l.b16 %v3749
    %v3761 = vunpack.c.l.b16 %v3750
    %v3762 = vpack.c.b16 %v3761, %v3760
    %v3765 = vsel %vm3403, %v3757, 0
    %3767 = vmatprep.subr.bf16.mxu0 0
    %3768 = vmatpush1.bf16.msra.mxu0 %v3762
    %3769 = vmatprep.subr.bf16.mxu0 0
    %3770 = vmatpush1.bf16.msra.mxu0 0
    %3771 = vmatprep.subr.bf16.mxu0 0
    %3772 = vmatpush1.bf16.msra.mxu0 0
    %3773 = vmatprep.subr.bf16.mxu0 0
    %3774 = vmatpush1.bf16.msra.mxu0 0
    %3775 = vmatprep.subr.bf16.mxu0 0
    %3776 = vmatpush1.bf16.msra.mxu0 0
    %3777 = vmatprep.subr.bf16.mxu0 0
    %3778 = vmatpush1.bf16.msra.mxu0 0
    %3779 = vmatprep.subr.bf16.mxu0 0
    %3780 = vmatpush1.bf16.msra.mxu0 0
    %3781 = vmatprep.subr.bf16.mxu0 0
    %3782 = vmatpush1.bf16.msra.mxu0 0
    %3783 = vmatprep.subr.bf16.mxu0 0
    %3784 = vmatpush1.bf16.msra.mxu0 0
    %3785 = vmatprep.subr.bf16.mxu0 0
    %3786 = vmatpush1.bf16.msra.mxu0 0
    %3787 = vmatprep.subr.bf16.mxu0 0
    %3788 = vmatpush1.bf16.msra.mxu0 0
    %3789 = vmatprep.subr.bf16.mxu0 0
    %3790 = vmatpush1.bf16.msra.mxu0 0
    %3791 = vmatprep.subr.bf16.mxu0 0
    %3792 = vmatpush1.bf16.msra.mxu0 0
    %3793 = vmatprep.subr.bf16.mxu0 0
    %3794 = vmatpush1.bf16.msra.mxu0 0
    %3795 = vmatprep.subr.bf16.mxu0 0
    %3796 = vmatpush1.bf16.msra.mxu0 0
    %3797 = vmatprep.subr.bf16.mxu0 0
    %3798 = vmatpush1.bf16.msra.mxu0 0
    %3799 = vmatprep.mubr.bf16.mxu0 0
    %3800 = vmatmul.mubr.bf16.gmra.mrb[0].mxu0 %v3765
    %v3801 = vpop.f32.mrb[0].mxu0
    %v3802 = vadd.f32 0.0, %v3801
    %v3803 = vpop.f32.mrb[0].mxu0
    %v3804 = vpop.f32.mrb[0].mxu0
    %v3805 = vpop.f32.mrb[0].mxu0
    %3806 = vdwg.mxu0
    %v3807 = vadd.f32 %v3727, %v3802
    %v3808 = vld [vmem:[#allocation2 + $0x6] sm:$0x1]
    %v3809 = vld [vmem:[#allocation2 + $0x46] sm:$0x1]
    %v3810 = vld [vmem:[#allocation2 + $0x7] sm:$0x1]
    %v3811 = vld [vmem:[#allocation2 + $0x47] sm:$0x1]
    %v3812 = vmax.f32 %v3808, %v3810
    %v3813 = vmax.f32 %v3809, %v3811
    %v3814 = vld [vmem:[%s3587 + $0x6] sm:$0x1]
    %v3815 = vld [vmem:[%s3587 + $0x46] sm:$0x1]
    %v3816 = vld [vmem:[%s3587 + $0x7] sm:$0x1]
    %v3817 = vld [vmem:[%s3587 + $0x47] sm:$0x1]
    %v3818 = vmax.f32 %v3814, %v3816
    %v3819 = vmax.f32 %v3815, %v3817
    %v3820 = vmax.f32 %v3812, %v3818
    %v3821 = vmax.f32 %v3813, %v3819
    %v3822 = vpack.c.bf16 %v3820, %v3820
    %v3823 = vpack.c.bf16 %v3821, %v3821
    %s3824 = scalar_lea.vmem %s7, 24
    %v3825 = vld [vmem:[%s3824] sm:$0xf]
    %v3826 = vld [vmem:[%s3824 + $0x4] sm:$0xf]
    %v3829 = vunpack.c.l.b16 %v3822
    %v3830 = vunpack.c.l.b16 %v3823
    %v3831 = vrot.slane %v3830, 7
    %v3832 = vsel %vm3624, %v3831, %v3829
    %v3833 = vpack.c.b16 %v3832, %v3832
    %v3836 = vunpack.c.l.b16 %v3825
    %v3837 = vunpack.c.l.b16 %v3826
    %v3838 = vpack.c.b16 %v3837, %v3836
    %v3841 = vsel %vm3403, %v3833, 0
    %3843 = vmatprep.subr.bf16.mxu0 0
    %3844 = vmatpush1.bf16.msra.mxu0 %v3838
    %3845 = vmatprep.subr.bf16.mxu0 0
    %3846 = vmatpush1.bf16.msra.mxu0 0
    %3847 = vmatprep.subr.bf16.mxu0 0
    %3848 = vmatpush1.bf16.msra.mxu0 0
    %3849 = vmatprep.subr.bf16.mxu0 0
    %3850 = vmatpush1.bf16.msra.mxu0 0
    %3851 = vmatprep.subr.bf16.mxu0 0
    %3852 = vmatpush1.bf16.msra.mxu0 0
    %3853 = vmatprep.subr.bf16.mxu0 0
    %3854 = vmatpush1.bf16.msra.mxu0 0
    %3855 = vmatprep.subr.bf16.mxu0 0
    %3856 = vmatpush1.bf16.msra.mxu0 0
    %3857 = vmatprep.subr.bf16.mxu0 0
    %3858 = vmatpush1.bf16.msra.mxu0 0
    %3859 = vmatprep.subr.bf16.mxu0 0
    %3860 = vmatpush1.bf16.msra.mxu0 0
    %3861 = vmatprep.subr.bf16.mxu0 0
    %3862 = vmatpush1.bf16.msra.mxu0 0
    %3863 = vmatprep.subr.bf16.mxu0 0
    %3864 = vmatpush1.bf16.msra.mxu0 0
    %3865 = vmatprep.subr.bf16.mxu0 0
    %3866 = vmatpush1.bf16.msra.mxu0 0
    %3867 = vmatprep.subr.bf16.mxu0 0
    %3868 = vmatpush1.bf16.msra.mxu0 0
    %3869 = vmatprep.subr.bf16.mxu0 0
    %3870 = vmatpush1.bf16.msra.mxu0 0
    %3871 = vmatprep.subr.bf16.mxu0 0
    %3872 = vmatpush1.bf16.msra.mxu0 0
    %3873 = vmatprep.subr.bf16.mxu0 0
    %3874 = vmatpush1.bf16.msra.mxu0 0
    %3875 = vmatprep.mubr.bf16.mxu0 0
    %3876 = vmatmul.mubr.bf16.gmra.mrb[0].mxu0 %v3841
    %v3877 = vpop.f32.mrb[0].mxu0
    %v3878 = vadd.f32 0.0, %v3877
    %v3879 = vpop.f32.mrb[0].mxu0
    %v3880 = vpop.f32.mrb[0].mxu0
    %v3881 = vpop.f32.mrb[0].mxu0
    %3882 = vdwg.mxu0
    %v3883 = vadd.f32 %v3807, %v3878
    %s3884 = scalar_lea.vmem [#allocation2], 16
    %v3885 = vld [vmem:[%s3884] sm:$0x1]
    %v3886 = vld [vmem:[%s3884 + $0x40] sm:$0x1]
    %v3887 = vld [vmem:[%s3884 + $0x1] sm:$0x1]
    %v3888 = vld [vmem:[%s3884 + $0x41] sm:$0x1]
    %v3889 = vmax.f32 %v3885, %v3887
    %v3890 = vmax.f32 %v3886, %v3888
    %s3891 = scalar_lea.vmem [#allocation2], 24
    %v3892 = vld [vmem:[%s3891] sm:$0x1]
    %v3893 = vld [vmem:[%s3891 + $0x40] sm:$0x1]
    %v3894 = vld [vmem:[%s3891 + $0x1] sm:$0x1]
    %v3895 = vld [vmem:[%s3891 + $0x41] sm:$0x1]
    %v3896 = vmax.f32 %v3892, %v3894
    %v3897 = vmax.f32 %v3893, %v3895
    %v3898 = vmax.f32 %v3889, %v3896
    %v3899 = vmax.f32 %v3890, %v3897
    %v3900 = vpack.c.bf16 %v3898, %v3898
    %v3901 = vpack.c.bf16 %v3899, %v3899
    %s3902 = scalar_lea.vmem %s7, 32
    %v3903 = vld [vmem:[%s3902] sm:$0xf]
    %v3904 = vld [vmem:[%s3902 + $0x4] sm:$0xf]
    %v3907 = vunpack.c.l.b16 %v3900
    %v3908 = vunpack.c.l.b16 %v3901
    %v3909 = vrot.slane %v3908, 7
    %v3910 = vsel %vm3624, %v3909, %v3907
    %v3911 = vpack.c.b16 %v3910, %v3910
    %v3914 = vunpack.c.l.b16 %v3903
    %v3915 = vunpack.c.l.b16 %v3904
    %v3916 = vpack.c.b16 %v3915, %v3914
    %v3919 = vsel %vm3403, %v3911, 0
    %3921 = vmatprep.subr.bf16.mxu0 0
    %3922 = vmatpush1.bf16.msra.mxu0 %v3916
    %3923 = vmatprep.subr.bf16.mxu0 0
    %3924 = vmatpush1.bf16.msra.mxu0 0
    %3925 = vmatprep.subr.bf16.mxu0 0
    %3926 = vmatpush1.bf16.msra.mxu0 0
    %3927 = vmatprep.subr.bf16.mxu0 0
    %3928 = vmatpush1.bf16.msra.mxu0 0
    %3929 = vmatprep.subr.bf16.mxu0 0
    %3930 = vmatpush1.bf16.msra.mxu0 0
    %3931 = vmatprep.subr.bf16.mxu0 0
    %3932 = vmatpush1.bf16.msra.mxu0 0
    %3933 = vmatprep.subr.bf16.mxu0 0
    %3934 = vmatpush1.bf16.msra.mxu0 0
    %3935 = vmatprep.subr.bf16.mxu0 0
    %3936 = vmatpush1.bf16.msra.mxu0 0
    %3937 = vmatprep.subr.bf16.mxu0 0
    %3938 = vmatpush1.bf16.msra.mxu0 0
    %3939 = vmatprep.subr.bf16.mxu0 0
    %3940 = vmatpush1.bf16.msra.mxu0 0
    %3941 = vmatprep.subr.bf16.mxu0 0
    %3942 = vmatpush1.bf16.msra.mxu0 0
    %3943 = vmatprep.subr.bf16.mxu0 0
    %3944 = vmatpush1.bf16.msra.mxu0 0
    %3945 = vmatprep.subr.bf16.mxu0 0
    %3946 = vmatpush1.bf16.msra.mxu0 0
    %3947 = vmatprep.subr.bf16.mxu0 0
    %3948 = vmatpush1.bf16.msra.mxu0 0
    %3949 = vmatprep.subr.bf16.mxu0 0
    %3950 = vmatpush1.bf16.msra.mxu0 0
    %3951 = vmatprep.subr.bf16.mxu0 0
    %3952 = vmatpush1.bf16.msra.mxu0 0
    %3953 = vmatprep.mubr.bf16.mxu0 0
    %3954 = vmatmul.mubr.bf16.gmra.mrb[0].mxu0 %v3919
    %v3955 = vpop.f32.mrb[0].mxu0
    %v3956 = vadd.f32 0.0, %v3955
    %v3957 = vpop.f32.mrb[0].mxu0
    %v3958 = vpop.f32.mrb[0].mxu0
    %v3959 = vpop.f32.mrb[0].mxu0
    %3960 = vdwg.mxu0
    %v3961 = vadd.f32 %v3883, %v3956
    %v3962 = vld [vmem:[%s3884 + $0x2] sm:$0x1]
    %v3963 = vld [vmem:[%s3884 + $0x42] sm:$0x1]
    %v3964 = vld [vmem:[%s3884 + $0x3] sm:$0x1]
    %v3965 = vld [vmem:[%s3884 + $0x43] sm:$0x1]
    %v3966 = vmax.f32 %v3962, %v3964
    %v3967 = vmax.f32 %v3963, %v3965
    %v3968 = vld [vmem:[%s3891 + $0x2] sm:$0x1]
    %v3969 = vld [vmem:[%s3891 + $0x42] sm:$0x1]
    %v3970 = vld [vmem:[%s3891 + $0x3] sm:$0x1]
    %v3971 = vld [vmem:[%s3891 + $0x43] sm:$0x1]
    %v3972 = vmax.f32 %v3968, %v3970
    %v3973 = vmax.f32 %v3969, %v3971
    %v3974 = vmax.f32 %v3966, %v3972
    %v3975 = vmax.f32 %v3967, %v3973
    %v3976 = vpack.c.bf16 %v3974, %v3974
    %v3977 = vpack.c.bf16 %v3975, %v3975
    %s3978 = scalar_lea.vmem %s7, 40
    %v3979 = vld [vmem:[%s3978] sm:$0xf]
    %v3980 = vld [vmem:[%s3978 + $0x4] sm:$0xf]
    %v3983 = vunpack.c.l.b16 %v3976
    %v3984 = vunpack.c.l.b16 %v3977
    %v3985 = vrot.slane %v3984, 7
    %v3986 = vsel %vm3624, %v3985, %v3983
    %v3987 = vpack.c.b16 %v3986, %v3986
    %v3990 = vunpack.c.l.b16 %v3979
    %v3991 = vunpack.c.l.b16 %v3980
    %v3992 = vpack.c.b16 %v3991, %v3990
    %v3995 = vsel %vm3403, %v3987, 0
    %3997 = vmatprep.subr.bf16.mxu0 0
    %3998 = vmatpush1.bf16.msra.mxu0 %v3992
    %3999 = vmatprep.subr.bf16.mxu0 0
    %4000 = vmatpush1.bf16.msra.mxu0 0
    %4001 = vmatprep.subr.bf16.mxu0 0
    %4002 = vmatpush1.bf16.msra.mxu0 0
    %4003 = vmatprep.subr.bf16.mxu0 0
    %4004 = vmatpush1.bf16.msra.mxu0 0
    %4005 = vmatprep.subr.bf16.mxu0 0
    %4006 = vmatpush1.bf16.msra.mxu0 0
    %4007 = vmatprep.subr.bf16.mxu0 0
    %4008 = vmatpush1.bf16.msra.mxu0 0
    %4009 = vmatprep.subr.bf16.mxu0 0
    %4010 = vmatpush1.bf16.msra.mxu0 0
    %4011 = vmatprep.subr.bf16.mxu0 0
    %4012 = vmatpush1.bf16.msra.mxu0 0
    %4013 = vmatprep.subr.bf16.mxu0 0
    %4014 = vmatpush1.bf16.msra.mxu0 0
    %4015 = vmatprep.subr.bf16.mxu0 0
    %4016 = vmatpush1.bf16.msra.mxu0 0
    %4017 = vmatprep.subr.bf16.mxu0 0
    %4018 = vmatpush1.bf16.msra.mxu0 0
    %4019 = vmatprep.subr.bf16.mxu0 0
    %4020 = vmatpush1.bf16.msra.mxu0 0
    %4021 = vmatprep.subr.bf16.mxu0 0
    %4022 = vmatpush1.bf16.msra.mxu0 0
    %4023 = vmatprep.subr.bf16.mxu0 0
    %4024 = vmatpush1.bf16.msra.mxu0 0
    %4025 = vmatprep.subr.bf16.mxu0 0
    %4026 = vmatpush1.bf16.msra.mxu0 0
    %4027 = vmatprep.subr.bf16.mxu0 0
    %4028 = vmatpush1.bf16.msra.mxu0 0
    %4029 = vmatprep.mubr.bf16.mxu0 0
    %4030 = vmatmul.mubr.bf16.gmra.mrb[0].mxu0 %v3995
    %v4031 = vpop.f32.mrb[0].mxu0
    %v4032 = vadd.f32 0.0, %v4031
    %v4033 = vpop.f32.mrb[0].mxu0
    %v4034 = vpop.f32.mrb[0].mxu0
    %v4035 = vpop.f32.mrb[0].mxu0
    %4036 = vdwg.mxu0
    %v4037 = vadd.f32 %v3961, %v4032
    %v4038 = vld [vmem:[%s3884 + $0x4] sm:$0x1]
    %v4039 = vld [vmem:[%s3884 + $0x44] sm:$0x1]
    %v4040 = vld [vmem:[%s3884 + $0x5] sm:$0x1]
    %v4041 = vld [vmem:[%s3884 + $0x45] sm:$0x1]
    %v4042 = vmax.f32 %v4038, %v4040
    %v4043 = vmax.f32 %v4039, %v4041
    %v4044 = vld [vmem:[%s3891 + $0x4] sm:$0x1]
    %v4045 = vld [vmem:[%s3891 + $0x44] sm:$0x1]
    %v4046 = vld [vmem:[%s3891 + $0x5] sm:$0x1]
    %v4047 = vld [vmem:[%s3891 + $0x45] sm:$0x1]
    %v4048 = vmax.f32 %v4044, %v4046
    %v4049 = vmax.f32 %v4045, %v4047
    %v4050 = vmax.f32 %v4042, %v4048
    %v4051 = vmax.f32 %v4043, %v4049
    %v4052 = vpack.c.bf16 %v4050, %v4050
    %v4053 = vpack.c.bf16 %v4051, %v4051
    %s4054 = scalar_lea.vmem %s7, 48
    %v4055 = vld [vmem:[%s4054] sm:$0xf]
    %v4056 = vld [vmem:[%s4054 + $0x4] sm:$0xf]
    %v4059 = vunpack.c.l.b16 %v4052
    %v4060 = vunpack.c.l.b16 %v4053
    %v4061 = vrot.slane %v4060, 7
    %v4062 = vsel %vm3624, %v4061, %v4059
    %v4063 = vpack.c.b16 %v4062, %v4062
    %v4066 = vunpack.c.l.b16 %v4055
    %v4067 = vunpack.c.l.b16 %v4056
    %v4068 = vpack.c.b16 %v4067, %v4066
    %v4071 = vsel %vm3403, %v4063, 0
    %4073 = vmatprep.subr.bf16.mxu0 0
    %4074 = vmatpush1.bf16.msra.mxu0 %v4068
    %4075 = vmatprep.subr.bf16.mxu0 0
    %4076 = vmatpush1.bf16.msra.mxu0 0
    %4077 = vmatprep.subr.bf16.mxu0 0
    %4078 = vmatpush1.bf16.msra.mxu0 0
    %4079 = vmatprep.subr.bf16.mxu0 0
    %4080 = vmatpush1.bf16.msra.mxu0 0
    %4081 = vmatprep.subr.bf16.mxu0 0
    %4082 = vmatpush1.bf16.msra.mxu0 0
    %4083 = vmatprep.subr.bf16.mxu0 0
    %4084 = vmatpush1.bf16.msra.mxu0 0
    %4085 = vmatprep.subr.bf16.mxu0 0
    %4086 = vmatpush1.bf16.msra.mxu0 0
    %4087 = vmatprep.subr.bf16.mxu0 0
    %4088 = vmatpush1.bf16.msra.mxu0 0
    %4089 = vmatprep.subr.bf16.mxu0 0
    %4090 = vmatpush1.bf16.msra.mxu0 0
    %4091 = vmatprep.subr.bf16.mxu0 0
    %4092 = vmatpush1.bf16.msra.mxu0 0
    %4093 = vmatprep.subr.bf16.mxu0 0
    %4094 = vmatpush1.bf16.msra.mxu0 0
    %4095 = vmatprep.subr.bf16.mxu0 0
    %4096 = vmatpush1.bf16.msra.mxu0 0
    %4097 = vmatprep.subr.bf16.mxu0 0
    %4098 = vmatpush1.bf16.msra.mxu0 0
    %4099 = vmatprep.subr.bf16.mxu0 0
    %4100 = vmatpush1.bf16.msra.mxu0 0
    %4101 = vmatprep.subr.bf16.mxu0 0
    %4102 = vmatpush1.bf16.msra.mxu0 0
    %4103 = vmatprep.subr.bf16.mxu0 0
    %4104 = vmatpush1.bf16.msra.mxu0 0
    %4105 = vmatprep.mubr.bf16.mxu0 0
    %4106 = vmatmul.mubr.bf16.gmra.mrb[0].mxu0 %v4071
    %v4107 = vpop.f32.mrb[0].mxu0
    %v4108 = vadd.f32 0.0, %v4107
    %v4109 = vpop.f32.mrb[0].mxu0
    %v4110 = vpop.f32.mrb[0].mxu0
    %v4111 = vpop.f32.mrb[0].mxu0
    %4112 = vdwg.mxu0
    %v4113 = vadd.f32 %v4037, %v4108
    %v4114 = vld [vmem:[%s3884 + $0x6] sm:$0x1]
    %v4115 = vld [vmem:[%s3884 + $0x46] sm:$0x1]
    %v4116 = vld [vmem:[%s3884 + $0x7] sm:$0x1]
    %v4117 = vld [vmem:[%s3884 + $0x47] sm:$0x1]
    %v4118 = vmax.f32 %v4114, %v4116
    %v4119 = vmax.f32 %v4115, %v4117
    %v4120 = vld [vmem:[%s3891 + $0x6] sm:$0x1]
    %v4121 = vld [vmem:[%s3891 + $0x46] sm:$0x1]
    %v4122 = vld [vmem:[%s3891 + $0x7] sm:$0x1]
    %v4123 = vld [vmem:[%s3891 + $0x47] sm:$0x1]
    %v4124 = vmax.f32 %v4120, %v4122
    %v4125 = vmax.f32 %v4121, %v4123
    %v4126 = vmax.f32 %v4118, %v4124
    %v4127 = vmax.f32 %v4119, %v4125
    %v4128 = vpack.c.bf16 %v4126, %v4126
    %v4129 = vpack.c.bf16 %v4127, %v4127
    %s4130 = scalar_lea.vmem %s7, 56
    %v4131 = vld [vmem:[%s4130] sm:$0xf]
    %v4132 = vld [vmem:[%s4130 + $0x4] sm:$0xf]
    %v4135 = vunpack.c.l.b16 %v4128
    %v4136 = vunpack.c.l.b16 %v4129
    %v4137 = vrot.slane %v4136, 7
    %v4138 = vsel %vm3624, %v4137, %v4135
    %v4139 = vpack.c.b16 %v4138, %v4138
    %v4142 = vunpack.c.l.b16 %v4131
    %v4143 = vunpack.c.l.b16 %v4132
    %v4144 = vpack.c.b16 %v4143, %v4142
    %v4147 = vsel %vm3403, %v4139, 0
    %4149 = vmatprep.subr.bf16.mxu0 0
    %4150 = vmatpush1.bf16.msra.mxu0 %v4144
    %4151 = vmatprep.subr.bf16.mxu0 0
    %4152 = vmatpush1.bf16.msra.mxu0 0
    %4153 = vmatprep.subr.bf16.mxu0 0
    %4154 = vmatpush1.bf16.msra.mxu0 0
    %4155 = vmatprep.subr.bf16.mxu0 0
    %4156 = vmatpush1.bf16.msra.mxu0 0
    %4157 = vmatprep.subr.bf16.mxu0 0
    %4158 = vmatpush1.bf16.msra.mxu0 0
    %4159 = vmatprep.subr.bf16.mxu0 0
    %4160 = vmatpush1.bf16.msra.mxu0 0
    %4161 = vmatprep.subr.bf16.mxu0 0
    %4162 = vmatpush1.bf16.msra.mxu0 0
    %4163 = vmatprep.subr.bf16.mxu0 0
    %4164 = vmatpush1.bf16.msra.mxu0 0
    %4165 = vmatprep.subr.bf16.mxu0 0
    %4166 = vmatpush1.bf16.msra.mxu0 0
    %4167 = vmatprep.subr.bf16.mxu0 0
    %4168 = vmatpush1.bf16.msra.mxu0 0
    %4169 = vmatprep.subr.bf16.mxu0 0
    %4170 = vmatpush1.bf16.msra.mxu0 0
    %4171 = vmatprep.subr.bf16.mxu0 0
    %4172 = vmatpush1.bf16.msra.mxu0 0
    %4173 = vmatprep.subr.bf16.mxu0 0
    %4174 = vmatpush1.bf16.msra.mxu0 0
    %4175 = vmatprep.subr.bf16.mxu0 0
    %4176 = vmatpush1.bf16.msra.mxu0 0
    %4177 = vmatprep.subr.bf16.mxu0 0
    %4178 = vmatpush1.bf16.msra.mxu0 0
    %4179 = vmatprep.subr.bf16.mxu0 0
    %4180 = vmatpush1.bf16.msra.mxu0 0
    %4181 = vmatprep.mubr.bf16.mxu0 0
    %4182 = vmatmul.mubr.bf16.gmra.mrb[0].mxu0 %v4147
    %v4183 = vpop.f32.mrb[0].mxu0
    %v4184 = vadd.f32 0.0, %v4183
    %v4185 = vpop.f32.mrb[0].mxu0
    %v4186 = vpop.f32.mrb[0].mxu0
    %v4187 = vpop.f32.mrb[0].mxu0
    %4188 = vdwg.mxu0
    %v4189 = vadd.f32 %v4113, %v4184
    %s4190 = scalar_lea.vmem [#allocation2], 32
    %v4191 = vld [vmem:[%s4190] sm:$0x1]
    %v4192 = vld [vmem:[%s4190 + $0x40] sm:$0x1]
    %v4193 = vld [vmem:[%s4190 + $0x1] sm:$0x1]
    %v4194 = vld [vmem:[%s4190 + $0x41] sm:$0x1]
    %v4195 = vmax.f32 %v4191, %v4193
    %v4196 = vmax.f32 %v4192, %v4194
    %s4197 = scalar_lea.vmem [#allocation2], 40
    %v4198 = vld [vmem:[%s4197] sm:$0x1]
    %v4199 = vld [vmem:[%s4197 + $0x40] sm:$0x1]
    %v4200 = vld [vmem:[%s4197 + $0x1] sm:$0x1]
    %v4201 = vld [vmem:[%s4197 + $0x41] sm:$0x1]
    %v4202 = vmax.f32 %v4198, %v4200
    %v4203 = vmax.f32 %v4199, %v4201
    %v4204 = vmax.f32 %v4195, %v4202
    %v4205 = vmax.f32 %v4196, %v4203
    %v4206 = vpack.c.bf16 %v4204, %v4204
    %v4207 = vpack.c.bf16 %v4205, %v4205
    %s4208 = scalar_lea.vmem %s7, 64
    %v4209 = vld [vmem:[%s4208] sm:$0xf]
    %v4210 = vld [vmem:[%s4208 + $0x4] sm:$0xf]
    %v4213 = vunpack.c.l.b16 %v4206
    %v4214 = vunpack.c.l.b16 %v4207
    %v4215 = vrot.slane %v4214, 7
    %v4216 = vsel %vm3624, %v4215, %v4213
    %v4217 = vpack.c.b16 %v4216, %v4216
    %v4220 = vunpack.c.l.b16 %v4209
    %v4221 = vunpack.c.l.b16 %v4210
    %v4222 = vpack.c.b16 %v4221, %v4220
    %v4225 = vsel %vm3403, %v4217, 0
    %4227 = vmatprep.subr.bf16.mxu0 0
    %4228 = vmatpush1.bf16.msra.mxu0 %v4222
    %4229 = vmatprep.subr.bf16.mxu0 0
    %4230 = vmatpush1.bf16.msra.mxu0 0
    %4231 = vmatprep.subr.bf16.mxu0 0
    %4232 = vmatpush1.bf16.msra.mxu0 0
    %4233 = vmatprep.subr.bf16.mxu0 0
    %4234 = vmatpush1.bf16.msra.mxu0 0
    %4235 = vmatprep.subr.bf16.mxu0 0
    %4236 = vmatpush1.bf16.msra.mxu0 0
    %4237 = vmatprep.subr.bf16.mxu0 0
    %4238 = vmatpush1.bf16.msra.mxu0 0
    %4239 = vmatprep.subr.bf16.mxu0 0
    %4240 = vmatpush1.bf16.msra.mxu0 0
    %4241 = vmatprep.subr.bf16.mxu0 0
    %4242 = vmatpush1.bf16.msra.mxu0 0
    %4243 = vmatprep.subr.bf16.mxu0 0
    %4244 = vmatpush1.bf16.msra.mxu0 0
    %4245 = vmatprep.subr.bf16.mxu0 0
    %4246 = vmatpush1.bf16.msra.mxu0 0
    %4247 = vmatprep.subr.bf16.mxu0 0
    %4248 = vmatpush1.bf16.msra.mxu0 0
    %4249 = vmatprep.subr.bf16.mxu0 0
    %4250 = vmatpush1.bf16.msra.mxu0 0
    %4251 = vmatprep.subr.bf16.mxu0 0
    %4252 = vmatpush1.bf16.msra.mxu0 0
    %4253 = vmatprep.subr.bf16.mxu0 0
    %4254 = vmatpush1.bf16.msra.mxu0 0
    %4255 = vmatprep.subr.bf16.mxu0 0
    %4256 = vmatpush1.bf16.msra.mxu0 0
    %4257 = vmatprep.subr.bf16.mxu0 0
    %4258 = vmatpush1.bf16.msra.mxu0 0
    %4259 = vmatprep.mubr.bf16.mxu0 0
    %4260 = vmatmul.mubr.bf16.gmra.mrb[0].mxu0 %v4225
    %v4261 = vpop.f32.mrb[0].mxu0
    %v4262 = vadd.f32 0.0, %v4261
    %v4263 = vpop.f32.mrb[0].mxu0
    %v4264 = vpop.f32.mrb[0].mxu0
    %v4265 = vpop.f32.mrb[0].mxu0
    %4266 = vdwg.mxu0
    %v4267 = vadd.f32 %v4189, %v4262
    %v4268 = vld [vmem:[%s4190 + $0x2] sm:$0x1]
    %v4269 = vld [vmem:[%s4190 + $0x42] sm:$0x1]
    %v4270 = vld [vmem:[%s4190 + $0x3] sm:$0x1]
    %v4271 = vld [vmem:[%s4190 + $0x43] sm:$0x1]
    %v4272 = vmax.f32 %v4268, %v4270
    %v4273 = vmax.f32 %v4269, %v4271
    %v4274 = vld [vmem:[%s4197 + $0x2] sm:$0x1]
    %v4275 = vld [vmem:[%s4197 + $0x42] sm:$0x1]
    %v4276 = vld [vmem:[%s4197 + $0x3] sm:$0x1]
    %v4277 = vld [vmem:[%s4197 + $0x43] sm:$0x1]
    %v4278 = vmax.f32 %v4274, %v4276
    %v4279 = vmax.f32 %v4275, %v4277
    %v4280 = vmax.f32 %v4272, %v4278
    %v4281 = vmax.f32 %v4273, %v4279
    %v4282 = vpack.c.bf16 %v4280, %v4280
    %v4283 = vpack.c.bf16 %v4281, %v4281
    %s4284 = scalar_lea.vmem %s7, 72
    %v4285 = vld [vmem:[%s4284] sm:$0xf]
    %v4286 = vld [vmem:[%s4284 + $0x4] sm:$0xf]
    %v4289 = vunpack.c.l.b16 %v4282
    %v4290 = vunpack.c.l.b16 %v4283
    %v4291 = vrot.slane %v4290, 7
    %v4292 = vsel %vm3624, %v4291, %v4289
    %v4293 = vpack.c.b16 %v4292, %v4292
    %v4296 = vunpack.c.l.b16 %v4285
    %v4297 = vunpack.c.l.b16 %v4286
    %v4298 = vpack.c.b16 %v4297, %v4296
    %v4301 = vsel %vm3403, %v4293, 0
    %4303 = vmatprep.subr.bf16.mxu0 0
    %4304 = vmatpush1.bf16.msra.mxu0 %v4298
    %4305 = vmatprep.subr.bf16.mxu0 0
    %4306 = vmatpush1.bf16.msra.mxu0 0
    %4307 = vmatprep.subr.bf16.mxu0 0
    %4308 = vmatpush1.bf16.msra.mxu0 0
    %4309 = vmatprep.subr.bf16.mxu0 0
    %4310 = vmatpush1.bf16.msra.mxu0 0
    %4311 = vmatprep.subr.bf16.mxu0 0
    %4312 = vmatpush1.bf16.msra.mxu0 0
    %4313 = vmatprep.subr.bf16.mxu0 0
    %4314 = vmatpush1.bf16.msra.mxu0 0
    %4315 = vmatprep.subr.bf16.mxu0 0
    %4316 = vmatpush1.bf16.msra.mxu0 0
    %4317 = vmatprep.subr.bf16.mxu0 0
    %4318 = vmatpush1.bf16.msra.mxu0 0
    %4319 = vmatprep.subr.bf16.mxu0 0
    %4320 = vmatpush1.bf16.msra.mxu0 0
    %4321 = vmatprep.subr.bf16.mxu0 0
    %4322 = vmatpush1.bf16.msra.mxu0 0
    %4323 = vmatprep.subr.bf16.mxu0 0
    %4324 = vmatpush1.bf16.msra.mxu0 0
    %4325 = vmatprep.subr.bf16.mxu0 0
    %4326 = vmatpush1.bf16.msra.mxu0 0
    %4327 = vmatprep.subr.bf16.mxu0 0
    %4328 = vmatpush1.bf16.msra.mxu0 0
    %4329 = vmatprep.subr.bf16.mxu0 0
    %4330 = vmatpush1.bf16.msra.mxu0 0
    %4331 = vmatprep.subr.bf16.mxu0 0
    %4332 = vmatpush1.bf16.msra.mxu0 0
    %4333 = vmatprep.subr.bf16.mxu0 0
    %4334 = vmatpush1.bf16.msra.mxu0 0
    %4335 = vmatprep.mubr.bf16.mxu0 0
    %4336 = vmatmul.mubr.bf16.gmra.mrb[0].mxu0 %v4301
    %v4337 = vpop.f32.mrb[0].mxu0
    %v4338 = vadd.f32 0.0, %v4337
    %v4339 = vpop.f32.mrb[0].mxu0
    %v4340 = vpop.f32.mrb[0].mxu0
    %v4341 = vpop.f32.mrb[0].mxu0
    %4342 = vdwg.mxu0
    %v4343 = vadd.f32 %v4267, %v4338
    %v4344 = vld [vmem:[%s4190 + $0x4] sm:$0x1]
    %v4345 = vld [vmem:[%s4190 + $0x44] sm:$0x1]
    %v4346 = vld [vmem:[%s4190 + $0x5] sm:$0x1]
    %v4347 = vld [vmem:[%s4190 + $0x45] sm:$0x1]
    %v4348 = vmax.f32 %v4344, %v4346
    %v4349 = vmax.f32 %v4345, %v4347
    %v4350 = vld [vmem:[%s4197 + $0x4] sm:$0x1]
    %v4351 = vld [vmem:[%s4197 + $0x44] sm:$0x1]
    %v4352 = vld [vmem:[%s4197 + $0x5] sm:$0x1]
    %v4353 = vld [vmem:[%s4197 + $0x45] sm:$0x1]
    %v4354 = vmax.f32 %v4350, %v4352
    %v4355 = vmax.f32 %v4351, %v4353
    %v4356 = vmax.f32 %v4348, %v4354
    %v4357 = vmax.f32 %v4349, %v4355
    %v4358 = vpack.c.bf16 %v4356, %v4356
    %v4359 = vpack.c.bf16 %v4357, %v4357
    %s4360 = scalar_lea.vmem %s7, 80
    %v4361 = vld [vmem:[%s4360] sm:$0xf]
    %v4362 = vld [vmem:[%s4360 + $0x4] sm:$0xf]
    %v4365 = vunpack.c.l.b16 %v4358
    %v4366 = vunpack.c.l.b16 %v4359
    %v4367 = vrot.slane %v4366, 7
    %v4368 = vsel %vm3624, %v4367, %v4365
    %v4369 = vpack.c.b16 %v4368, %v4368
    %v4372 = vunpack.c.l.b16 %v4361
    %v4373 = vunpack.c.l.b16 %v4362
    %v4374 = vpack.c.b16 %v4373, %v4372
    %v4377 = vsel %vm3403, %v4369, 0
    %4379 = vmatprep.subr.bf16.mxu0 0
    %4380 = vmatpush1.bf16.msra.mxu0 %v4374
    %4381 = vmatprep.subr.bf16.mxu0 0
    %4382 = vmatpush1.bf16.msra.mxu0 0
    %4383 = vmatprep.subr.bf16.mxu0 0
    %4384 = vmatpush1.bf16.msra.mxu0 0
    %4385 = vmatprep.subr.bf16.mxu0 0
    %4386 = vmatpush1.bf16.msra.mxu0 0
    %4387 = vmatprep.subr.bf16.mxu0 0
    %4388 = vmatpush1.bf16.msra.mxu0 0
    %4389 = vmatprep.subr.bf16.mxu0 0
    %4390 = vmatpush1.bf16.msra.mxu0 0
    %4391 = vmatprep.subr.bf16.mxu0 0
    %4392 = vmatpush1.bf16.msra.mxu0 0
    %4393 = vmatprep.subr.bf16.mxu0 0
    %4394 = vmatpush1.bf16.msra.mxu0 0
    %4395 = vmatprep.subr.bf16.mxu0 0
    %4396 = vmatpush1.bf16.msra.mxu0 0
    %4397 = vmatprep.subr.bf16.mxu0 0
    %4398 = vmatpush1.bf16.msra.mxu0 0
    %4399 = vmatprep.subr.bf16.mxu0 0
    %4400 = vmatpush1.bf16.msra.mxu0 0
    %4401 = vmatprep.subr.bf16.mxu0 0
    %4402 = vmatpush1.bf16.msra.mxu0 0
    %4403 = vmatprep.subr.bf16.mxu0 0
    %4404 = vmatpush1.bf16.msra.mxu0 0
    %4405 = vmatprep.subr.bf16.mxu0 0
    %4406 = vmatpush1.bf16.msra.mxu0 0
    %4407 = vmatprep.subr.bf16.mxu0 0
    %4408 = vmatpush1.bf16.msra.mxu0 0
    %4409 = vmatprep.subr.bf16.mxu0 0
    %4410 = vmatpush1.bf16.msra.mxu0 0
    %4411 = vmatprep.mubr.bf16.mxu0 0
    %4412 = vmatmul.mubr.bf16.gmra.mrb[0].mxu0 %v4377
    %v4413 = vpop.f32.mrb[0].mxu0
    %v4414 = vadd.f32 0.0, %v4413
    %v4415 = vpop.f32.mrb[0].mxu0
    %v4416 = vpop.f32.mrb[0].mxu0
    %v4417 = vpop.f32.mrb[0].mxu0
    %4418 = vdwg.mxu0
    %v4419 = vadd.f32 %v4343, %v4414
    %v4420 = vld [vmem:[%s4190 + $0x6] sm:$0x1]
    %v4421 = vld [vmem:[%s4190 + $0x46] sm:$0x1]
    %v4422 = vld [vmem:[%s4190 + $0x7] sm:$0x1]
    %v4423 = vld [vmem:[%s4190 + $0x47] sm:$0x1]
    %v4424 = vmax.f32 %v4420, %v4422
    %v4425 = vmax.f32 %v4421, %v4423
    %v4426 = vld [vmem:[%s4197 + $0x6] sm:$0x1]
    %v4427 = vld [vmem:[%s4197 + $0x46] sm:$0x1]
    %v4428 = vld [vmem:[%s4197 + $0x7] sm:$0x1]
    %v4429 = vld [vmem:[%s4197 + $0x47] sm:$0x1]
    %v4430 = vmax.f32 %v4426, %v4428
    %v4431 = vmax.f32 %v4427, %v4429
    %v4432 = vmax.f32 %v4424, %v4430
    %v4433 = vmax.f32 %v4425, %v4431
    %v4434 = vpack.c.bf16 %v4432, %v4432
    %v4435 = vpack.c.bf16 %v4433, %v4433
    %s4436 = scalar_lea.vmem %s7, 88
    %v4437 = vld [vmem:[%s4436] sm:$0xf]
    %v4438 = vld [vmem:[%s4436 + $0x4] sm:$0xf]
    %v4441 = vunpack.c.l.b16 %v4434
    %v4442 = vunpack.c.l.b16 %v4435
    %v4443 = vrot.slane %v4442, 7
    %v4444 = vsel %vm3624, %v4443, %v4441
    %v4445 = vpack.c.b16 %v4444, %v4444
    %v4448 = vunpack.c.l.b16 %v4437
    %v4449 = vunpack.c.l.b16 %v4438
    %v4450 = vpack.c.b16 %v4449, %v4448
    %v4453 = vsel %vm3403, %v4445, 0
    %4455 = vmatprep.subr.bf16.mxu0 0
    %4456 = vmatpush1.bf16.msra.mxu0 %v4450
    %4457 = vmatprep.subr.bf16.mxu0 0
    %4458 = vmatpush1.bf16.msra.mxu0 0
    %4459 = vmatprep.subr.bf16.mxu0 0
    %4460 = vmatpush1.bf16.msra.mxu0 0
    %4461 = vmatprep.subr.bf16.mxu0 0
    %4462 = vmatpush1.bf16.msra.mxu0 0
    %4463 = vmatprep.subr.bf16.mxu0 0
    %4464 = vmatpush1.bf16.msra.mxu0 0
    %4465 = vmatprep.subr.bf16.mxu0 0
    %4466 = vmatpush1.bf16.msra.mxu0 0
    %4467 = vmatprep.subr.bf16.mxu0 0
    %4468 = vmatpush1.bf16.msra.mxu0 0
    %4469 = vmatprep.subr.bf16.mxu0 0
    %4470 = vmatpush1.bf16.msra.mxu0 0
    %4471 = vmatprep.subr.bf16.mxu0 0
    %4472 = vmatpush1.bf16.msra.mxu0 0
    %4473 = vmatprep.subr.bf16.mxu0 0
    %4474 = vmatpush1.bf16.msra.mxu0 0
    %4475 = vmatprep.subr.bf16.mxu0 0
    %4476 = vmatpush1.bf16.msra.mxu0 0
    %4477 = vmatprep.subr.bf16.mxu0 0
    %4478 = vmatpush1.bf16.msra.mxu0 0
    %4479 = vmatprep.subr.bf16.mxu0 0
    %4480 = vmatpush1.bf16.msra.mxu0 0
    %4481 = vmatprep.subr.bf16.mxu0 0
    %4482 = vmatpush1.bf16.msra.mxu0 0
    %4483 = vmatprep.subr.bf16.mxu0 0
    %4484 = vmatpush1.bf16.msra.mxu0 0
    %4485 = vmatprep.subr.bf16.mxu0 0
    %4486 = vmatpush1.bf16.msra.mxu0 0
    %4487 = vmatprep.mubr.bf16.mxu0 0
    %4488 = vmatmul.mubr.bf16.gmra.mrb[0].mxu0 %v4453
    %v4489 = vpop.f32.mrb[0].mxu0
    %v4490 = vadd.f32 0.0, %v4489
    %v4491 = vpop.f32.mrb[0].mxu0
    %v4492 = vpop.f32.mrb[0].mxu0
    %v4493 = vpop.f32.mrb[0].mxu0
    %4494 = vdwg.mxu0
    %v4495 = vadd.f32 %v4419, %v4490
    %s4496 = scalar_lea.vmem [#allocation2], 48
    %v4497 = vld [vmem:[%s4496] sm:$0x1]
    %v4498 = vld [vmem:[%s4496 + $0x40] sm:$0x1]
    %v4499 = vld [vmem:[%s4496 + $0x1] sm:$0x1]
    %v4500 = vld [vmem:[%s4496 + $0x41] sm:$0x1]
    %v4501 = vmax.f32 %v4497, %v4499
    %v4502 = vmax.f32 %v4498, %v4500
    %s4503 = scalar_lea.vmem [#allocation2], 56
    %v4504 = vld [vmem:[%s4503] sm:$0x1]
    %v4505 = vld [vmem:[%s4503 + $0x40] sm:$0x1]
    %v4506 = vld [vmem:[%s4503 + $0x1] sm:$0x1]
    %v4507 = vld [vmem:[%s4503 + $0x41] sm:$0x1]
    %v4508 = vmax.f32 %v4504, %v4506
    %v4509 = vmax.f32 %v4505, %v4507
    %v4510 = vmax.f32 %v4501, %v4508
    %v4511 = vmax.f32 %v4502, %v4509
    %v4512 = vpack.c.bf16 %v4510, %v4510
    %v4513 = vpack.c.bf16 %v4511, %v4511
    %s4514 = scalar_lea.vmem %s7, 96
    %v4515 = vld [vmem:[%s4514] sm:$0xf]
    %v4516 = vld [vmem:[%s4514 + $0x4] sm:$0xf]
    %v4519 = vunpack.c.l.b16 %v4512
    %v4520 = vunpack.c.l.b16 %v4513
    %v4521 = vrot.slane %v4520, 7
    %v4522 = vsel %vm3624, %v4521, %v4519
    %v4523 = vpack.c.b16 %v4522, %v4522
    %v4526 = vunpack.c.l.b16 %v4515
    %v4527 = vunpack.c.l.b16 %v4516
    %v4528 = vpack.c.b16 %v4527, %v4526
    %v4531 = vsel %vm3403, %v4523, 0
    %4533 = vmatprep.subr.bf16.mxu0 0
    %4534 = vmatpush1.bf16.msra.mxu0 %v4528
    %4535 = vmatprep.subr.bf16.mxu0 0
    %4536 = vmatpush1.bf16.msra.mxu0 0
    %4537 = vmatprep.subr.bf16.mxu0 0
    %4538 = vmatpush1.bf16.msra.mxu0 0
    %4539 = vmatprep.subr.bf16.mxu0 0
    %4540 = vmatpush1.bf16.msra.mxu0 0
    %4541 = vmatprep.subr.bf16.mxu0 0
    %4542 = vmatpush1.bf16.msra.mxu0 0
    %4543 = vmatprep.subr.bf16.mxu0 0
    %4544 = vmatpush1.bf16.msra.mxu0 0
    %4545 = vmatprep.subr.bf16.mxu0 0
    %4546 = vmatpush1.bf16.msra.mxu0 0
    %4547 = vmatprep.subr.bf16.mxu0 0
    %4548 = vmatpush1.bf16.msra.mxu0 0
    %4549 = vmatprep.subr.bf16.mxu0 0
    %4550 = vmatpush1.bf16.msra.mxu0 0
    %4551 = vmatprep.subr.bf16.mxu0 0
    %4552 = vmatpush1.bf16.msra.mxu0 0
    %4553 = vmatprep.subr.bf16.mxu0 0
    %4554 = vmatpush1.bf16.msra.mxu0 0
    %4555 = vmatprep.subr.bf16.mxu0 0
    %4556 = vmatpush1.bf16.msra.mxu0 0
    %4557 = vmatprep.subr.bf16.mxu0 0
    %4558 = vmatpush1.bf16.msra.mxu0 0
    %4559 = vmatprep.subr.bf16.mxu0 0
    %4560 = vmatpush1.bf16.msra.mxu0 0
    %4561 = vmatprep.subr.bf16.mxu0 0
    %4562 = vmatpush1.bf16.msra.mxu0 0
    %4563 = vmatprep.subr.bf16.mxu0 0
    %4564 = vmatpush1.bf16.msra.mxu0 0
    %4565 = vmatprep.mubr.bf16.mxu0 0
    %4566 = vmatmul.mubr.bf16.gmra.mrb[0].mxu0 %v4531
    %v4567 = vpop.f32.mrb[0].mxu0
    %v4568 = vadd.f32 0.0, %v4567
    %v4569 = vpop.f32.mrb[0].mxu0
    %v4570 = vpop.f32.mrb[0].mxu0
    %v4571 = vpop.f32.mrb[0].mxu0
    %4572 = vdwg.mxu0
    %v4573 = vadd.f32 %v4495, %v4568
    %v4574 = vld [vmem:[%s4496 + $0x2] sm:$0x1]
    %v4575 = vld [vmem:[%s4496 + $0x42] sm:$0x1]
    %v4576 = vld [vmem:[%s4496 + $0x3] sm:$0x1]
    %v4577 = vld [vmem:[%s4496 + $0x43] sm:$0x1]
    %v4578 = vmax.f32 %v4574, %v4576
    %v4579 = vmax.f32 %v4575, %v4577
    %v4580 = vld [vmem:[%s4503 + $0x2] sm:$0x1]
    %v4581 = vld [vmem:[%s4503 + $0x42] sm:$0x1]
    %v4582 = vld [vmem:[%s4503 + $0x3] sm:$0x1]
    %v4583 = vld [vmem:[%s4503 + $0x43] sm:$0x1]
    %v4584 = vmax.f32 %v4580, %v4582
    %v4585 = vmax.f32 %v4581, %v4583
    %v4586 = vmax.f32 %v4578, %v4584
    %v4587 = vmax.f32 %v4579, %v4585
    %v4588 = vpack.c.bf16 %v4586, %v4586
    %v4589 = vpack.c.bf16 %v4587, %v4587
    %s4590 = scalar_lea.vmem %s7, 104
    %v4591 = vld [vmem:[%s4590] sm:$0xf]
    %v4592 = vld [vmem:[%s4590 + $0x4] sm:$0xf]
    %v4595 = vunpack.c.l.b16 %v4588
    %v4596 = vunpack.c.l.b16 %v4589
    %v4597 = vrot.slane %v4596, 7
    %v4598 = vsel %vm3624, %v4597, %v4595
    %v4599 = vpack.c.b16 %v4598, %v4598
    %v4602 = vunpack.c.l.b16 %v4591
    %v4603 = vunpack.c.l.b16 %v4592
    %v4604 = vpack.c.b16 %v4603, %v4602
    %v4607 = vsel %vm3403, %v4599, 0
    %4609 = vmatprep.subr.bf16.mxu0 0
    %4610 = vmatpush1.bf16.msra.mxu0 %v4604
    %4611 = vmatprep.subr.bf16.mxu0 0
    %4612 = vmatpush1.bf16.msra.mxu0 0
    %4613 = vmatprep.subr.bf16.mxu0 0
    %4614 = vmatpush1.bf16.msra.mxu0 0
    %4615 = vmatprep.subr.bf16.mxu0 0
    %4616 = vmatpush1.bf16.msra.mxu0 0
    %4617 = vmatprep.subr.bf16.mxu0 0
    %4618 = vmatpush1.bf16.msra.mxu0 0
    %4619 = vmatprep.subr.bf16.mxu0 0
    %4620 = vmatpush1.bf16.msra.mxu0 0
    %4621 = vmatprep.subr.bf16.mxu0 0
    %4622 = vmatpush1.bf16.msra.mxu0 0
    %4623 = vmatprep.subr.bf16.mxu0 0
    %4624 = vmatpush1.bf16.msra.mxu0 0
    %4625 = vmatprep.subr.bf16.mxu0 0
    %4626 = vmatpush1.bf16.msra.mxu0 0
    %4627 = vmatprep.subr.bf16.mxu0 0
    %4628 = vmatpush1.bf16.msra.mxu0 0
    %4629 = vmatprep.subr.bf16.mxu0 0
    %4630 = vmatpush1.bf16.msra.mxu0 0
    %4631 = vmatprep.subr.bf16.mxu0 0
    %4632 = vmatpush1.bf16.msra.mxu0 0
    %4633 = vmatprep.subr.bf16.mxu0 0
    %4634 = vmatpush1.bf16.msra.mxu0 0
    %4635 = vmatprep.subr.bf16.mxu0 0
    %4636 = vmatpush1.bf16.msra.mxu0 0
    %4637 = vmatprep.subr.bf16.mxu0 0
    %4638 = vmatpush1.bf16.msra.mxu0 0
    %4639 = vmatprep.subr.bf16.mxu0 0
    %4640 = vmatpush1.bf16.msra.mxu0 0
    %4641 = vmatprep.mubr.bf16.mxu0 0
    %4642 = vmatmul.mubr.bf16.gmra.mrb[0].mxu0 %v4607
    %v4643 = vpop.f32.mrb[0].mxu0
    %v4644 = vadd.f32 0.0, %v4643
    %v4645 = vpop.f32.mrb[0].mxu0
    %v4646 = vpop.f32.mrb[0].mxu0
    %v4647 = vpop.f32.mrb[0].mxu0
    %4648 = vdwg.mxu0
    %v4649 = vadd.f32 %v4573, %v4644
    %v4650 = vld [vmem:[%s4496 + $0x4] sm:$0x1]
    %v4651 = vld [vmem:[%s4496 + $0x44] sm:$0x1]
    %v4652 = vld [vmem:[%s4496 + $0x5] sm:$0x1]
    %v4653 = vld [vmem:[%s4496 + $0x45] sm:$0x1]
    %v4654 = vmax.f32 %v4650, %v4652
    %v4655 = vmax.f32 %v4651, %v4653
    %v4656 = vld [vmem:[%s4503 + $0x4] sm:$0x1]
    %v4657 = vld [vmem:[%s4503 + $0x44] sm:$0x1]
    %v4658 = vld [vmem:[%s4503 + $0x5] sm:$0x1]
    %v4659 = vld [vmem:[%s4503 + $0x45] sm:$0x1]
    %v4660 = vmax.f32 %v4656, %v4658
    %v4661 = vmax.f32 %v4657, %v4659
    %v4662 = vmax.f32 %v4654, %v4660
    %v4663 = vmax.f32 %v4655, %v4661
    %v4664 = vpack.c.bf16 %v4662, %v4662
    %v4665 = vpack.c.bf16 %v4663, %v4663
    %s4666 = scalar_lea.vmem %s7, 112
    %v4667 = vld [vmem:[%s4666] sm:$0xf]
    %v4668 = vld [vmem:[%s4666 + $0x4] sm:$0xf]
    %v4671 = vunpack.c.l.b16 %v4664
    %v4672 = vunpack.c.l.b16 %v4665
    %v4673 = vrot.slane %v4672, 7
    %v4674 = vsel %vm3624, %v4673, %v4671
    %v4675 = vpack.c.b16 %v4674, %v4674
    %v4678 = vunpack.c.l.b16 %v4667
    %v4679 = vunpack.c.l.b16 %v4668
    %v4680 = vpack.c.b16 %v4679, %v4678
    %v4683 = vsel %vm3403, %v4675, 0
    %4685 = vmatprep.subr.bf16.mxu0 0
    %4686 = vmatpush1.bf16.msra.mxu0 %v4680
    %4687 = vmatprep.subr.bf16.mxu0 0
    %4688 = vmatpush1.bf16.msra.mxu0 0
    %4689 = vmatprep.subr.bf16.mxu0 0
    %4690 = vmatpush1.bf16.msra.mxu0 0
    %4691 = vmatprep.subr.bf16.mxu0 0
    %4692 = vmatpush1.bf16.msra.mxu0 0
    %4693 = vmatprep.subr.bf16.mxu0 0
    %4694 = vmatpush1.bf16.msra.mxu0 0
    %4695 = vmatprep.subr.bf16.mxu0 0
    %4696 = vmatpush1.bf16.msra.mxu0 0
    %4697 = vmatprep.subr.bf16.mxu0 0
    %4698 = vmatpush1.bf16.msra.mxu0 0
    %4699 = vmatprep.subr.bf16.mxu0 0
    %4700 = vmatpush1.bf16.msra.mxu0 0
    %4701 = vmatprep.subr.bf16.mxu0 0
    %4702 = vmatpush1.bf16.msra.mxu0 0
    %4703 = vmatprep.subr.bf16.mxu0 0
    %4704 = vmatpush1.bf16.msra.mxu0 0
    %4705 = vmatprep.subr.bf16.mxu0 0
    %4706 = vmatpush1.bf16.msra.mxu0 0
    %4707 = vmatprep.subr.bf16.mxu0 0
    %4708 = vmatpush1.bf16.msra.mxu0 0
    %4709 = vmatprep.subr.bf16.mxu0 0
    %4710 = vmatpush1.bf16.msra.mxu0 0
    %4711 = vmatprep.subr.bf16.mxu0 0
    %4712 = vmatpush1.bf16.msra.mxu0 0
    %4713 = vmatprep.subr.bf16.mxu0 0
    %4714 = vmatpush1.bf16.msra.mxu0 0
    %4715 = vmatprep.subr.bf16.mxu0 0
    %4716 = vmatpush1.bf16.msra.mxu0 0
    %4717 = vmatprep.mubr.bf16.mxu0 0
    %4718 = vmatmul.mubr.bf16.gmra.mrb[0].mxu0 %v4683
    %v4719 = vpop.f32.mrb[0].mxu0
    %v4720 = vadd.f32 0.0, %v4719
    %v4721 = vpop.f32.mrb[0].mxu0
    %v4722 = vpop.f32.mrb[0].mxu0
    %v4723 = vpop.f32.mrb[0].mxu0
    %4724 = vdwg.mxu0
    %v4725 = vadd.f32 %v4649, %v4720
    %v4726 = vld [vmem:[%s4496 + $0x6] sm:$0x1]
    %v4727 = vld [vmem:[%s4496 + $0x46] sm:$0x1]
    %v4728 = vld [vmem:[%s4496 + $0x7] sm:$0x1]
    %v4729 = vld [vmem:[%s4496 + $0x47] sm:$0x1]
    %v4730 = vmax.f32 %v4726, %v4728
    %v4731 = vmax.f32 %v4727, %v4729
    %v4732 = vld [vmem:[%s4503 + $0x6] sm:$0x1]
    %v4733 = vld [vmem:[%s4503 + $0x46] sm:$0x1]
    %v4734 = vld [vmem:[%s4503 + $0x7] sm:$0x1]
    %v4735 = vld [vmem:[%s4503 + $0x47] sm:$0x1]
    %v4736 = vmax.f32 %v4732, %v4734
    %v4737 = vmax.f32 %v4733, %v4735
    %v4738 = vmax.f32 %v4730, %v4736
    %v4739 = vmax.f32 %v4731, %v4737
    %v4740 = vpack.c.bf16 %v4738, %v4738
    %v4741 = vpack.c.bf16 %v4739, %v4739
    %s4742 = scalar_lea.vmem %s7, 120
    %v4743 = vld [vmem:[%s4742] sm:$0xf]
    %v4744 = vld [vmem:[%s4742 + $0x4] sm:$0xf]
    %v4747 = vunpack.c.l.b16 %v4740
    %v4748 = vunpack.c.l.b16 %v4741
    %v4749 = vrot.slane %v4748, 7
    %v4750 = vsel %vm3624, %v4749, %v4747
    %v4751 = vpack.c.b16 %v4750, %v4750
    %v4754 = vunpack.c.l.b16 %v4743
    %v4755 = vunpack.c.l.b16 %v4744
    %v4756 = vpack.c.b16 %v4755, %v4754
    %v4759 = vsel %vm3403, %v4751, 0
    %4761 = vmatprep.subr.bf16.mxu0 0
    %4762 = vmatpush1.bf16.msra.mxu0 %v4756
    %4763 = vmatprep.subr.bf16.mxu0 0
    %4764 = vmatpush1.bf16.msra.mxu0 0
    %4765 = vmatprep.subr.bf16.mxu0 0
    %4766 = vmatpush1.bf16.msra.mxu0 0
    %4767 = vmatprep.subr.bf16.mxu0 0
    %4768 = vmatpush1.bf16.msra.mxu0 0
    %4769 = vmatprep.subr.bf16.mxu0 0
    %4770 = vmatpush1.bf16.msra.mxu0 0
    %4771 = vmatprep.subr.bf16.mxu0 0
    %4772 = vmatpush1.bf16.msra.mxu0 0
    %4773 = vmatprep.subr.bf16.mxu0 0
    %4774 = vmatpush1.bf16.msra.mxu0 0
    %4775 = vmatprep.subr.bf16.mxu0 0
    %4776 = vmatpush1.bf16.msra.mxu0 0
    %4777 = vmatprep.subr.bf16.mxu0 0
    %4778 = vmatpush1.bf16.msra.mxu0 0
    %4779 = vmatprep.subr.bf16.mxu0 0
    %4780 = vmatpush1.bf16.msra.mxu0 0
    %4781 = vmatprep.subr.bf16.mxu0 0
    %4782 = vmatpush1.bf16.msra.mxu0 0
    %4783 = vmatprep.subr.bf16.mxu0 0
    %4784 = vmatpush1.bf16.msra.mxu0 0
    %4785 = vmatprep.subr.bf16.mxu0 0
    %4786 = vmatpush1.bf16.msra.mxu0 0
    %4787 = vmatprep.subr.bf16.mxu0 0
    %4788 = vmatpush1.bf16.msra.mxu0 0
    %4789 = vmatprep.subr.bf16.mxu0 0
    %4790 = vmatpush1.bf16.msra.mxu0 0
    %4791 = vmatprep.subr.bf16.mxu0 0
    %4792 = vmatpush1.bf16.msra.mxu0 0
    %4793 = vmatprep.mubr.bf16.mxu0 0
    %4794 = vmatmul.mubr.bf16.gmra.mrb[0].mxu0 %v4759
    %v4795 = vpop.f32.mrb[0].mxu0
    %v4796 = vadd.f32 0.0, %v4795
    %v4797 = vpop.f32.mrb[0].mxu0
    %v4798 = vpop.f32.mrb[0].mxu0
    %v4799 = vpop.f32.mrb[0].mxu0
    %4800 = vdwg.mxu0
    %v4801 = vadd.f32 %v4725, %v4796
    %v4802 = vld [vmem:[%s8] sm:$0x1]
    %v4804 = vlaneseq
    %v4805 = vshrl.u32 %v4804, 7
    %v4806 = vsub.s32 0, %v4805
    %v4807 = vrot.slane %v4802, %v4806
    %v4809 = vadd.f32 %v4801, %v4807
    %v4810 = vsel %vm375, %v4809, -inf
    %4811 = vmax.xlane.f32.xlu0 %v4810
    %v4812 = vpop.xlane.xlu0 %4811
    %v4813 = vsub.f32 %v4809, %v4812
    %v4814 = vmul.f32 %v4813, 1.442695
    %v4815 = vpow.pop %v4814
    %v4816 = vsel %vm375, %v4815, 0.0
    %4817 = vadd.xlane.f32.xlu0 %v4816
    %v4818 = vpop.xlane.xlu0 %4817
    %v4819 = vlog2.pop %v4818
    %v4820 = vmul.f32 %v4819, 0.6931472
    %v4821 = vsub.f32 %v4813, %v4820
    %4822 = vst [vmem:[#allocation3] sm:$0x3] %v4821
    // Predicated region
    $region38: #{conv_layer_multi_forward.1} parent=1 // pred_check
      _
    $region39: #{conv_layer_multi_forward.1} parent=1 // pred_check_branch
      %4824 = sbr.rel (0) target = $region41
    $region40: #{conv_layer_multi_forward.1} parent=1 // pred_region
      %s4826 = ssub.s32 32, 32
      %4827 = vsyncadd [#allocation4], %s4826
      %s4829 = sshll.u32 [#allocation3], 4
      %s4830 = int_to_ptr.vmem [resolvable:$true] %s4829
      %4832 = dma.vmem_to_hbm [thread:$0]  %s4830, 32, %s9, [#allocation4]
    $region41: #{conv_layer_multi_forward.1} parent=1 // pred_fallthru
      _
    // Predicated region
    $region42: #{conv_layer_multi_forward.1} parent=1 // pred_check
      _
    $region43: #{conv_layer_multi_forward.1} parent=1 // pred_check_branch
      %4834 = sbr.rel (0) target = $region45
    $region44: #{conv_layer_multi_forward.1} parent=1 // pred_region
      %4835 = dma.done [#allocation4], 32
    $region45: #{conv_layer_multi_forward.1} parent=1 // pred_fallthru
      _
    %4836 = vsyncpa [#allocation4], 1

</llo_original>
